<compile_context>
chip_gen: v6e
topology: v6e:2x2x1
jax: 0.10.0
libtpu: 0.0.40
codegen_flags: <defaults>
</compile_context>

<pallas_src>
import math

import jax
import jax.numpy as jnp
from jax.experimental import pallas as pl
from jax.experimental.pallas import tpu as pltpu

FACTOR = 3
FEATURES = 200        # latent size (from the module)
HIDDEN = 600          # hidden size of enc1 / dec1 (from the module)
INP_SIZE = 32         # synthetic small inp_size (source has len(dict)==0)
VOCAB_SIZE = INP_SIZE + 1
EMB_DIM = FACTOR      # embedding_dim=3

LANE = 128
K_IN = INP_SIZE * FACTOR           # 96


def _ceil_to(x, m):
    return (x + m - 1) // m * m


EMB_PAD = 4                          # pad embedding dim 3 -> 4 so 32*4 = 128 lanes
K_PAD = INP_SIZE * EMB_PAD           # 128 (flattened input, already lane-aligned)
HID_PAD = _ceil_to(HIDDEN, LANE)     # 640
FEAT_PAD = _ceil_to(FEATURES, LANE)  # 256
OUT_PAD = _ceil_to(INP_SIZE, LANE)   # 128
NEG_BIG = -1e30                      # softmax mask for padded output lanes
VMEM_LIMIT_BYTES = 48 * 1024 * 1024  # > v5e 16MiB scoped default, < v7x 64MiB physical


def hybrid_vae_kernel(x_ref, eps_ref,
                      w1_ref, b1_ref, w2_ref, b2_ref,
                      w3_ref, b3_ref, w4_ref, b4_ref,
                      recon_ref, mu_ref, logvar_ref):
    # Activations cast to bf16 right before each dot (MXU-native inputs),
    # f32 accumulate, f32 epilogues.
    xb = x_ref[...].astype(jnp.bfloat16)                              # (bt, K_PAD)

    # enc1 + ReLU
    h1 = jnp.dot(xb, w1_ref[...], preferred_element_type=jnp.float32) + b1_ref[...]
    h1 = jnp.maximum(h1, 0.0)                                         # (bt, HID_PAD)

    # enc2: single merged projection, split at the 256-lane tile boundary (free).
    h2 = jnp.dot(h1.astype(jnp.bfloat16), w2_ref[...],
                 preferred_element_type=jnp.float32) + b2_ref[...]    # (bt, 2*FEAT_PAD)
    mu = h2[:, :FEAT_PAD]
    log_var = h2[:, FEAT_PAD:]

    # reparameterize: z = mu + eps * exp(0.5 * log_var)   (padded lanes harmless:
    # padded rows of w3 are zero, padded mu/log_var lanes are zero and sliced off)
    z = mu + eps_ref[...] * jnp.exp(0.5 * log_var)                    # (bt, FEAT_PAD)

    # dec1 + ReLU
    h3 = jnp.dot(z.astype(jnp.bfloat16), w3_ref[...],
                 preferred_element_type=jnp.float32) + b3_ref[...]
    h3 = jnp.maximum(h3, 0.0)                                         # (bt, HID_PAD)

    # dec2 + softmax (padded logits carry a -1e30 bias -> exactly 0 probability).
    logits = jnp.dot(h3.astype(jnp.bfloat16), w4_ref[...],
                     preferred_element_type=jnp.float32) + b4_ref[...]
    m = jnp.max(logits, axis=-1, keepdims=True)
    e = jnp.exp(logits - m)
    denom = jnp.sum(e, axis=-1, keepdims=True)
    recon = e * pl.reciprocal(denom, approx=False)

    recon_ref[...] = recon
    mu_ref[...] = mu
    logvar_ref[...] = log_var


def init_params(key):
    """Logical (unpadded) parameters; weights stored (in, out) = PyTorch W^T."""
    ks = jax.random.split(key, 9)
    scale = 0.05
    return {
        "emb": scale * jax.random.normal(ks[0], (VOCAB_SIZE, EMB_DIM), jnp.float32),
        "w1": scale * jax.random.normal(ks[1], (K_IN, HIDDEN), jnp.float32),
        "b1": scale * jax.random.normal(ks[2], (1, HIDDEN), jnp.float32),
        "w2": scale * jax.random.normal(ks[3], (HIDDEN, FEATURES * 2), jnp.float32),
        "b2": scale * jax.random.normal(ks[4], (1, FEATURES * 2), jnp.float32),
        "w3": scale * jax.random.normal(ks[5], (FEATURES, HIDDEN), jnp.float32),
        "b3": scale * jax.random.normal(ks[6], (1, HIDDEN), jnp.float32),
        "w4": scale * jax.random.normal(ks[7], (HIDDEN, INP_SIZE), jnp.float32),
        "b4": scale * jax.random.normal(ks[8], (1, INP_SIZE), jnp.float32),
    }


def pack_params(p, weight_dtype=jnp.bfloat16):
    """One-time packing: lane-pad to 128 multiples, merge enc2, bf16 weights."""
    def pad2(a, rows, cols):
        return jnp.pad(a, ((0, rows - a.shape[0]), (0, cols - a.shape[1])))

    # Embedding padded 3 -> 4: gather+reshape yields a 128-lane slab directly.
    emb = jnp.pad(p["emb"], ((0, 0), (0, EMB_PAD - EMB_DIM)))

    # enc1 weight: interleave a zero row per token for the padded 4th emb slot,
    # so row 4*t + d corresponds to original row 3*t + d (d < 3).
    w1 = jnp.pad(p["w1"].reshape(INP_SIZE, FACTOR, HIDDEN),
                 ((0, 0), (0, EMB_PAD - FACTOR), (0, 0))).reshape(K_PAD, HIDDEN)
    w1 = pad2(w1, K_PAD, HID_PAD)

    # enc2 merged: mu in lanes [0, FEAT_PAD), log_var in [FEAT_PAD, 2*FEAT_PAD).
    w2 = jnp.zeros((HIDDEN, 2 * FEAT_PAD), jnp.float32)
    w2 = w2.at[:, :FEATURES].set(p["w2"][:, :FEATURES])
    w2 = w2.at[:, FEAT_PAD:FEAT_PAD + FEATURES].set(p["w2"][:, FEATURES:])
    w2 = pad2(w2, HID_PAD, 2 * FEAT_PAD)
    b2 = jnp.zeros((1, 2 * FEAT_PAD), jnp.float32)
    b2 = b2.at[:, :FEATURES].set(p["b2"][:, :FEATURES])
    b2 = b2.at[:, FEAT_PAD:FEAT_PAD + FEATURES].set(p["b2"][:, FEATURES:])

    # dec2 bias: padded lanes get -1e30 so softmax over 128 lanes is exact.
    b4 = jnp.full((1, OUT_PAD), NEG_BIG, jnp.float32).at[:, :INP_SIZE].set(p["b4"])

    return {
        "emb": emb,
        "w1": w1.astype(weight_dtype),
        "b1": pad2(p["b1"], 1, HID_PAD),
        "w2": w2.astype(weight_dtype),
        "b2": b2,
        "w3": pad2(p["w3"], FEAT_PAD, HID_PAD).astype(weight_dtype),
        "b3": pad2(p["b3"], 1, HID_PAD),
        "w4": pad2(p["w4"], HID_PAD, OUT_PAD).astype(weight_dtype),
        "b4": b4,
    }


def batch_tiling(B, batch_tile):
    """Padding-aware batch tiling: n_tiles tiles of bt rows, bt multiple of 8."""
    n_tiles = -(-B // batch_tile)
    if n_tiles > 1 and n_tiles % 2:
        n_tiles += 1                      # even grid -> balanced v7x megacore split
    bt = _ceil_to(-(-B // n_tiles), 8)
    return n_tiles, bt, n_tiles * bt


def hybrid_vae_forward(tokens, eps, packed, *, batch_tile=512):
    """tokens: (B, INP_SIZE) int32; eps: (Bp, FEAT_PAD) or (B, FEATURES) f32."""
    B = tokens.shape[0]
    n_tiles, bt, Bp = batch_tiling(B, batch_tile)

    # Embedding gather at the padded batch directly produces the 128-lane input
    # slab (emb dim padded 3->4 => 32*4 = 128): no separate lane-pad pass over x.
    tokens_p = tokens if Bp == B else jnp.pad(tokens, ((0, Bp - B), (0, 0)))
    x_p = packed["emb"][tokens_p].reshape(Bp, K_PAD)

    # eps: caller should generate it at (Bp, FEAT_PAD) to avoid this pad pass.
    if eps.shape != (Bp, FEAT_PAD):
        eps = jnp.zeros((Bp, FEAT_PAD), jnp.float32).at[:B, :FEATURES].set(eps)

    weight_args = (packed["w1"], packed["b1"], packed["w2"], packed["b2"],
                   packed["w3"], packed["b3"], packed["w4"], packed["b4"])
    args = (x_p, eps) + weight_args

    def row_spec(width):
        return pl.BlockSpec((bt, width), lambda i: (i, 0))

    def const_spec(shape):
        # Constant index_map => DMA'd once, VMEM-resident across all batch tiles.
        return pl.BlockSpec(shape, lambda i: (0, 0))

    in_specs = [row_spec(K_PAD), row_spec(FEAT_PAD)] + \
               [const_spec(w.shape) for w in weight_args]

    out_shapes = (
        jax.ShapeDtypeStruct((Bp, OUT_PAD), jnp.float32),   # reconstruction (padded)
        jax.ShapeDtypeStruct((Bp, FEAT_PAD), jnp.float32),  # mu (padded)
        jax.ShapeDtypeStruct((Bp, FEAT_PAD), jnp.float32),  # log_var (padded)
    )
    out_specs = (row_spec(OUT_PAD), row_spec(FEAT_PAD), row_spec(FEAT_PAD))

    flops = 2 * Bp * HID_PAD * (K_PAD + 2 * FEAT_PAD + FEAT_PAD + OUT_PAD)
    transcendentals = Bp * (FEAT_PAD + OUT_PAD + 1)
    bytes_accessed = int(sum(a.size * a.dtype.itemsize for a in args)
                         + 4 * sum(math.prod(s.shape) for s in out_shapes))

    recon_p, mu_p, lv_p = pl.pallas_call(
        hybrid_vae_kernel,
        out_shape=out_shapes,
        grid=(n_tiles,),
        in_specs=in_specs,
        out_specs=out_specs,
        compiler_params=pltpu.CompilerParams(
            dimension_semantics=("parallel",),
            vmem_limit_bytes=VMEM_LIMIT_BYTES),
        cost_estimate=pl.CostEstimate(flops=flops,
                                      transcendentals=transcendentals,
                                      bytes_accessed=bytes_accessed),
    )(*args)

    # Slice padding off (lane-dense slabs inside the kernel, logical shapes outside).
    return (recon_p[:B, :INP_SIZE], mu_p[:B, :FEATURES], lv_p[:B, :FEATURES])


def reference_forward(tokens, eps, params):
    """Pure-JAX f32 reference matching the PyTorch module."""
    B = tokens.shape[0]
    x = params["emb"][tokens].reshape(B, -1).astype(jnp.float32)
    h1 = jnp.maximum(x @ params["w1"] + params["b1"], 0.0)
    h2 = (h1 @ params["w2"] + params["b2"]).reshape(B, 2, FEATURES)
    mu, log_var = h2[:, 0, :], h2[:, 1, :]
    z = mu + eps * jnp.exp(0.5 * log_var)
    h3 = jnp.maximum(z @ params["w3"] + params["b3"], 0.0)
    logits = h3 @ params["w4"] + params["b4"]
    recon = jax.nn.softmax(logits, axis=-1)
    return recon, mu, log_var


if __name__ == "__main__":
    key = jax.random.PRNGKey(0)
    k_params, k_tok, k_eps = jax.random.split(key, 3)

    B = 300            # non-multiple of 8/256 -> exercises padding-aware tiling
    BATCH_TILE = 256   # -> 2 tiles of 152 rows: even grid, VMEM-resident weights

    params = init_params(k_params)
    packed = pack_params(params)
    tokens = jax.random.randint(k_tok, (B, INP_SIZE), 0, VOCAB_SIZE, dtype=jnp.int32)

    # torch.randn_like(std) -> deterministic normal noise supplied from outside the
    # kernel, generated directly at the padded (Bp, FEAT_PAD) shape (no pad pass).
    _, _, Bp = batch_tiling(B, BATCH_TILE)
    eps_p = jax.random.normal(k_eps, (Bp, FEAT_PAD), jnp.float32)

    recon, mu, log_var = hybrid_vae_forward(tokens, eps_p, packed,
                                            batch_tile=BATCH_TILE)
    jax.block_until_ready((recon, mu, log_var))

    r_recon, r_mu, r_lv = reference_forward(tokens, eps_p[:B, :FEATURES], params)
    assert recon.shape == (B, INP_SIZE)
    assert mu.shape == (B, FEATURES) and log_var.shape == (B, FEATURES)
    # bf16 matmul inputs (f32 accumulate/epilogue) -> relaxed parity vs f32 ref.
    assert jnp.allclose(mu, r_mu, atol=1e-2, rtol=1e-2)
    assert jnp.allclose(log_var, r_lv, atol=1e-2, rtol=1e-2)
    assert jnp.allclose(recon, r_recon, atol=1e-2, rtol=1e-2)
    assert jnp.allclose(jnp.sum(recon, axis=-1), 1.0, atol=1e-5)

    print("KERNEL_OK")
</pallas_src>

<mosaic_0001>
module attributes {stable_mosaic.version = 11 : i64} {
  func.func @hybrid_vae_kernel(%arg0: i32, %arg1: memref<152x128xf32, #tpu.memory_space<vmem>>, %arg2: memref<152x256xf32, #tpu.memory_space<vmem>>, %arg3: memref<128x640xbf16, #tpu.memory_space<vmem>>, %arg4: memref<1x640xf32, #tpu.memory_space<vmem>>, %arg5: memref<640x512xbf16, #tpu.memory_space<vmem>>, %arg6: memref<1x512xf32, #tpu.memory_space<vmem>>, %arg7: memref<256x640xbf16, #tpu.memory_space<vmem>>, %arg8: memref<1x640xf32, #tpu.memory_space<vmem>>, %arg9: memref<640x128xbf16, #tpu.memory_space<vmem>>, %arg10: memref<1x128xf32, #tpu.memory_space<vmem>>, %arg11: memref<152x128xf32, #tpu.memory_space<vmem>>, %arg12: memref<152x256xf32, #tpu.memory_space<vmem>>, %arg13: memref<152x256xf32, #tpu.memory_space<vmem>>) attributes {dimension_semantics = [#tpu.dimension_semantics<parallel>], iteration_bounds = array<i64: 2>, scalar_prefetch = 0 : i64, scratch_operands = 0 : i64, tpu.core_type = #tpu.core_type<tc>, window_params = [{transform_indices = @transform_0, window_bounds = array<i64: 152, 128>}, {transform_indices = @transform_1, window_bounds = array<i64: 152, 256>}, {pipeline_mode = #tpu.pipeline_mode<synchronous>, transform_indices = @transform_2, window_bounds = array<i64: 128, 640>}, {pipeline_mode = #tpu.pipeline_mode<synchronous>, transform_indices = @transform_3, window_bounds = array<i64: 1, 640>}, {pipeline_mode = #tpu.pipeline_mode<synchronous>, transform_indices = @transform_4, window_bounds = array<i64: 640, 512>}, {pipeline_mode = #tpu.pipeline_mode<synchronous>, transform_indices = @transform_5, window_bounds = array<i64: 1, 512>}, {pipeline_mode = #tpu.pipeline_mode<synchronous>, transform_indices = @transform_6, window_bounds = array<i64: 256, 640>}, {pipeline_mode = #tpu.pipeline_mode<synchronous>, transform_indices = @transform_7, window_bounds = array<i64: 1, 640>}, {pipeline_mode = #tpu.pipeline_mode<synchronous>, transform_indices = @transform_8, window_bounds = array<i64: 640, 128>}, {pipeline_mode = #tpu.pipeline_mode<synchronous>, transform_indices = @transform_9, window_bounds = array<i64: 1, 128>}, {transform_indices = @transform_10, window_bounds = array<i64: 152, 128>}, {transform_indices = @transform_11, window_bounds = array<i64: 152, 256>}, {transform_indices = @transform_12, window_bounds = array<i64: 152, 256>}]} {
    %c0 = arith.constant 0 : index
    %c0_0 = arith.constant 0 : index
    %0 = vector.load %arg1[%c0, %c0_0] : memref<152x128xf32, #tpu.memory_space<vmem>>, vector<152x128xf32>
    %1 = arith.truncf %0 : vector<152x128xf32> to vector<152x128xbf16>
    %c0_1 = arith.constant 0 : index
    %c0_2 = arith.constant 0 : index
    %2 = vector.load %arg3[%c0_1, %c0_2] : memref<128x640xbf16, #tpu.memory_space<vmem>>, vector<128x640xbf16>
    %cst = arith.constant dense<0.000000e+00> : vector<152x640xf32>
    %3 = tpu.matmul %1, %2, %cst {dimension_numbers = #tpu.dot_dimension_numbers<[1], [0], [0], [1], [0, 0, 1, 1], [], []>} : vector<152x128xbf16>, vector<128x640xbf16>, vector<152x640xf32> -> vector<152x640xf32>
    %c0_3 = arith.constant 0 : index
    %c0_4 = arith.constant 0 : index
    %4 = vector.load %arg4[%c0_3, %c0_4] : memref<1x640xf32, #tpu.memory_space<vmem>>, vector<1x640xf32>
    %5 = vector.broadcast %4 : vector<1x640xf32> to vector<152x640xf32>
    %6 = arith.addf %3, %5 : vector<152x640xf32>
    %cst_5 = arith.constant 0.000000e+00 : f32
    %7 = vector.broadcast %cst_5 : f32 to vector<152x640xf32>
    %8 = arith.maximumf %6, %7 : vector<152x640xf32>
    %9 = arith.truncf %8 : vector<152x640xf32> to vector<152x640xbf16>
    %c0_6 = arith.constant 0 : index
    %c0_7 = arith.constant 0 : index
    %10 = vector.load %arg5[%c0_6, %c0_7] : memref<640x512xbf16, #tpu.memory_space<vmem>>, vector<640x512xbf16>
    %cst_8 = arith.constant dense<0.000000e+00> : vector<152x512xf32>
    %11 = tpu.matmul %9, %10, %cst_8 {dimension_numbers = #tpu.dot_dimension_numbers<[1], [0], [0], [1], [0, 0, 1, 1], [], []>} : vector<152x640xbf16>, vector<640x512xbf16>, vector<152x512xf32> -> vector<152x512xf32>
    %c0_9 = arith.constant 0 : index
    %c0_10 = arith.constant 0 : index
    %12 = vector.load %arg6[%c0_9, %c0_10] : memref<1x512xf32, #tpu.memory_space<vmem>>, vector<1x512xf32>
    %13 = vector.broadcast %12 : vector<1x512xf32> to vector<152x512xf32>
    %14 = arith.addf %11, %13 : vector<152x512xf32>
    %15 = vector.extract_strided_slice %14 {offsets = [0, 0], sizes = [152, 256], strides = [1, 1]} : vector<152x512xf32> to vector<152x256xf32>
    %16 = vector.extract_strided_slice %14 {offsets = [0, 256], sizes = [152, 256], strides = [1, 1]} : vector<152x512xf32> to vector<152x256xf32>
    %c0_11 = arith.constant 0 : index
    %c0_12 = arith.constant 0 : index
    %17 = vector.load %arg2[%c0_11, %c0_12] : memref<152x256xf32, #tpu.memory_space<vmem>>, vector<152x256xf32>
    %cst_13 = arith.constant 5.000000e-01 : f32
    %18 = vector.broadcast %cst_13 : f32 to vector<152x256xf32>
    %19 = arith.mulf %18, %16 : vector<152x256xf32>
    %20 = math.exp %19 : vector<152x256xf32>
    %21 = arith.mulf %17, %20 : vector<152x256xf32>
    %22 = arith.addf %15, %21 : vector<152x256xf32>
    %23 = arith.truncf %22 : vector<152x256xf32> to vector<152x256xbf16>
    %c0_14 = arith.constant 0 : index
    %c0_15 = arith.constant 0 : index
    %24 = vector.load %arg7[%c0_14, %c0_15] : memref<256x640xbf16, #tpu.memory_space<vmem>>, vector<256x640xbf16>
    %cst_16 = arith.constant dense<0.000000e+00> : vector<152x640xf32>
    %25 = tpu.matmul %23, %24, %cst_16 {dimension_numbers = #tpu.dot_dimension_numbers<[1], [0], [0], [1], [0, 0, 1, 1], [], []>} : vector<152x256xbf16>, vector<256x640xbf16>, vector<152x640xf32> -> vector<152x640xf32>
    %c0_17 = arith.constant 0 : index
    %c0_18 = arith.constant 0 : index
    %26 = vector.load %arg8[%c0_17, %c0_18] : memref<1x640xf32, #tpu.memory_space<vmem>>, vector<1x640xf32>
    %27 = vector.broadcast %26 : vector<1x640xf32> to vector<152x640xf32>
    %28 = arith.addf %25, %27 : vector<152x640xf32>
    %cst_19 = arith.constant 0.000000e+00 : f32
    %29 = vector.broadcast %cst_19 : f32 to vector<152x640xf32>
    %30 = arith.maximumf %28, %29 : vector<152x640xf32>
    %31 = arith.truncf %30 : vector<152x640xf32> to vector<152x640xbf16>
    %c0_20 = arith.constant 0 : index
    %c0_21 = arith.constant 0 : index
    %32 = vector.load %arg9[%c0_20, %c0_21] : memref<640x128xbf16, #tpu.memory_space<vmem>>, vector<640x128xbf16>
    %cst_22 = arith.constant dense<0.000000e+00> : vector<152x128xf32>
    %33 = tpu.matmul %31, %32, %cst_22 {dimension_numbers = #tpu.dot_dimension_numbers<[1], [0], [0], [1], [0, 0, 1, 1], [], []>} : vector<152x640xbf16>, vector<640x128xbf16>, vector<152x128xf32> -> vector<152x128xf32>
    %c0_23 = arith.constant 0 : index
    %c0_24 = arith.constant 0 : index
    %34 = vector.load %arg10[%c0_23, %c0_24] : memref<1x128xf32, #tpu.memory_space<vmem>>, vector<1x128xf32>
    %35 = vector.broadcast %34 : vector<1x128xf32> to vector<152x128xf32>
    %36 = arith.addf %33, %35 : vector<152x128xf32>
    %cst_25 = arith.constant dense<0xFF800000> : vector<152xf32>
    %37 = vector.multi_reduction <maximumf>, %36, %cst_25 [1] : vector<152x128xf32> to vector<152xf32>
    %38 = vector.shape_cast %37 : vector<152xf32> to vector<152x1xf32>
    %39 = vector.broadcast %38 : vector<152x1xf32> to vector<152x128xf32>
    %40 = arith.subf %36, %39 : vector<152x128xf32>
    %41 = math.exp %40 : vector<152x128xf32>
    %cst_26 = arith.constant dense<0.000000e+00> : vector<152xf32>
    %42 = vector.multi_reduction <add>, %41, %cst_26 [1] : vector<152x128xf32> to vector<152xf32>
    %43 = vector.shape_cast %42 : vector<152xf32> to vector<152x1xf32>
    %44 = tpu.reciprocal %43 : vector<152x1xf32> -> vector<152x1xf32>
    %45 = vector.broadcast %44 : vector<152x1xf32> to vector<152x128xf32>
    %46 = arith.mulf %41, %45 : vector<152x128xf32>
    %c0_27 = arith.constant 0 : index
    %c0_28 = arith.constant 0 : index
    %47 = vector.load %arg11[%c0_27, %c0_28] : memref<152x128xf32, #tpu.memory_space<vmem>>, vector<152x128xf32>
    tpu.vector_store %arg11[%c0_27, %c0_28], %46 {strides = array<i32>} : memref<152x128xf32, #tpu.memory_space<vmem>>, vector<152x128xf32>,
    %c0_29 = arith.constant 0 : index
    %c0_30 = arith.constant 0 : index
    %48 = vector.load %arg12[%c0_29, %c0_30] : memref<152x256xf32, #tpu.memory_space<vmem>>, vector<152x256xf32>
    tpu.vector_store %arg12[%c0_29, %c0_30], %15 {strides = array<i32>} : memref<152x256xf32, #tpu.memory_space<vmem>>, vector<152x256xf32>,
    %c0_31 = arith.constant 0 : index
    %c0_32 = arith.constant 0 : index
    %49 = vector.load %arg13[%c0_31, %c0_32] : memref<152x256xf32, #tpu.memory_space<vmem>>, vector<152x256xf32>
    tpu.vector_store %arg13[%c0_31, %c0_32], %16 {strides = array<i32>} : memref<152x256xf32, #tpu.memory_space<vmem>>, vector<152x256xf32>,
    return
  }
  func.func @transform_0(%arg0: i32) -> (i32, i32) {
    %c0_i32 = arith.constant 0 : i32
    %c0_i32_0 = arith.constant 0 : i32
    return %arg0, %c0_i32 : i32, i32
  }
  func.func @transform_1(%arg0: i32) -> (i32, i32) {
    %c0_i32 = arith.constant 0 : i32
    %c0_i32_0 = arith.constant 0 : i32
    return %arg0, %c0_i32 : i32, i32
  }
  func.func @transform_2(%arg0: i32) -> (i32, i32) {
    %c0_i32 = arith.constant 0 : i32
    %c0_i32_0 = arith.constant 0 : i32
    %c0_i32_1 = arith.constant 0 : i32
    return %c0_i32, %c0_i32_0 : i32, i32
  }
  func.func @transform_3(%arg0: i32) -> (i32, i32) {
    %c0_i32 = arith.constant 0 : i32
    %c0_i32_0 = arith.constant 0 : i32
    %c0_i32_1 = arith.constant 0 : i32
    return %c0_i32, %c0_i32_0 : i32, i32
  }
  func.func @transform_4(%arg0: i32) -> (i32, i32) {
    %c0_i32 = arith.constant 0 : i32
    %c0_i32_0 = arith.constant 0 : i32
    %c0_i32_1 = arith.constant 0 : i32
    return %c0_i32, %c0_i32_0 : i32, i32
  }
  func.func @transform_5(%arg0: i32) -> (i32, i32) {
    %c0_i32 = arith.constant 0 : i32
    %c0_i32_0 = arith.constant 0 : i32
    %c0_i32_1 = arith.constant 0 : i32
    return %c0_i32, %c0_i32_0 : i32, i32
  }
  func.func @transform_6(%arg0: i32) -> (i32, i32) {
    %c0_i32 = arith.constant 0 : i32
    %c0_i32_0 = arith.constant 0 : i32
    %c0_i32_1 = arith.constant 0 : i32
    return %c0_i32, %c0_i32_0 : i32, i32
  }
  func.func @transform_7(%arg0: i32) -> (i32, i32) {
    %c0_i32 = arith.constant 0 : i32
    %c0_i32_0 = arith.constant 0 : i32
    %c0_i32_1 = arith.constant 0 : i32
    return %c0_i32, %c0_i32_0 : i32, i32
  }
  func.func @transform_8(%arg0: i32) -> (i32, i32) {
    %c0_i32 = arith.constant 0 : i32
    %c0_i32_0 = arith.constant 0 : i32
    %c0_i32_1 = arith.constant 0 : i32
    return %c0_i32, %c0_i32_0 : i32, i32
  }
  func.func @transform_9(%arg0: i32) -> (i32, i32) {
    %c0_i32 = arith.constant 0 : i32
    %c0_i32_0 = arith.constant 0 : i32
    %c0_i32_1 = arith.constant 0 : i32
    return %c0_i32, %c0_i32_0 : i32, i32
  }
  func.func @transform_10(%arg0: i32) -> (i32, i32) {
    %c0_i32 = arith.constant 0 : i32
    %c0_i32_0 = arith.constant 0 : i32
    return %arg0, %c0_i32 : i32, i32
  }
  func.func @transform_11(%arg0: i32) -> (i32, i32) {
    %c0_i32 = arith.constant 0 : i32
    %c0_i32_0 = arith.constant 0 : i32
    return %arg0, %c0_i32 : i32, i32
  }
  func.func @transform_12(%arg0: i32) -> (i32, i32) {
    %c0_i32 = arith.constant 0 : i32
    %c0_i32_0 = arith.constant 0 : i32
    return %arg0, %c0_i32 : i32, i32
  }
}

</mosaic_0001>

<llo_original>
// kernel: tpu_custom_call.1
$region0: #{tpu_custom_call.1}
  #allocation0 [shape = 'u32[]', space=smem, size = 0x4, offset = 0x4, fixed_abs, tag = 'smem constant byte address 0x4 - core index']
  #allocation1 [shape = 'u32[144,128]{1,0:T(1,128)}', space=vmem, size = 0x12000, scoped, tag = 'internal scratch']
  %s0 = inlined_call_operand.hbm [shape: f32[304,128], index: 0, kind: input, shape index: {}]
  %s1 = inlined_call_operand.hbm [shape: f32[304,256], index: 1, kind: input, shape index: {}]
  %s2 = inlined_call_operand.hbm [shape: bf16[128,640], index: 2, kind: input, shape index: {}]
  %s3 = inlined_call_operand.vmem [shape: f32[1,640], index: 3, kind: input, shape index: {}]
  %s4 = inlined_call_operand.hbm [shape: bf16[640,512], index: 4, kind: input, shape index: {}]
  %s5 = inlined_call_operand.hbm [shape: f32[1,512], index: 5, kind: input, shape index: {}]
  %s6 = inlined_call_operand.hbm [shape: bf16[256,640], index: 6, kind: input, shape index: {}]
  %s7 = inlined_call_operand.vmem [shape: f32[1,640], index: 7, kind: input, shape index: {}]
  %s8 = inlined_call_operand.hbm [shape: bf16[640,128], index: 8, kind: input, shape index: {}]
  %s9 = inlined_call_operand.vmem [shape: f32[1,128], index: 9, kind: input, shape index: {}]
  %s10 = inlined_call_operand.hbm [shape: f32[304,128], index: 10, kind: output, shape index: {0}]
  %s11 = inlined_call_operand.hbm [shape: f32[304,256], index: 11, kind: output, shape index: {1}]
  %s12 = inlined_call_operand.hbm [shape: f32[304,256], index: 12, kind: output, shape index: {2}]
  %13 = xla_tuple %s10, %s11, %s12
  %s14 = sld [smem:[#allocation0]]
  $region117: #{tpu_custom_call.1} parent=0
    _
  %s16 = ssub.s32 1, %s14
  %s17 = scalar_select 0, %s16, %s14
  $region1: #{tpu_custom_call.1} parent=0
    #allocation2 [shape = 'u8[155648]{0}', space=vmem, size = 0x26000, scoped, tag = 'input window, operand 0']
    #allocation3 [shape = 's32[2]{0}', space=sflag, size = 0x8, scoped, tag = 'scoped memory for tpu_custom_call.1']
    #allocation4 [shape = 's32[2]{0}', space=sflag, size = 0x8, scoped, tag = 'scoped memory for tpu_custom_call.1']
    #allocation5 [shape = 'u8[311296]{0}', space=vmem, size = 0x4c000, scoped, tag = 'input window, operand 1']
    #allocation6 [shape = 's32[2]{0}', space=sflag, size = 0x8, scoped, tag = 'scoped memory for tpu_custom_call.1']
    #allocation7 [shape = 'u8[163840]{0}', space=vmem, size = 0x28000, scoped, tag = 'input window, operand 2, single buffered']
    #allocation8 [shape = 'u8[655360]{0}', space=vmem, size = 0xa0000, scoped, tag = 'input window, operand 4, single buffered']
    #allocation9 [shape = 's32[1]{0}', space=sflag, size = 0x4, scoped, tag = 'scoped memory for tpu_custom_call.1']
    #allocation10 [shape = 'u8[2048]{0}', space=vmem, size = 0x800, scoped, tag = 'input window, operand 5, single buffered']
    #allocation11 [shape = 'u8[327680]{0}', space=vmem, size = 0x50000, scoped, tag = 'input window, operand 6, single buffered']
    #allocation12 [shape = 's32[1]{0}', space=sflag, size = 0x4, scoped, tag = 'scoped memory for tpu_custom_call.1']
    #allocation13 [shape = 'u8[163840]{0}', space=vmem, size = 0x28000, scoped, tag = 'input window, operand 8, single buffered']
    #allocation14 [shape = 'u8[155648]{0}', space=vmem, size = 0x26000, scoped, tag = 'output window, operand 0']
    #allocation15 [shape = 'u8[311296]{0}', space=vmem, size = 0x4c000, scoped, tag = 'output window, operand 1']
    #allocation16 [shape = 's32[2]{0}', space=sflag, size = 0x8, scoped, tag = 'scoped memory for tpu_custom_call.1']
    #allocation17 [shape = 'u8[311296]{0}', space=vmem, size = 0x4c000, scoped, tag = 'output window, operand 2']
    %18 = vsyncpa [#allocation3], 0
    %s19 = scalar_lea.sflag [#allocation3], 1
    %20 = vsyncpa %s19, 0
    %21 = vsyncpa [#allocation6], 0
    %s22 = scalar_lea.sflag [#allocation6], 1
    %23 = vsyncpa %s22, 0
    %24 = vsyncpa [#allocation9], 0
    %25 = vsyncpa [#allocation12], 0
    %26 = vsyncpa [#allocation4], 0
    %s27 = scalar_lea.sflag [#allocation4], 1
    %28 = vsyncpa %s27, 0
    %29 = vsyncpa [#allocation16], 0
    %s30 = scalar_lea.sflag [#allocation16], 1
    %31 = vsyncpa %s30, 0
    loop: start=0, step=1, limit=4
    $region2: #{tpu_custom_call.1} parent=1 // loop_pre_header
      _
    $region3: #{tpu_custom_call.1} parent=1 // loop_header
      %s33 = sphi 0, %s37
      %p34 = scmp.ge.s32.totalorder %s33, 4
      %s43 = sphi 0, %s45
      %s46 = sphi 0, %s43
      %s47 = sphi 0, %s46
      %s63 = sphi 0, %s47
      %s69 = sphi 0, %s71
      %s72 = sphi 0, %s69
      %s73 = sphi 0, %s72
      %s89 = sphi 0, %s73
      %s93 = sphi 0, %s93
      %s95 = sphi 0, %s93
      %s96 = sphi 0, %s95
      %s110 = sphi 0, %s96
      %s114 = sphi 0, %s114
      %s116 = sphi 0, %s114
      %s117 = sphi 0, %s116
      %s131 = sphi 0, %s117
      %s135 = sphi 0, %s135
      %s137 = sphi 0, %s135
      %s138 = sphi 0, %s137
      %s152 = sphi 0, %s138
      %s156 = sphi 0, %s156
      %s158 = sphi 0, %s156
      %s159 = sphi 0, %s158
      %s173 = sphi 0, %s159
      %s177 = sphi 0, %s177
      %s179 = sphi 0, %s177
      %s180 = sphi 0, %s179
      %s194 = sphi 0, %s180
      %s198 = sphi 0, %s198
      %s200 = sphi 0, %s198
      %s201 = sphi 0, %s200
      %s215 = sphi 0, %s201
      %s219 = sphi 0, %s219
      %s221 = sphi 0, %s219
      %s222 = sphi 0, %s221
      %s236 = sphi 0, %s222
      %s240 = sphi 0, %s240
      %s242 = sphi 0, %s240
      %s243 = sphi 0, %s242
      %s257 = sphi 0, %s243
      %s263 = sphi 0, %s265
      %s266 = sphi 0, %s263
      %s267 = sphi 0, %s266
      %s283 = sphi 0, %s267
      %s289 = sphi 0, %s291
      %s292 = sphi 0, %s289
      %s293 = sphi 0, %s292
      %s309 = sphi 0, %s293
      %s315 = sphi 0, %s317
      %s318 = sphi 0, %s315
      %s319 = sphi 0, %s318
      %s335 = sphi 0, %s319
    $region4: #{tpu_custom_call.1} parent=1 // loop_header_branch
      %36 = sbr.rel (%p34) target = $region8
    $region5: #{tpu_custom_call.1} parent=1 // loop_body
      %s38 = ssub.s32 %s33, 1
      %s39 = ssub.s32 %s33, 2
      %s40 = sadd.s32 %s33, 1
      %s41 = ssub.s32 %s33, %s40
      %p42 = scmp.eq.s32.totalorder %s41, 0
      %s44 = sadd.s32 %s43, 1
      %s45 = scalar_select %p42, %s43, %s44
      %p48 = pneg %p42
      %p49 = scmp.eq.s32.totalorder %s33, 1
      %p50 = por %p48, %p49
      %p51 = scmp.ne.s32.totalorder %s43, %s46
      %p52 = scmp.eq.s32.totalorder %s33, 0
      %p53 = por %p51, %p52
      %p54 = scmp.ne.s32.totalorder %s43, %s46
      %p55 = scmp.eq.s32.totalorder %s38, 1
      %p56 = por %p54, %p55
      %p57 = scmp.ne.s32.totalorder %s46, %s47
      %p58 = scmp.eq.s32.totalorder %s38, 0
      %p59 = por %p57, %p58
      %p60 = scmp.ne.s32.totalorder %s46, %s47
      %p61 = scmp.eq.s32.totalorder %s39, 1
      %p62 = por %p60, %p61
      %p64 = scmp.ne.s32.totalorder %s47, %s63
      %p65 = scmp.eq.s32.totalorder %s39, 0
      %p66 = por %p64, %p65
      %s67 = ssub.s32 %s33, %s40
      %p68 = scmp.eq.s32.totalorder %s67, 0
      %s70 = sadd.s32 %s69, 1
      %s71 = scalar_select %p68, %s69, %s70
      %p74 = pneg %p68
      %p75 = scmp.eq.s32.totalorder %s33, 1
      %p76 = por %p74, %p75
      %p77 = scmp.ne.s32.totalorder %s69, %s72
      %p78 = scmp.eq.s32.totalorder %s33, 0
      %p79 = por %p77, %p78
      %p80 = scmp.ne.s32.totalorder %s69, %s72
      %p81 = scmp.eq.s32.totalorder %s38, 1
      %p82 = por %p80, %p81
      %p83 = scmp.ne.s32.totalorder %s72, %s73
      %p84 = scmp.eq.s32.totalorder %s38, 0
      %p85 = por %p83, %p84
      %p86 = scmp.ne.s32.totalorder %s72, %s73
      %p87 = scmp.eq.s32.totalorder %s39, 1
      %p88 = por %p86, %p87
      %p90 = scmp.ne.s32.totalorder %s73, %s89
      %p91 = scmp.eq.s32.totalorder %s39, 0
      %p92 = por %p90, %p91
      %s94 = sadd.s32 %s93, 1
      %p97 = scmp.eq.s32.totalorder %s33, 1
      %p98 = scmp.ne.s32.totalorder %s93, %s95
      %p99 = scmp.eq.s32.totalorder %s33, 0
      %p100 = por %p98, %p99
      %p101 = scmp.ne.s32.totalorder %s93, %s95
      %p102 = scmp.eq.s32.totalorder %s38, 1
      %p103 = por %p101, %p102
      %p104 = scmp.ne.s32.totalorder %s95, %s96
      %p105 = scmp.eq.s32.totalorder %s38, 0
      %p106 = por %p104, %p105
      %p107 = scmp.ne.s32.totalorder %s95, %s96
      %p108 = scmp.eq.s32.totalorder %s39, 1
      %p109 = por %p107, %p108
      %p111 = scmp.ne.s32.totalorder %s96, %s110
      %p112 = scmp.eq.s32.totalorder %s39, 0
      %p113 = por %p111, %p112
      %s115 = sadd.s32 %s114, 1
      %p118 = scmp.eq.s32.totalorder %s33, 1
      %p119 = scmp.ne.s32.totalorder %s114, %s116
      %p120 = scmp.eq.s32.totalorder %s33, 0
      %p121 = por %p119, %p120
      %p122 = scmp.ne.s32.totalorder %s114, %s116
      %p123 = scmp.eq.s32.totalorder %s38, 1
      %p124 = por %p122, %p123
      %p125 = scmp.ne.s32.totalorder %s116, %s117
      %p126 = scmp.eq.s32.totalorder %s38, 0
      %p127 = por %p125, %p126
      %p128 = scmp.ne.s32.totalorder %s116, %s117
      %p129 = scmp.eq.s32.totalorder %s39, 1
      %p130 = por %p128, %p129
      %p132 = scmp.ne.s32.totalorder %s117, %s131
      %p133 = scmp.eq.s32.totalorder %s39, 0
      %p134 = por %p132, %p133
      %s136 = sadd.s32 %s135, 1
      %p139 = scmp.eq.s32.totalorder %s33, 1
      %p140 = scmp.ne.s32.totalorder %s135, %s137
      %p141 = scmp.eq.s32.totalorder %s33, 0
      %p142 = por %p140, %p141
      %p143 = scmp.ne.s32.totalorder %s135, %s137
      %p144 = scmp.eq.s32.totalorder %s38, 1
      %p145 = por %p143, %p144
      %p146 = scmp.ne.s32.totalorder %s137, %s138
      %p147 = scmp.eq.s32.totalorder %s38, 0
      %p148 = por %p146, %p147
      %p149 = scmp.ne.s32.totalorder %s137, %s138
      %p150 = scmp.eq.s32.totalorder %s39, 1
      %p151 = por %p149, %p150
      %p153 = scmp.ne.s32.totalorder %s138, %s152
      %p154 = scmp.eq.s32.totalorder %s39, 0
      %p155 = por %p153, %p154
      %s157 = sadd.s32 %s156, 1
      %p160 = scmp.eq.s32.totalorder %s33, 1
      %p161 = scmp.ne.s32.totalorder %s156, %s158
      %p162 = scmp.eq.s32.totalorder %s33, 0
      %p163 = por %p161, %p162
      %p164 = scmp.ne.s32.totalorder %s156, %s158
      %p165 = scmp.eq.s32.totalorder %s38, 1
      %p166 = por %p164, %p165
      %p167 = scmp.ne.s32.totalorder %s158, %s159
      %p168 = scmp.eq.s32.totalorder %s38, 0
      %p169 = por %p167, %p168
      %p170 = scmp.ne.s32.totalorder %s158, %s159
      %p171 = scmp.eq.s32.totalorder %s39, 1
      %p172 = por %p170, %p171
      %p174 = scmp.ne.s32.totalorder %s159, %s173
      %p175 = scmp.eq.s32.totalorder %s39, 0
      %p176 = por %p174, %p175
      %s178 = sadd.s32 %s177, 1
      %p181 = scmp.eq.s32.totalorder %s33, 1
      %p182 = scmp.ne.s32.totalorder %s177, %s179
      %p183 = scmp.eq.s32.totalorder %s33, 0
      %p184 = por %p182, %p183
      %p185 = scmp.ne.s32.totalorder %s177, %s179
      %p186 = scmp.eq.s32.totalorder %s38, 1
      %p187 = por %p185, %p186
      %p188 = scmp.ne.s32.totalorder %s179, %s180
      %p189 = scmp.eq.s32.totalorder %s38, 0
      %p190 = por %p188, %p189
      %p191 = scmp.ne.s32.totalorder %s179, %s180
      %p192 = scmp.eq.s32.totalorder %s39, 1
      %p193 = por %p191, %p192
      %p195 = scmp.ne.s32.totalorder %s180, %s194
      %p196 = scmp.eq.s32.totalorder %s39, 0
      %p197 = por %p195, %p196
      %s199 = sadd.s32 %s198, 1
      %p202 = scmp.eq.s32.totalorder %s33, 1
      %p203 = scmp.ne.s32.totalorder %s198, %s200
      %p204 = scmp.eq.s32.totalorder %s33, 0
      %p205 = por %p203, %p204
      %p206 = scmp.ne.s32.totalorder %s198, %s200
      %p207 = scmp.eq.s32.totalorder %s38, 1
      %p208 = por %p206, %p207
      %p209 = scmp.ne.s32.totalorder %s200, %s201
      %p210 = scmp.eq.s32.totalorder %s38, 0
      %p211 = por %p209, %p210
      %p212 = scmp.ne.s32.totalorder %s200, %s201
      %p213 = scmp.eq.s32.totalorder %s39, 1
      %p214 = por %p212, %p213
      %p216 = scmp.ne.s32.totalorder %s201, %s215
      %p217 = scmp.eq.s32.totalorder %s39, 0
      %p218 = por %p216, %p217
      %s220 = sadd.s32 %s219, 1
      %p223 = scmp.eq.s32.totalorder %s33, 1
      %p224 = scmp.ne.s32.totalorder %s219, %s221
      %p225 = scmp.eq.s32.totalorder %s33, 0
      %p226 = por %p224, %p225
      %p227 = scmp.ne.s32.totalorder %s219, %s221
      %p228 = scmp.eq.s32.totalorder %s38, 1
      %p229 = por %p227, %p228
      %p230 = scmp.ne.s32.totalorder %s221, %s222
      %p231 = scmp.eq.s32.totalorder %s38, 0
      %p232 = por %p230, %p231
      %p233 = scmp.ne.s32.totalorder %s221, %s222
      %p234 = scmp.eq.s32.totalorder %s39, 1
      %p235 = por %p233, %p234
      %p237 = scmp.ne.s32.totalorder %s222, %s236
      %p238 = scmp.eq.s32.totalorder %s39, 0
      %p239 = por %p237, %p238
      %s241 = sadd.s32 %s240, 1
      %p244 = scmp.eq.s32.totalorder %s33, 1
      %p245 = scmp.ne.s32.totalorder %s240, %s242
      %p246 = scmp.eq.s32.totalorder %s33, 0
      %p247 = por %p245, %p246
      %p248 = scmp.ne.s32.totalorder %s240, %s242
      %p249 = scmp.eq.s32.totalorder %s38, 1
      %p250 = por %p248, %p249
      %p251 = scmp.ne.s32.totalorder %s242, %s243
      %p252 = scmp.eq.s32.totalorder %s38, 0
      %p253 = por %p251, %p252
      %p254 = scmp.ne.s32.totalorder %s242, %s243
      %p255 = scmp.eq.s32.totalorder %s39, 1
      %p256 = por %p254, %p255
      %p258 = scmp.ne.s32.totalorder %s243, %s257
      %p259 = scmp.eq.s32.totalorder %s39, 0
      %p260 = por %p258, %p259
      %s261 = ssub.s32 %s33, %s40
      %p262 = scmp.eq.s32.totalorder %s261, 0
      %s264 = sadd.s32 %s263, 1
      %s265 = scalar_select %p262, %s263, %s264
      %p268 = pneg %p262
      %p269 = scmp.eq.s32.totalorder %s33, 1
      %p270 = por %p268, %p269
      %p271 = scmp.ne.s32.totalorder %s263, %s266
      %p272 = scmp.eq.s32.totalorder %s33, 0
      %p273 = por %p271, %p272
      %p274 = scmp.ne.s32.totalorder %s263, %s266
      %p275 = scmp.eq.s32.totalorder %s38, 1
      %p276 = por %p274, %p275
      %p277 = scmp.ne.s32.totalorder %s266, %s267
      %p278 = scmp.eq.s32.totalorder %s38, 0
      %p279 = por %p277, %p278
      %p280 = scmp.ne.s32.totalorder %s266, %s267
      %p281 = scmp.eq.s32.totalorder %s39, 1
      %p282 = por %p280, %p281
      %p284 = scmp.ne.s32.totalorder %s267, %s283
      %p285 = scmp.eq.s32.totalorder %s39, 0
      %p286 = por %p284, %p285
      %s287 = ssub.s32 %s33, %s40
      %p288 = scmp.eq.s32.totalorder %s287, 0
      %s290 = sadd.s32 %s289, 1
      %s291 = scalar_select %p288, %s289, %s290
      %p294 = pneg %p288
      %p295 = scmp.eq.s32.totalorder %s33, 1
      %p296 = por %p294, %p295
      %p297 = scmp.ne.s32.totalorder %s289, %s292
      %p298 = scmp.eq.s32.totalorder %s33, 0
      %p299 = por %p297, %p298
      %p300 = scmp.ne.s32.totalorder %s289, %s292
      %p301 = scmp.eq.s32.totalorder %s38, 1
      %p302 = por %p300, %p301
      %p303 = scmp.ne.s32.totalorder %s292, %s293
      %p304 = scmp.eq.s32.totalorder %s38, 0
      %p305 = por %p303, %p304
      %p306 = scmp.ne.s32.totalorder %s292, %s293
      %p307 = scmp.eq.s32.totalorder %s39, 1
      %p308 = por %p306, %p307
      %p310 = scmp.ne.s32.totalorder %s293, %s309
      %p311 = scmp.eq.s32.totalorder %s39, 0
      %p312 = por %p310, %p311
      %s313 = ssub.s32 %s33, %s40
      %p314 = scmp.eq.s32.totalorder %s313, 0
      %s316 = sadd.s32 %s315, 1
      %s317 = scalar_select %p314, %s315, %s316
      %p320 = pneg %p314
      %p321 = scmp.eq.s32.totalorder %s33, 1
      %p322 = por %p320, %p321
      %p323 = scmp.ne.s32.totalorder %s315, %s318
      %p324 = scmp.eq.s32.totalorder %s33, 0
      %p325 = por %p323, %p324
      %p326 = scmp.ne.s32.totalorder %s315, %s318
      %p327 = scmp.eq.s32.totalorder %s38, 1
      %p328 = por %p326, %p327
      %p329 = scmp.ne.s32.totalorder %s318, %s319
      %p330 = scmp.eq.s32.totalorder %s38, 0
      %p331 = por %p329, %p330
      %p332 = scmp.ne.s32.totalorder %s318, %s319
      %p333 = scmp.eq.s32.totalorder %s39, 1
      %p334 = por %p332, %p333
      %p336 = scmp.ne.s32.totalorder %s319, %s335
      %p337 = scmp.eq.s32.totalorder %s39, 0
      %p338 = por %p336, %p337
      %p339 = scmp.le.s32.totalorder 1, %s33
      %p340 = scmp.lt.s32.totalorder %s33, 3
      %p341 = pnand %p339, %p340
      %p342 = pneg %p341
      // Predicated region
      $region9: #{tpu_custom_call.1} parent=5 // pred_check
        _
      $region10: #{tpu_custom_call.1} parent=5 // pred_check_branch
        %344 = sbr.rel (%p341) target = $region12
      $region11: #{tpu_custom_call.1} parent=5 // pred_region
        %s345 = ssub.s32 %s33, 1
        // Predicated region
        $region13: #{tpu_custom_call.1} parent=11 // pred_check
          %p346 = pneg %p106
        $region14: #{tpu_custom_call.1} parent=11 // pred_check_branch
          %348 = sbr.rel (%p346) target = $region16
        $region15: #{tpu_custom_call.1} parent=11 // pred_region
          %s350 = ssub.s32 5120, 5120
          %351 = vsyncadd [#allocation6], %s350
          %s352 = sshll.u32 [#allocation7], 4
          %s353 = int_to_ptr.vmem [resolvable:$true] %s352
          %358 = dma.hbm_to_vmem [thread:$0]  %s2, 5120, %s353, [#allocation6], 320, 320, 20
        $region16: #{tpu_custom_call.1} parent=11 // pred_fallthru
          _
        // Predicated region
        $region17: #{tpu_custom_call.1} parent=11 // pred_check
          %p359 = pneg %p127
        $region18: #{tpu_custom_call.1} parent=11 // pred_check_branch
          %361 = sbr.rel (%p359) target = $region20
        $region19: #{tpu_custom_call.1} parent=11 // pred_region
          _
        $region20: #{tpu_custom_call.1} parent=11 // pred_fallthru
          _
        // Predicated region
        $region21: #{tpu_custom_call.1} parent=11 // pred_check
          %p362 = pneg %p148
        $region22: #{tpu_custom_call.1} parent=11 // pred_check_branch
          %364 = sbr.rel (%p362) target = $region24
        $region23: #{tpu_custom_call.1} parent=11 // pred_region
          %s366 = ssub.s32 20480, 20480
          %367 = vsyncadd [#allocation9], %s366
          %s368 = sshll.u32 [#allocation8], 4
          %s369 = int_to_ptr.vmem [resolvable:$true] %s368
          %374 = dma.hbm_to_vmem [thread:$0]  %s4, 20480, %s369, [#allocation9], 256, 256, 16
        $region24: #{tpu_custom_call.1} parent=11 // pred_fallthru
          _
        // Predicated region
        $region25: #{tpu_custom_call.1} parent=11 // pred_check
          %p375 = pneg %p169
        $region26: #{tpu_custom_call.1} parent=11 // pred_check_branch
          %377 = sbr.rel (%p375) target = $region28
        $region27: #{tpu_custom_call.1} parent=11 // pred_region
          %s379 = ssub.s32 64, 64
          %380 = vsyncadd [#allocation9], %s379
          %s382 = sshll.u32 [#allocation10], 4
          %s383 = int_to_ptr.vmem [resolvable:$true] %s382
          %385 = dma.hbm_to_vmem [thread:$0]  %s5, 64, %s383, [#allocation9]
        $region28: #{tpu_custom_call.1} parent=11 // pred_fallthru
          _
        // Predicated region
        $region29: #{tpu_custom_call.1} parent=11 // pred_check
          %p386 = pneg %p190
        $region30: #{tpu_custom_call.1} parent=11 // pred_check_branch
          %388 = sbr.rel (%p386) target = $region32
        $region31: #{tpu_custom_call.1} parent=11 // pred_region
          %s390 = ssub.s32 10240, 10240
          %391 = vsyncadd [#allocation12], %s390
          %s392 = sshll.u32 [#allocation11], 4
          %s393 = int_to_ptr.vmem [resolvable:$true] %s392
          %398 = dma.hbm_to_vmem [thread:$0]  %s6, 10240, %s393, [#allocation12], 320, 320, 20
        $region32: #{tpu_custom_call.1} parent=11 // pred_fallthru
          _
        // Predicated region
        $region33: #{tpu_custom_call.1} parent=11 // pred_check
          %p399 = pneg %p211
        $region34: #{tpu_custom_call.1} parent=11 // pred_check_branch
          %401 = sbr.rel (%p399) target = $region36
        $region35: #{tpu_custom_call.1} parent=11 // pred_region
          _
        $region36: #{tpu_custom_call.1} parent=11 // pred_fallthru
          _
        // Predicated region
        $region37: #{tpu_custom_call.1} parent=11 // pred_check
          %p402 = pneg %p232
        $region38: #{tpu_custom_call.1} parent=11 // pred_check_branch
          %404 = sbr.rel (%p402) target = $region40
        $region39: #{tpu_custom_call.1} parent=11 // pred_region
          %s406 = ssub.s32 5120, 5120
          %407 = vsyncadd [#allocation12], %s406
          %s408 = sshll.u32 [#allocation13], 4
          %s409 = int_to_ptr.vmem [resolvable:$true] %s408
          %414 = dma.hbm_to_vmem [thread:$0]  %s8, 5120, %s409, [#allocation12], 64, 64, 4
        $region40: #{tpu_custom_call.1} parent=11 // pred_fallthru
          _
        // Predicated region
        $region41: #{tpu_custom_call.1} parent=11 // pred_check
          %p415 = pneg %p253
        $region42: #{tpu_custom_call.1} parent=11 // pred_check_branch
          %417 = sbr.rel (%p415) target = $region44
        $region43: #{tpu_custom_call.1} parent=11 // pred_region
          _
        $region44: #{tpu_custom_call.1} parent=11 // pred_fallthru
          _
      $region12: #{tpu_custom_call.1} parent=5 // pred_fallthru
        _
      %p418 = scmp.lt.s32.totalorder %s33, 2
      // Predicated region
      $region45: #{tpu_custom_call.1} parent=5 // pred_check
        %p419 = pneg %p418
      $region46: #{tpu_custom_call.1} parent=5 // pred_check_branch
        %421 = sbr.rel (%p419) target = $region48
      $region47: #{tpu_custom_call.1} parent=5 // pred_region
        // Predicated region
        $region49: #{tpu_custom_call.1} parent=47 // pred_check
          %p422 = pneg %p53
        $region50: #{tpu_custom_call.1} parent=47 // pred_check_branch
          %424 = sbr.rel (%p422) target = $region52
        $region51: #{tpu_custom_call.1} parent=47 // pred_region
          %s425 = sand.u32 %s43, 1
          %s426 = scalar_lea.sflag [#allocation3], %s425
          %s427 = sand.u32 %s43, 1
          %s428 = smul.addr %s427, 152
          %s429 = scalar_lea.vmem [#allocation2], %s428
          %s430 = smul.u32 19, %s33
          %s432 = ssub.s32 2432, 2432
          %433 = vsyncadd %s426, %s432
          %s434 = smul.addr %s430, 128
          %s435 = scalar_lea.hbm %s0, %s434
          %s436 = sshll.u32 %s429, 4
          %s437 = int_to_ptr.vmem [resolvable:$true] %s436
          %442 = dma.hbm_to_vmem [thread:$0]  %s435, 2432, %s437, %s426, 128, 128, 8
        $region52: #{tpu_custom_call.1} parent=47 // pred_fallthru
          _
        // Predicated region
        $region53: #{tpu_custom_call.1} parent=47 // pred_check
          %p443 = pneg %p79
        $region54: #{tpu_custom_call.1} parent=47 // pred_check_branch
          %445 = sbr.rel (%p443) target = $region56
        $region55: #{tpu_custom_call.1} parent=47 // pred_region
          %s446 = sand.u32 %s33, 1
          %s447 = scalar_lea.sflag [#allocation6], %s446
          %s448 = sand.u32 %s69, 1
          %s449 = smul.addr %s448, 304
          %s450 = scalar_lea.vmem [#allocation5], %s449
          %s451 = smul.u32 19, %s33
          %s453 = ssub.s32 4864, 4864
          %454 = vsyncadd %s447, %s453
          %s455 = smul.addr %s451, 2
          %s456 = smul.addr %s455, 128
          %s457 = scalar_lea.hbm %s1, %s456
          %s458 = sshll.u32 %s450, 4
          %s459 = int_to_ptr.vmem [resolvable:$true] %s458
          %464 = dma.hbm_to_vmem [thread:$0]  %s457, 4864, %s459, %s447, 256, 256, 16
        $region56: #{tpu_custom_call.1} parent=47 // pred_fallthru
          _
      $region48: #{tpu_custom_call.1} parent=5 // pred_fallthru
        _
      %p465 = scmp.le.s32.totalorder 1, %s33
      %p466 = scmp.lt.s32.totalorder %s33, 3
      %p467 = pnand %p465, %p466
      %p468 = pneg %p467
      // Predicated region
      $region57: #{tpu_custom_call.1} parent=5 // pred_check
        _
      $region58: #{tpu_custom_call.1} parent=5 // pred_check_branch
        %470 = sbr.rel (%p467) target = $region60
      $region59: #{tpu_custom_call.1} parent=5 // pred_region
        %s471 = ssub.s32 %s33, 1
        %s472 = sand.u32 %s46, 1
        %s473 = scalar_lea.sflag [#allocation3], %s472
        %s474 = sand.u32 %s46, 1
        %s475 = smul.addr %s474, 152
        %s476 = scalar_lea.vmem [#allocation2], %s475
        // Predicated region
        $region61: #{tpu_custom_call.1} parent=59 // pred_check
          %p477 = pneg %p59
        $region62: #{tpu_custom_call.1} parent=59 // pred_check_branch
          %479 = sbr.rel (%p477) target = $region64
        $region63: #{tpu_custom_call.1} parent=59 // pred_region
          %480 = dma.done %s473, 2432
        $region64: #{tpu_custom_call.1} parent=59 // pred_fallthru
          _
        %s481 = sand.u32 %s38, 1
        %s482 = scalar_lea.sflag [#allocation6], %s481
        %s483 = sand.u32 %s72, 1
        %s484 = smul.addr %s483, 304
        %s485 = scalar_lea.vmem [#allocation5], %s484
        // Predicated region
        $region65: #{tpu_custom_call.1} parent=59 // pred_check
          %p486 = pneg %p85
        $region66: #{tpu_custom_call.1} parent=59 // pred_check_branch
          %488 = sbr.rel (%p486) target = $region68
        $region67: #{tpu_custom_call.1} parent=59 // pred_region
          %489 = dma.done %s482, 4864
        $region68: #{tpu_custom_call.1} parent=59 // pred_fallthru
          _
        // Predicated region
        $region69: #{tpu_custom_call.1} parent=59 // pred_check
          %p490 = pneg %p106
        $region70: #{tpu_custom_call.1} parent=59 // pred_check_branch
          %492 = sbr.rel (%p490) target = $region72
        $region71: #{tpu_custom_call.1} parent=59 // pred_region
          %493 = dma.done [#allocation6], 5120
        $region72: #{tpu_custom_call.1} parent=59 // pred_fallthru
          _
        // Predicated region
        $region73: #{tpu_custom_call.1} parent=59 // pred_check
          %p494 = pneg %p148
        $region74: #{tpu_custom_call.1} parent=59 // pred_check_branch
          %496 = sbr.rel (%p494) target = $region76
        $region75: #{tpu_custom_call.1} parent=59 // pred_region
          %497 = dma.done [#allocation9], 20480
        $region76: #{tpu_custom_call.1} parent=59 // pred_fallthru
          _
        // Predicated region
        $region77: #{tpu_custom_call.1} parent=59 // pred_check
          %p498 = pneg %p169
        $region78: #{tpu_custom_call.1} parent=59 // pred_check_branch
          %500 = sbr.rel (%p498) target = $region80
        $region79: #{tpu_custom_call.1} parent=59 // pred_region
          %501 = dma.done [#allocation9], 64
        $region80: #{tpu_custom_call.1} parent=59 // pred_fallthru
          _
        // Predicated region
        $region81: #{tpu_custom_call.1} parent=59 // pred_check
          %p502 = pneg %p190
        $region82: #{tpu_custom_call.1} parent=59 // pred_check_branch
          %504 = sbr.rel (%p502) target = $region84
        $region83: #{tpu_custom_call.1} parent=59 // pred_region
          %505 = dma.done [#allocation12], 10240
        $region84: #{tpu_custom_call.1} parent=59 // pred_fallthru
          _
        // Predicated region
        $region85: #{tpu_custom_call.1} parent=59 // pred_check
          %p506 = pneg %p232
        $region86: #{tpu_custom_call.1} parent=59 // pred_check_branch
          %508 = sbr.rel (%p506) target = $region88
        $region87: #{tpu_custom_call.1} parent=59 // pred_region
          %509 = dma.done [#allocation12], 5120
        $region88: #{tpu_custom_call.1} parent=59 // pred_fallthru
          _
        %s510 = sand.u32 %s46, 1
        %s511 = scalar_lea.sflag [#allocation3], %s510
        %s512 = sand.u32 %s46, 1
        %s513 = smul.addr %s512, 152
        %s514 = scalar_lea.vmem [#allocation2], %s513
        %p515 = pneg %p59
        %p516 = pneg %p56
        %s517 = sand.u32 %s38, 1
        %s518 = scalar_lea.sflag [#allocation6], %s517
        %s519 = sand.u32 %s72, 1
        %s520 = smul.addr %s519, 304
        %s521 = scalar_lea.vmem [#allocation5], %s520
        %p522 = pneg %p85
        %p523 = pneg %p82
        %p524 = pneg %p106
        %p525 = pneg %p103
        %p526 = pneg %p127
        %p527 = pneg %p124
        %p528 = pneg %p148
        %p529 = pneg %p145
        %p530 = pneg %p169
        %p531 = pneg %p166
        %p532 = pneg %p190
        %p533 = pneg %p187
        %p534 = pneg %p211
        %p535 = pneg %p208
        %p536 = pneg %p232
        %p537 = pneg %p229
        %p538 = pneg %p253
        %p539 = pneg %p250
        %p540 = pneg %p279
        %p541 = pneg %p276
        %s542 = sand.u32 %s266, 1
        %s543 = scalar_lea.sflag [#allocation4], %s542
        %s544 = sand.u32 %s266, 1
        %s545 = smul.addr %s544, 152
        %s546 = scalar_lea.vmem [#allocation14], %s545
        %p547 = pneg %p305
        %p548 = pneg %p302
        %s549 = sand.u32 %s38, 1
        %s550 = scalar_lea.sflag [#allocation16], %s549
        %s551 = sand.u32 %s292, 1
        %s552 = smul.addr %s551, 304
        %s553 = scalar_lea.vmem [#allocation15], %s552
        %p554 = pneg %p331
        %p555 = pneg %p328
        %s556 = sand.u32 %s38, 1
        %s557 = scalar_lea.sflag [#allocation16], %s556
        %s558 = sand.u32 %s318, 1
        %s559 = smul.addr %s558, 304
        %s560 = scalar_lea.vmem [#allocation17], %s559
        %s561 = smul.u32 19, %s38
        %s562 = smul.u32 19, %s38
        %s563 = smul.u32 19, %s38
        %s564 = smul.u32 19, %s38
        %s565 = smul.u32 19, %s38
        %v567 = vld [vmem:[%s476] sm:$0xff]
        %v568 = vld [vmem:[%s476 + $0x8] sm:$0xff]
        %v569 = vld [vmem:[%s476 + $0x10] sm:$0xff]
        %v570 = vld [vmem:[%s476 + $0x18] sm:$0xff]
        %v571 = vld [vmem:[%s476 + $0x20] sm:$0xff]
        %v572 = vld [vmem:[%s476 + $0x28] sm:$0xff]
        %v573 = vld [vmem:[%s476 + $0x30] sm:$0xff]
        %v574 = vld [vmem:[%s476 + $0x38] sm:$0xff]
        %v575 = vld [vmem:[%s476 + $0x40] sm:$0xff]
        %v576 = vld [vmem:[%s476 + $0x48] sm:$0xff]
        %v577 = vld [vmem:[%s476 + $0x50] sm:$0xff]
        %v578 = vld [vmem:[%s476 + $0x58] sm:$0xff]
        %v579 = vld [vmem:[%s476 + $0x60] sm:$0xff]
        %v580 = vld [vmem:[%s476 + $0x68] sm:$0xff]
        %v581 = vld [vmem:[%s476 + $0x70] sm:$0xff]
        %v582 = vld [vmem:[%s476 + $0x78] sm:$0xff]
        %v583 = vld [vmem:[%s476 + $0x80] sm:$0xff]
        %v584 = vld [vmem:[%s476 + $0x88] sm:$0xff]
        %v585 = vld [vmem:[%s476 + $0x90] sm:$0xff]
        %v586 = vpack.c.bf16 %v568, %v567
        %v587 = vpack.c.bf16 %v570, %v569
        %v588 = vpack.c.bf16 %v572, %v571
        %v589 = vpack.c.bf16 %v574, %v573
        %v590 = vpack.c.bf16 %v576, %v575
        %v591 = vpack.c.bf16 %v578, %v577
        %v592 = vpack.c.bf16 %v580, %v579
        %v593 = vpack.c.bf16 %v582, %v581
        %v594 = vpack.c.bf16 %v584, %v583
        %v595 = vpack.c.bf16 %v585, %v585
        %v596 = vld [vmem:[#allocation7] sm:$0xff]
        %v597 = vld [vmem:[#allocation7 + $0x8] sm:$0xff]
        %v598 = vld [vmem:[#allocation7 + $0x10] sm:$0xf]
        %v599 = vld [vmem:[#allocation7 + $0x14] sm:$0xff]
        %v600 = vld [vmem:[#allocation7 + $0x1c] sm:$0xff]
        %v601 = vld [vmem:[#allocation7 + $0x24] sm:$0xf]
        %v602 = vld [vmem:[#allocation7 + $0x28] sm:$0xff]
        %v603 = vld [vmem:[#allocation7 + $0x30] sm:$0xff]
        %v604 = vld [vmem:[#allocation7 + $0x38] sm:$0xf]
        %v605 = vld [vmem:[#allocation7 + $0x3c] sm:$0xff]
        %v606 = vld [vmem:[#allocation7 + $0x44] sm:$0xff]
        %v607 = vld [vmem:[#allocation7 + $0x4c] sm:$0xf]
        %v608 = vld [vmem:[#allocation7 + $0x50] sm:$0xff]
        %v609 = vld [vmem:[#allocation7 + $0x58] sm:$0xff]
        %v610 = vld [vmem:[#allocation7 + $0x60] sm:$0xf]
        %v611 = vld [vmem:[#allocation7 + $0x64] sm:$0xff]
        %v612 = vld [vmem:[#allocation7 + $0x6c] sm:$0xff]
        %v613 = vld [vmem:[#allocation7 + $0x74] sm:$0xf]
        %v614 = vld [vmem:[#allocation7 + $0x78] sm:$0xff]
        %v615 = vld [vmem:[#allocation7 + $0x80] sm:$0xff]
        %v616 = vld [vmem:[#allocation7 + $0x88] sm:$0xf]
        %v617 = vld [vmem:[#allocation7 + $0x8c] sm:$0xff]
        %v618 = vld [vmem:[#allocation7 + $0x94] sm:$0xff]
        %v619 = vld [vmem:[#allocation7 + $0x9c] sm:$0xf]
        %v620 = vld [vmem:[#allocation7 + $0xa0] sm:$0xff]
        %v621 = vld [vmem:[#allocation7 + $0xa8] sm:$0xff]
        %v622 = vld [vmem:[#allocation7 + $0xb0] sm:$0xf]
        %v623 = vld [vmem:[#allocation7 + $0xb4] sm:$0xff]
        %v624 = vld [vmem:[#allocation7 + $0xbc] sm:$0xff]
        %v625 = vld [vmem:[#allocation7 + $0xc4] sm:$0xf]
        %v626 = vld [vmem:[#allocation7 + $0xc8] sm:$0xff]
        %v627 = vld [vmem:[#allocation7 + $0xd0] sm:$0xff]
        %v628 = vld [vmem:[#allocation7 + $0xd8] sm:$0xf]
        %v629 = vld [vmem:[#allocation7 + $0xdc] sm:$0xff]
        %v630 = vld [vmem:[#allocation7 + $0xe4] sm:$0xff]
        %v631 = vld [vmem:[#allocation7 + $0xec] sm:$0xf]
        %v632 = vld [vmem:[#allocation7 + $0xf0] sm:$0xff]
        %v633 = vld [vmem:[#allocation7 + $0xf8] sm:$0xff]
        %v634 = vld [vmem:[#allocation7 + $0x100] sm:$0xf]
        %v635 = vld [vmem:[#allocation7 + $0x104] sm:$0xff]
        %v636 = vld [vmem:[#allocation7 + $0x10c] sm:$0xff]
        %v637 = vld [vmem:[#allocation7 + $0x114] sm:$0xf]
        %v638 = vld [vmem:[#allocation7 + $0x118] sm:$0xff]
        %v639 = vld [vmem:[#allocation7 + $0x120] sm:$0xff]
        %v640 = vld [vmem:[#allocation7 + $0x128] sm:$0xf]
        %v641 = vld [vmem:[#allocation7 + $0x12c] sm:$0xff]
        %v642 = vld [vmem:[#allocation7 + $0x134] sm:$0xff]
        %v643 = vld [vmem:[#allocation7 + $0x13c] sm:$0xf]
        %v644 = vld [vmem:[%s3] sm:$0x1f]
        %v646 = vlaneseq
        %v647 = vshrl.u32 %v646, 7
        %v648 = vsub.s32 0, %v647
        %v649 = vrot.slane %v644, %v648
        %v650 = vlaneseq
        %v651 = vshrl.u32 %v650, 7
        %v652 = vsub.s32 1, %v651
        %v653 = vrot.slane %v644, %v652
        %v654 = vlaneseq
        %v655 = vshrl.u32 %v654, 7
        %v656 = vsub.s32 2, %v655
        %v657 = vrot.slane %v644, %v656
        %v658 = vlaneseq
        %v659 = vshrl.u32 %v658, 7
        %v660 = vsub.s32 3, %v659
        %v661 = vrot.slane %v644, %v660
        %v662 = vlaneseq
        %v663 = vshrl.u32 %v662, 7
        %v664 = vsub.s32 4, %v663
        %v665 = vrot.slane %v644, %v664
        %v719 = vunpack.c.l.b16 %v596
        %v720 = vunpack.c.h.b16 %v596
        %v721 = vunpack.c.l.b16 %v597
        %v722 = vunpack.c.h.b16 %v597
        %v723 = vunpack.c.l.b16 %v598
        %v724 = vunpack.c.l.b16 %v599
        %v725 = vunpack.c.h.b16 %v599
        %v726 = vunpack.c.l.b16 %v600
        %v727 = vunpack.c.h.b16 %v600
        %v728 = vunpack.c.l.b16 %v601
        %v729 = vunpack.c.l.b16 %v602
        %v730 = vunpack.c.h.b16 %v602
        %v731 = vunpack.c.l.b16 %v603
        %v732 = vunpack.c.h.b16 %v603
        %v733 = vunpack.c.l.b16 %v604
        %v734 = vunpack.c.l.b16 %v605
        %v735 = vunpack.c.h.b16 %v605
        %v736 = vunpack.c.l.b16 %v606
        %v737 = vunpack.c.h.b16 %v606
        %v738 = vunpack.c.l.b16 %v607
        %v739 = vunpack.c.l.b16 %v608
        %v740 = vunpack.c.h.b16 %v608
        %v741 = vunpack.c.l.b16 %v609
        %v742 = vunpack.c.h.b16 %v609
        %v743 = vunpack.c.l.b16 %v610
        %v744 = vunpack.c.l.b16 %v611
        %v745 = vunpack.c.h.b16 %v611
        %v746 = vunpack.c.l.b16 %v612
        %v747 = vunpack.c.h.b16 %v612
        %v748 = vunpack.c.l.b16 %v613
        %v749 = vunpack.c.l.b16 %v614
        %v750 = vunpack.c.h.b16 %v614
        %v751 = vunpack.c.l.b16 %v615
        %v752 = vunpack.c.h.b16 %v615
        %v753 = vunpack.c.l.b16 %v616
        %v754 = vunpack.c.l.b16 %v617
        %v755 = vunpack.c.h.b16 %v617
        %v756 = vunpack.c.l.b16 %v618
        %v757 = vunpack.c.h.b16 %v618
        %v758 = vunpack.c.l.b16 %v619
        %v759 = vunpack.c.l.b16 %v620
        %v760 = vunpack.c.h.b16 %v620
        %v761 = vunpack.c.l.b16 %v621
        %v762 = vunpack.c.h.b16 %v621
        %v763 = vunpack.c.l.b16 %v622
        %v764 = vunpack.c.l.b16 %v623
        %v765 = vunpack.c.h.b16 %v623
        %v766 = vunpack.c.l.b16 %v624
        %v767 = vunpack.c.h.b16 %v624
        %v768 = vunpack.c.l.b16 %v625
        %v769 = vunpack.c.l.b16 %v626
        %v770 = vunpack.c.h.b16 %v626
        %v771 = vunpack.c.l.b16 %v627
        %v772 = vunpack.c.h.b16 %v627
        %v773 = vunpack.c.l.b16 %v628
        %v774 = vunpack.c.l.b16 %v629
        %v775 = vunpack.c.h.b16 %v629
        %v776 = vunpack.c.l.b16 %v630
        %v777 = vunpack.c.h.b16 %v630
        %v778 = vunpack.c.l.b16 %v631
        %v779 = vunpack.c.l.b16 %v632
        %v780 = vunpack.c.h.b16 %v632
        %v781 = vunpack.c.l.b16 %v633
        %v782 = vunpack.c.h.b16 %v633
        %v783 = vunpack.c.l.b16 %v634
        %v784 = vunpack.c.l.b16 %v635
        %v785 = vunpack.c.h.b16 %v635
        %v786 = vunpack.c.l.b16 %v636
        %v787 = vunpack.c.h.b16 %v636
        %v788 = vunpack.c.l.b16 %v637
        %v789 = vunpack.c.l.b16 %v638
        %v790 = vunpack.c.h.b16 %v638
        %v791 = vunpack.c.l.b16 %v639
        %v792 = vunpack.c.h.b16 %v639
        %v793 = vunpack.c.l.b16 %v640
        %v794 = vunpack.c.l.b16 %v641
        %v795 = vunpack.c.h.b16 %v641
        %v796 = vunpack.c.l.b16 %v642
        %v797 = vunpack.c.h.b16 %v642
        %v798 = vunpack.c.l.b16 %v643
        %v799 = vpack.c.b16 %v724, %v719
        %v800 = vpack.c.b16 %v725, %v720
        %v801 = vpack.c.b16 %v726, %v721
        %v802 = vpack.c.b16 %v727, %v722
        %v803 = vpack.c.b16 %v728, %v723
        %v804 = vpack.c.b16 %v734, %v729
        %v805 = vpack.c.b16 %v735, %v730
        %v806 = vpack.c.b16 %v736, %v731
        %v807 = vpack.c.b16 %v737, %v732
        %v808 = vpack.c.b16 %v738, %v733
        %v809 = vpack.c.b16 %v744, %v739
        %v810 = vpack.c.b16 %v745, %v740
        %v811 = vpack.c.b16 %v746, %v741
        %v812 = vpack.c.b16 %v747, %v742
        %v813 = vpack.c.b16 %v748, %v743
        %v814 = vpack.c.b16 %v754, %v749
        %v815 = vpack.c.b16 %v755, %v750
        %v816 = vpack.c.b16 %v756, %v751
        %v817 = vpack.c.b16 %v757, %v752
        %v818 = vpack.c.b16 %v758, %v753
        %v819 = vpack.c.b16 %v764, %v759
        %v820 = vpack.c.b16 %v765, %v760
        %v821 = vpack.c.b16 %v766, %v761
        %v822 = vpack.c.b16 %v767, %v762
        %v823 = vpack.c.b16 %v768, %v763
        %v824 = vpack.c.b16 %v774, %v769
        %v825 = vpack.c.b16 %v775, %v770
        %v826 = vpack.c.b16 %v776, %v771
        %v827 = vpack.c.b16 %v777, %v772
        %v828 = vpack.c.b16 %v778, %v773
        %v829 = vpack.c.b16 %v784, %v779
        %v830 = vpack.c.b16 %v785, %v780
        %v831 = vpack.c.b16 %v786, %v781
        %v832 = vpack.c.b16 %v787, %v782
        %v833 = vpack.c.b16 %v788, %v783
        %v834 = vpack.c.b16 %v794, %v789
        %v835 = vpack.c.b16 %v795, %v790
        %v836 = vpack.c.b16 %v796, %v791
        %v837 = vpack.c.b16 %v797, %v792
        %v838 = vpack.c.b16 %v798, %v793
        %879 = vmatprep.subr.bf16.mxu0 %v835
        %880 = vmatpush1.bf16.msra.mxu0 %v834
        %881 = vmatprep.subr.bf16.mxu0 %v830
        %882 = vmatpush1.bf16.msra.mxu0 %v829
        %883 = vmatprep.subr.bf16.mxu0 %v825
        %884 = vmatpush1.bf16.msra.mxu0 %v824
        %885 = vmatprep.subr.bf16.mxu0 %v820
        %886 = vmatpush1.bf16.msra.mxu0 %v819
        %887 = vmatprep.subr.bf16.mxu0 %v815
        %888 = vmatpush1.bf16.msra.mxu0 %v814
        %889 = vmatprep.subr.bf16.mxu0 %v810
        %890 = vmatpush1.bf16.msra.mxu0 %v809
        %891 = vmatprep.subr.bf16.mxu0 %v805
        %892 = vmatpush1.bf16.msra.mxu0 %v804
        %893 = vmatprep.subr.bf16.mxu0 %v800
        %894 = vmatpush1.bf16.msra.mxu0 %v799
        %895 = vmatprep.subr.bf16.mxu0 0
        %896 = vmatpush2.bf16.msra.mxu0 0
        %897 = vmatprep.subr.bf16.mxu0 0
        %898 = vmatpush2.bf16.msra.mxu0 0
        %899 = vmatprep.subr.bf16.mxu0 0
        %900 = vmatpush2.bf16.msra.mxu0 0
        %901 = vmatprep.subr.bf16.mxu0 0
        %902 = vmatpush2.bf16.msra.mxu0 0
        %903 = vmatprep.subr.bf16.mxu0 0
        %904 = vmatpush2.bf16.msra.mxu0 0
        %905 = vmatprep.subr.bf16.mxu0 0
        %906 = vmatpush2.bf16.msra.mxu0 0
        %907 = vmatprep.subr.bf16.mxu0 0
        %908 = vmatpush2.bf16.msra.mxu0 0
        %909 = vmatprep.subr.bf16.mxu0 0
        %910 = vmatpush2.bf16.msra.mxu0 0
        %911 = vmatprep.mubr.bf16.mxu0 0
        %912 = vmatmul.mubr.bf16.gmra.mxu0 %v586
        %v913 = vpop.f32.mrf.mxu0
        %v914 = vadd.f32 %v649, %v913
        %v915 = vpop.f32.mrf.mxu0
        %v916 = vadd.f32 %v653, %v915
        %v917 = vpop.f32.mrf.mxu0
        %v918 = vadd.f32 %v649, %v917
        %v919 = vpop.f32.mrf.mxu0
        %v920 = vadd.f32 %v653, %v919
        %921 = vmatprep.mubr.bf16.mxu0 0
        %922 = vmatmul.mubr.bf16.gmra.mxu0 %v587
        %v923 = vpop.f32.mrf.mxu0
        %v924 = vadd.f32 %v649, %v923
        %v925 = vpop.f32.mrf.mxu0
        %v926 = vadd.f32 %v653, %v925
        %v927 = vpop.f32.mrf.mxu0
        %v928 = vadd.f32 %v649, %v927
        %v929 = vpop.f32.mrf.mxu0
        %v930 = vadd.f32 %v653, %v929
        %931 = vmatprep.mubr.bf16.mxu0 0
        %932 = vmatmul.mubr.bf16.gmra.mxu0 %v588
        %v933 = vpop.f32.mrf.mxu0
        %v934 = vadd.f32 %v649, %v933
        %v935 = vpop.f32.mrf.mxu0
        %v936 = vadd.f32 %v653, %v935
        %v937 = vpop.f32.mrf.mxu0
        %v938 = vadd.f32 %v649, %v937
        %v939 = vpop.f32.mrf.mxu0
        %v940 = vadd.f32 %v653, %v939
        %941 = vmatprep.mubr.bf16.mxu0 0
        %942 = vmatmul.mubr.bf16.gmra.mxu0 %v589
        %v943 = vpop.f32.mrf.mxu0
        %v944 = vadd.f32 %v649, %v943
        %v945 = vpop.f32.mrf.mxu0
        %v946 = vadd.f32 %v653, %v945
        %v947 = vpop.f32.mrf.mxu0
        %v948 = vadd.f32 %v649, %v947
        %v949 = vpop.f32.mrf.mxu0
        %v950 = vadd.f32 %v653, %v949
        %951 = vmatprep.mubr.bf16.mxu0 0
        %952 = vmatmul.mubr.bf16.gmra.mxu0 %v590
        %v953 = vpop.f32.mrf.mxu0
        %v954 = vadd.f32 %v649, %v953
        %v955 = vpop.f32.mrf.mxu0
        %v956 = vadd.f32 %v653, %v955
        %v957 = vpop.f32.mrf.mxu0
        %v958 = vadd.f32 %v649, %v957
        %v959 = vpop.f32.mrf.mxu0
        %v960 = vadd.f32 %v653, %v959
        %961 = vmatprep.mubr.bf16.mxu0 0
        %962 = vmatmul.mubr.bf16.gmra.mxu0 %v591
        %v963 = vpop.f32.mrf.mxu0
        %v964 = vadd.f32 %v649, %v963
        %v965 = vpop.f32.mrf.mxu0
        %v966 = vadd.f32 %v653, %v965
        %v967 = vpop.f32.mrf.mxu0
        %v968 = vadd.f32 %v649, %v967
        %v969 = vpop.f32.mrf.mxu0
        %v970 = vadd.f32 %v653, %v969
        %971 = vmatprep.mubr.bf16.mxu0 0
        %972 = vmatmul.mubr.bf16.gmra.mxu0 %v592
        %v973 = vpop.f32.mrf.mxu0
        %v974 = vadd.f32 %v649, %v973
        %v975 = vpop.f32.mrf.mxu0
        %v976 = vadd.f32 %v653, %v975
        %v977 = vpop.f32.mrf.mxu0
        %v978 = vadd.f32 %v649, %v977
        %v979 = vpop.f32.mrf.mxu0
        %v980 = vadd.f32 %v653, %v979
        %981 = vmatprep.mubr.bf16.mxu0 0
        %982 = vmatmul.mubr.bf16.gmra.mxu0 %v593
        %v983 = vpop.f32.mrf.mxu0
        %v984 = vadd.f32 %v649, %v983
        %v985 = vpop.f32.mrf.mxu0
        %v986 = vadd.f32 %v653, %v985
        %v987 = vpop.f32.mrf.mxu0
        %v988 = vadd.f32 %v649, %v987
        %v989 = vpop.f32.mrf.mxu0
        %v990 = vadd.f32 %v653, %v989
        %991 = vmatprep.mubr.bf16.mxu0 0
        %992 = vmatmul.mubr.bf16.gmra.mxu0 %v594
        %v993 = vpop.f32.mrf.mxu0
        %v994 = vadd.f32 %v649, %v993
        %v995 = vpop.f32.mrf.mxu0
        %v996 = vadd.f32 %v653, %v995
        %v997 = vpop.f32.mrf.mxu0
        %v998 = vadd.f32 %v649, %v997
        %v999 = vpop.f32.mrf.mxu0
        %v1000 = vadd.f32 %v653, %v999
        %1001 = vmatprep.mubr.bf16.mxu0 0
        %1002 = vmatmul.mubr.bf16.gmra.mxu0 %v595
        %v1003 = vpop.f32.mrf.mxu0
        %v1004 = vadd.f32 %v649, %v1003
        %v1005 = vpop.f32.mrf.mxu0
        %v1006 = vadd.f32 %v653, %v1005
        %v1007 = vpop.f32.mrf.mxu0
        %v1008 = vpop.f32.mrf.mxu0
        %1009 = vdwg.mxu0
        %1010 = vmatprep.subr.bf16.mxu0 %v837
        %1011 = vmatpush1.bf16.msra.mxu0 %v836
        %1012 = vmatprep.subr.bf16.mxu0 %v832
        %1013 = vmatpush1.bf16.msra.mxu0 %v831
        %1014 = vmatprep.subr.bf16.mxu0 %v827
        %1015 = vmatpush1.bf16.msra.mxu0 %v826
        %1016 = vmatprep.subr.bf16.mxu0 %v822
        %1017 = vmatpush1.bf16.msra.mxu0 %v821
        %1018 = vmatprep.subr.bf16.mxu0 %v817
        %1019 = vmatpush1.bf16.msra.mxu0 %v816
        %1020 = vmatprep.subr.bf16.mxu0 %v812
        %1021 = vmatpush1.bf16.msra.mxu0 %v811
        %1022 = vmatprep.subr.bf16.mxu0 %v807
        %1023 = vmatpush1.bf16.msra.mxu0 %v806
        %1024 = vmatprep.subr.bf16.mxu0 %v802
        %1025 = vmatpush1.bf16.msra.mxu0 %v801
        %1026 = vmatprep.subr.bf16.mxu0 0
        %1027 = vmatpush2.bf16.msra.mxu0 0
        %1028 = vmatprep.subr.bf16.mxu0 0
        %1029 = vmatpush2.bf16.msra.mxu0 0
        %1030 = vmatprep.subr.bf16.mxu0 0
        %1031 = vmatpush2.bf16.msra.mxu0 0
        %1032 = vmatprep.subr.bf16.mxu0 0
        %1033 = vmatpush2.bf16.msra.mxu0 0
        %1034 = vmatprep.subr.bf16.mxu0 0
        %1035 = vmatpush2.bf16.msra.mxu0 0
        %1036 = vmatprep.subr.bf16.mxu0 0
        %1037 = vmatpush2.bf16.msra.mxu0 0
        %1038 = vmatprep.subr.bf16.mxu0 0
        %1039 = vmatpush2.bf16.msra.mxu0 0
        %1040 = vmatprep.subr.bf16.mxu0 0
        %1041 = vmatpush2.bf16.msra.mxu0 0
        %1042 = vmatprep.mubr.bf16.mxu0 0
        %1043 = vmatmul.mubr.bf16.gmra.mxu0 %v586
        %v1044 = vpop.f32.mrf.mxu0
        %v1045 = vadd.f32 %v657, %v1044
        %v1046 = vpop.f32.mrf.mxu0
        %v1047 = vadd.f32 %v661, %v1046
        %v1048 = vpop.f32.mrf.mxu0
        %v1049 = vadd.f32 %v657, %v1048
        %v1050 = vpop.f32.mrf.mxu0
        %v1051 = vadd.f32 %v661, %v1050
        %1052 = vmatprep.mubr.bf16.mxu0 0
        %1053 = vmatmul.mubr.bf16.gmra.mxu0 %v587
        %v1054 = vpop.f32.mrf.mxu0
        %v1055 = vadd.f32 %v657, %v1054
        %v1056 = vpop.f32.mrf.mxu0
        %v1057 = vadd.f32 %v661, %v1056
        %v1058 = vpop.f32.mrf.mxu0
        %v1059 = vadd.f32 %v657, %v1058
        %v1060 = vpop.f32.mrf.mxu0
        %v1061 = vadd.f32 %v661, %v1060
        %1062 = vmatprep.mubr.bf16.mxu0 0
        %1063 = vmatmul.mubr.bf16.gmra.mxu0 %v588
        %v1064 = vpop.f32.mrf.mxu0
        %v1065 = vadd.f32 %v657, %v1064
        %v1066 = vpop.f32.mrf.mxu0
        %v1067 = vadd.f32 %v661, %v1066
        %v1068 = vpop.f32.mrf.mxu0
        %v1069 = vadd.f32 %v657, %v1068
        %v1070 = vpop.f32.mrf.mxu0
        %v1071 = vadd.f32 %v661, %v1070
        %1072 = vmatprep.mubr.bf16.mxu0 0
        %1073 = vmatmul.mubr.bf16.gmra.mxu0 %v589
        %v1074 = vpop.f32.mrf.mxu0
        %v1075 = vadd.f32 %v657, %v1074
        %v1076 = vpop.f32.mrf.mxu0
        %v1077 = vadd.f32 %v661, %v1076
        %v1078 = vpop.f32.mrf.mxu0
        %v1079 = vadd.f32 %v657, %v1078
        %v1080 = vpop.f32.mrf.mxu0
        %v1081 = vadd.f32 %v661, %v1080
        %1082 = vmatprep.mubr.bf16.mxu0 0
        %1083 = vmatmul.mubr.bf16.gmra.mxu0 %v590
        %v1084 = vpop.f32.mrf.mxu0
        %v1085 = vadd.f32 %v657, %v1084
        %v1086 = vpop.f32.mrf.mxu0
        %v1087 = vadd.f32 %v661, %v1086
        %v1088 = vpop.f32.mrf.mxu0
        %v1089 = vadd.f32 %v657, %v1088
        %v1090 = vpop.f32.mrf.mxu0
        %v1091 = vadd.f32 %v661, %v1090
        %1092 = vmatprep.mubr.bf16.mxu0 0
        %1093 = vmatmul.mubr.bf16.gmra.mxu0 %v591
        %v1094 = vpop.f32.mrf.mxu0
        %v1095 = vadd.f32 %v657, %v1094
        %v1096 = vpop.f32.mrf.mxu0
        %v1097 = vadd.f32 %v661, %v1096
        %v1098 = vpop.f32.mrf.mxu0
        %v1099 = vadd.f32 %v657, %v1098
        %v1100 = vpop.f32.mrf.mxu0
        %v1101 = vadd.f32 %v661, %v1100
        %1102 = vmatprep.mubr.bf16.mxu0 0
        %1103 = vmatmul.mubr.bf16.gmra.mxu0 %v592
        %v1104 = vpop.f32.mrf.mxu0
        %v1105 = vadd.f32 %v657, %v1104
        %v1106 = vpop.f32.mrf.mxu0
        %v1107 = vadd.f32 %v661, %v1106
        %v1108 = vpop.f32.mrf.mxu0
        %v1109 = vadd.f32 %v657, %v1108
        %v1110 = vpop.f32.mrf.mxu0
        %v1111 = vadd.f32 %v661, %v1110
        %1112 = vmatprep.mubr.bf16.mxu0 0
        %1113 = vmatmul.mubr.bf16.gmra.mxu0 %v593
        %v1114 = vpop.f32.mrf.mxu0
        %v1115 = vadd.f32 %v657, %v1114
        %v1116 = vpop.f32.mrf.mxu0
        %v1117 = vadd.f32 %v661, %v1116
        %v1118 = vpop.f32.mrf.mxu0
        %v1119 = vadd.f32 %v657, %v1118
        %v1120 = vpop.f32.mrf.mxu0
        %v1121 = vadd.f32 %v661, %v1120
        %1122 = vmatprep.mubr.bf16.mxu0 0
        %1123 = vmatmul.mubr.bf16.gmra.mxu0 %v594
        %v1124 = vpop.f32.mrf.mxu0
        %v1125 = vadd.f32 %v657, %v1124
        %v1126 = vpop.f32.mrf.mxu0
        %v1127 = vadd.f32 %v661, %v1126
        %v1128 = vpop.f32.mrf.mxu0
        %v1129 = vadd.f32 %v657, %v1128
        %v1130 = vpop.f32.mrf.mxu0
        %v1131 = vadd.f32 %v661, %v1130
        %1132 = vmatprep.mubr.bf16.mxu0 0
        %1133 = vmatmul.mubr.bf16.gmra.mxu0 %v595
        %v1134 = vpop.f32.mrf.mxu0
        %v1135 = vadd.f32 %v657, %v1134
        %v1136 = vpop.f32.mrf.mxu0
        %v1137 = vadd.f32 %v661, %v1136
        %v1138 = vpop.f32.mrf.mxu0
        %v1139 = vpop.f32.mrf.mxu0
        %1140 = vdwg.mxu0
        %1141 = vmatprep.subr.bf16.mxu0 0
        %1142 = vmatpush1.bf16.msra.mxu0 %v838
        %1143 = vmatprep.subr.bf16.mxu0 0
        %1144 = vmatpush1.bf16.msra.mxu0 %v833
        %1145 = vmatprep.subr.bf16.mxu0 0
        %1146 = vmatpush1.bf16.msra.mxu0 %v828
        %1147 = vmatprep.subr.bf16.mxu0 0
        %1148 = vmatpush1.bf16.msra.mxu0 %v823
        %1149 = vmatprep.subr.bf16.mxu0 0
        %1150 = vmatpush1.bf16.msra.mxu0 %v818
        %1151 = vmatprep.subr.bf16.mxu0 0
        %1152 = vmatpush1.bf16.msra.mxu0 %v813
        %1153 = vmatprep.subr.bf16.mxu0 0
        %1154 = vmatpush1.bf16.msra.mxu0 %v808
        %1155 = vmatprep.subr.bf16.mxu0 0
        %1156 = vmatpush1.bf16.msra.mxu0 %v803
        %1157 = vmatprep.subr.bf16.mxu0 0
        %1158 = vmatpush2.bf16.msra.mxu0 0
        %1159 = vmatprep.subr.bf16.mxu0 0
        %1160 = vmatpush2.bf16.msra.mxu0 0
        %1161 = vmatprep.subr.bf16.mxu0 0
        %1162 = vmatpush2.bf16.msra.mxu0 0
        %1163 = vmatprep.subr.bf16.mxu0 0
        %1164 = vmatpush2.bf16.msra.mxu0 0
        %1165 = vmatprep.subr.bf16.mxu0 0
        %1166 = vmatpush2.bf16.msra.mxu0 0
        %1167 = vmatprep.subr.bf16.mxu0 0
        %1168 = vmatpush2.bf16.msra.mxu0 0
        %1169 = vmatprep.subr.bf16.mxu0 0
        %1170 = vmatpush2.bf16.msra.mxu0 0
        %1171 = vmatprep.subr.bf16.mxu0 0
        %1172 = vmatpush2.bf16.msra.mxu0 0
        %1173 = vmatprep.mubr.bf16.mxu0 0
        %1174 = vmatmul.mubr.bf16.gmra.mxu0 %v586
        %v1175 = vpop.f32.mrf.mxu0
        %v1176 = vadd.f32 %v665, %v1175
        %v1177 = vpop.f32.mrf.mxu0
        %v1178 = vpop.f32.mrf.mxu0
        %v1179 = vadd.f32 %v665, %v1178
        %v1180 = vpop.f32.mrf.mxu0
        %1181 = vmatprep.mubr.bf16.mxu0 0
        %1182 = vmatmul.mubr.bf16.gmra.mxu0 %v587
        %v1183 = vpop.f32.mrf.mxu0
        %v1184 = vadd.f32 %v665, %v1183
        %v1185 = vpop.f32.mrf.mxu0
        %v1186 = vpop.f32.mrf.mxu0
        %v1187 = vadd.f32 %v665, %v1186
        %v1188 = vpop.f32.mrf.mxu0
        %1189 = vmatprep.mubr.bf16.mxu0 0
        %1190 = vmatmul.mubr.bf16.gmra.mxu0 %v588
        %v1191 = vpop.f32.mrf.mxu0
        %v1192 = vadd.f32 %v665, %v1191
        %v1193 = vpop.f32.mrf.mxu0
        %v1194 = vpop.f32.mrf.mxu0
        %v1195 = vadd.f32 %v665, %v1194
        %v1196 = vpop.f32.mrf.mxu0
        %1197 = vmatprep.mubr.bf16.mxu0 0
        %1198 = vmatmul.mubr.bf16.gmra.mxu0 %v589
        %v1199 = vpop.f32.mrf.mxu0
        %v1200 = vadd.f32 %v665, %v1199
        %v1201 = vpop.f32.mrf.mxu0
        %v1202 = vpop.f32.mrf.mxu0
        %v1203 = vadd.f32 %v665, %v1202
        %v1204 = vpop.f32.mrf.mxu0
        %1205 = vmatprep.mubr.bf16.mxu0 0
        %1206 = vmatmul.mubr.bf16.gmra.mxu0 %v590
        %v1207 = vpop.f32.mrf.mxu0
        %v1208 = vadd.f32 %v665, %v1207
        %v1209 = vpop.f32.mrf.mxu0
        %v1210 = vpop.f32.mrf.mxu0
        %v1211 = vadd.f32 %v665, %v1210
        %v1212 = vpop.f32.mrf.mxu0
        %1213 = vmatprep.mubr.bf16.mxu0 0
        %1214 = vmatmul.mubr.bf16.gmra.mxu0 %v591
        %v1215 = vpop.f32.mrf.mxu0
        %v1216 = vadd.f32 %v665, %v1215
        %v1217 = vpop.f32.mrf.mxu0
        %v1218 = vpop.f32.mrf.mxu0
        %v1219 = vadd.f32 %v665, %v1218
        %v1220 = vpop.f32.mrf.mxu0
        %1221 = vmatprep.mubr.bf16.mxu0 0
        %1222 = vmatmul.mubr.bf16.gmra.mxu0 %v592
        %v1223 = vpop.f32.mrf.mxu0
        %v1224 = vadd.f32 %v665, %v1223
        %v1225 = vpop.f32.mrf.mxu0
        %v1226 = vpop.f32.mrf.mxu0
        %v1227 = vadd.f32 %v665, %v1226
        %v1228 = vpop.f32.mrf.mxu0
        %1229 = vmatprep.mubr.bf16.mxu0 0
        %1230 = vmatmul.mubr.bf16.gmra.mxu0 %v593
        %v1231 = vpop.f32.mrf.mxu0
        %v1232 = vadd.f32 %v665, %v1231
        %v1233 = vpop.f32.mrf.mxu0
        %v1234 = vpop.f32.mrf.mxu0
        %v1235 = vadd.f32 %v665, %v1234
        %v1236 = vpop.f32.mrf.mxu0
        %1237 = vmatprep.mubr.bf16.mxu0 0
        %1238 = vmatmul.mubr.bf16.gmra.mxu0 %v594
        %v1239 = vpop.f32.mrf.mxu0
        %v1240 = vadd.f32 %v665, %v1239
        %v1241 = vpop.f32.mrf.mxu0
        %v1242 = vpop.f32.mrf.mxu0
        %v1243 = vadd.f32 %v665, %v1242
        %v1244 = vpop.f32.mrf.mxu0
        %1245 = vmatprep.mubr.bf16.mxu0 0
        %1246 = vmatmul.mubr.bf16.gmra.mxu0 %v595
        %v1247 = vpop.f32.mrf.mxu0
        %v1248 = vadd.f32 %v665, %v1247
        %v1249 = vpop.f32.mrf.mxu0
        %v1250 = vpop.f32.mrf.mxu0
        %v1251 = vpop.f32.mrf.mxu0
        %1252 = vdwg.mxu0
        %v1253 = vmax.f32 %v914, 0.0
        %v1254 = vmax.f32 %v916, 0.0
        %v1255 = vmax.f32 %v1045, 0.0
        %v1256 = vmax.f32 %v1047, 0.0
        %v1257 = vmax.f32 %v1176, 0.0
        %v1258 = vmax.f32 %v918, 0.0
        %v1259 = vmax.f32 %v920, 0.0
        %v1260 = vmax.f32 %v1049, 0.0
        %v1261 = vmax.f32 %v1051, 0.0
        %v1262 = vmax.f32 %v1179, 0.0
        %v1263 = vmax.f32 %v924, 0.0
        %v1264 = vmax.f32 %v926, 0.0
        %v1265 = vmax.f32 %v1055, 0.0
        %v1266 = vmax.f32 %v1057, 0.0
        %v1267 = vmax.f32 %v1184, 0.0
        %v1268 = vmax.f32 %v928, 0.0
        %v1269 = vmax.f32 %v930, 0.0
        %v1270 = vmax.f32 %v1059, 0.0
        %v1271 = vmax.f32 %v1061, 0.0
        %v1272 = vmax.f32 %v1187, 0.0
        %v1273 = vmax.f32 %v934, 0.0
        %v1274 = vmax.f32 %v936, 0.0
        %v1275 = vmax.f32 %v1065, 0.0
        %v1276 = vmax.f32 %v1067, 0.0
        %v1277 = vmax.f32 %v1192, 0.0
        %v1278 = vmax.f32 %v938, 0.0
        %v1279 = vmax.f32 %v940, 0.0
        %v1280 = vmax.f32 %v1069, 0.0
        %v1281 = vmax.f32 %v1071, 0.0
        %v1282 = vmax.f32 %v1195, 0.0
        %v1283 = vmax.f32 %v944, 0.0
        %v1284 = vmax.f32 %v946, 0.0
        %v1285 = vmax.f32 %v1075, 0.0
        %v1286 = vmax.f32 %v1077, 0.0
        %v1287 = vmax.f32 %v1200, 0.0
        %v1288 = vmax.f32 %v948, 0.0
        %v1289 = vmax.f32 %v950, 0.0
        %v1290 = vmax.f32 %v1079, 0.0
        %v1291 = vmax.f32 %v1081, 0.0
        %v1292 = vmax.f32 %v1203, 0.0
        %v1293 = vmax.f32 %v954, 0.0
        %v1294 = vmax.f32 %v956, 0.0
        %v1295 = vmax.f32 %v1085, 0.0
        %v1296 = vmax.f32 %v1087, 0.0
        %v1297 = vmax.f32 %v1208, 0.0
        %v1298 = vmax.f32 %v958, 0.0
        %v1299 = vmax.f32 %v960, 0.0
        %v1300 = vmax.f32 %v1089, 0.0
        %v1301 = vmax.f32 %v1091, 0.0
        %v1302 = vmax.f32 %v1211, 0.0
        %v1303 = vmax.f32 %v964, 0.0
        %v1304 = vmax.f32 %v966, 0.0
        %v1305 = vmax.f32 %v1095, 0.0
        %v1306 = vmax.f32 %v1097, 0.0
        %v1307 = vmax.f32 %v1216, 0.0
        %v1308 = vmax.f32 %v968, 0.0
        %v1309 = vmax.f32 %v970, 0.0
        %v1310 = vmax.f32 %v1099, 0.0
        %v1311 = vmax.f32 %v1101, 0.0
        %v1312 = vmax.f32 %v1219, 0.0
        %v1313 = vmax.f32 %v974, 0.0
        %v1314 = vmax.f32 %v976, 0.0
        %v1315 = vmax.f32 %v1105, 0.0
        %v1316 = vmax.f32 %v1107, 0.0
        %v1317 = vmax.f32 %v1224, 0.0
        %v1318 = vmax.f32 %v978, 0.0
        %v1319 = vmax.f32 %v980, 0.0
        %v1320 = vmax.f32 %v1109, 0.0
        %v1321 = vmax.f32 %v1111, 0.0
        %v1322 = vmax.f32 %v1227, 0.0
        %v1323 = vmax.f32 %v984, 0.0
        %v1324 = vmax.f32 %v986, 0.0
        %v1325 = vmax.f32 %v1115, 0.0
        %v1326 = vmax.f32 %v1117, 0.0
        %v1327 = vmax.f32 %v1232, 0.0
        %v1328 = vmax.f32 %v988, 0.0
        %v1329 = vmax.f32 %v990, 0.0
        %v1330 = vmax.f32 %v1119, 0.0
        %v1331 = vmax.f32 %v1121, 0.0
        %v1332 = vmax.f32 %v1235, 0.0
        %v1333 = vmax.f32 %v994, 0.0
        %v1334 = vmax.f32 %v996, 0.0
        %v1335 = vmax.f32 %v1125, 0.0
        %v1336 = vmax.f32 %v1127, 0.0
        %v1337 = vmax.f32 %v1240, 0.0
        %v1338 = vmax.f32 %v998, 0.0
        %v1339 = vmax.f32 %v1000, 0.0
        %v1340 = vmax.f32 %v1129, 0.0
        %v1341 = vmax.f32 %v1131, 0.0
        %v1342 = vmax.f32 %v1243, 0.0
        %v1343 = vmax.f32 %v1004, 0.0
        %v1344 = vmax.f32 %v1006, 0.0
        %v1345 = vmax.f32 %v1135, 0.0
        %v1346 = vmax.f32 %v1137, 0.0
        %v1347 = vmax.f32 %v1248, 0.0
        %v1348 = vpack.c.bf16 %v1258, %v1253
        %v1349 = vpack.c.bf16 %v1259, %v1254
        %v1350 = vpack.c.bf16 %v1260, %v1255
        %v1351 = vpack.c.bf16 %v1261, %v1256
        %v1352 = vpack.c.bf16 %v1262, %v1257
        %v1353 = vpack.c.bf16 %v1268, %v1263
        %v1354 = vpack.c.bf16 %v1269, %v1264
        %v1355 = vpack.c.bf16 %v1270, %v1265
        %v1356 = vpack.c.bf16 %v1271, %v1266
        %v1357 = vpack.c.bf16 %v1272, %v1267
        %v1358 = vpack.c.bf16 %v1278, %v1273
        %v1359 = vpack.c.bf16 %v1279, %v1274
        %v1360 = vpack.c.bf16 %v1280, %v1275
        %v1361 = vpack.c.bf16 %v1281, %v1276
        %v1362 = vpack.c.bf16 %v1282, %v1277
        %v1363 = vpack.c.bf16 %v1288, %v1283
        %v1364 = vpack.c.bf16 %v1289, %v1284
        %v1365 = vpack.c.bf16 %v1290, %v1285
        %v1366 = vpack.c.bf16 %v1291, %v1286
        %v1367 = vpack.c.bf16 %v1292, %v1287
        %v1368 = vpack.c.bf16 %v1298, %v1293
        %v1369 = vpack.c.bf16 %v1299, %v1294
        %v1370 = vpack.c.bf16 %v1300, %v1295
        %v1371 = vpack.c.bf16 %v1301, %v1296
        %v1372 = vpack.c.bf16 %v1302, %v1297
        %v1373 = vpack.c.bf16 %v1308, %v1303
        %v1374 = vpack.c.bf16 %v1309, %v1304
        %v1375 = vpack.c.bf16 %v1310, %v1305
        %v1376 = vpack.c.bf16 %v1311, %v1306
        %v1377 = vpack.c.bf16 %v1312, %v1307
        %v1378 = vpack.c.bf16 %v1318, %v1313
        %v1379 = vpack.c.bf16 %v1319, %v1314
        %v1380 = vpack.c.bf16 %v1320, %v1315
        %v1381 = vpack.c.bf16 %v1321, %v1316
        %v1382 = vpack.c.bf16 %v1322, %v1317
        %v1383 = vpack.c.bf16 %v1328, %v1323
        %v1384 = vpack.c.bf16 %v1329, %v1324
        %v1385 = vpack.c.bf16 %v1330, %v1325
        %v1386 = vpack.c.bf16 %v1331, %v1326
        %v1387 = vpack.c.bf16 %v1332, %v1327
        %v1388 = vpack.c.bf16 %v1338, %v1333
        %v1389 = vpack.c.bf16 %v1339, %v1334
        %v1390 = vpack.c.bf16 %v1340, %v1335
        %v1391 = vpack.c.bf16 %v1341, %v1336
        %v1392 = vpack.c.bf16 %v1342, %v1337
        %v1393 = vpack.c.bf16 %v1343, %v1343
        %v1394 = vpack.c.bf16 %v1344, %v1344
        %v1395 = vpack.c.bf16 %v1345, %v1345
        %v1396 = vpack.c.bf16 %v1346, %v1346
        %v1397 = vpack.c.bf16 %v1347, %v1347
        %v1398 = vld [vmem:[#allocation8] sm:$0xff]
        %v1399 = vld [vmem:[#allocation8 + $0x8] sm:$0xff]
        %v1400 = vld [vmem:[#allocation8 + $0x10] sm:$0xff]
        %v1401 = vld [vmem:[#allocation8 + $0x18] sm:$0xff]
        %v1402 = vld [vmem:[#allocation8 + $0x20] sm:$0xff]
        %v1403 = vld [vmem:[#allocation8 + $0x28] sm:$0xff]
        %v1404 = vld [vmem:[#allocation8 + $0x30] sm:$0xff]
        %v1405 = vld [vmem:[#allocation8 + $0x38] sm:$0xff]
        %v1406 = vld [vmem:[#allocation8 + $0x40] sm:$0xff]
        %v1407 = vld [vmem:[#allocation8 + $0x48] sm:$0xff]
        %v1408 = vld [vmem:[#allocation8 + $0x50] sm:$0xff]
        %v1409 = vld [vmem:[#allocation8 + $0x58] sm:$0xff]
        %v1410 = vld [vmem:[#allocation8 + $0x60] sm:$0xff]
        %v1411 = vld [vmem:[#allocation8 + $0x68] sm:$0xff]
        %v1412 = vld [vmem:[#allocation8 + $0x70] sm:$0xff]
        %v1413 = vld [vmem:[#allocation8 + $0x78] sm:$0xff]
        %v1414 = vld [vmem:[#allocation8 + $0x80] sm:$0xff]
        %v1415 = vld [vmem:[#allocation8 + $0x88] sm:$0xff]
        %v1416 = vld [vmem:[#allocation8 + $0x90] sm:$0xff]
        %v1417 = vld [vmem:[#allocation8 + $0x98] sm:$0xff]
        %v1418 = vld [vmem:[#allocation8 + $0xa0] sm:$0xff]
        %v1419 = vld [vmem:[#allocation8 + $0xa8] sm:$0xff]
        %v1420 = vld [vmem:[#allocation8 + $0xb0] sm:$0xff]
        %v1421 = vld [vmem:[#allocation8 + $0xb8] sm:$0xff]
        %v1422 = vld [vmem:[#allocation8 + $0xc0] sm:$0xff]
        %v1423 = vld [vmem:[#allocation8 + $0xc8] sm:$0xff]
        %v1424 = vld [vmem:[#allocation8 + $0xd0] sm:$0xff]
        %v1425 = vld [vmem:[#allocation8 + $0xd8] sm:$0xff]
        %v1426 = vld [vmem:[#allocation8 + $0xe0] sm:$0xff]
        %v1427 = vld [vmem:[#allocation8 + $0xe8] sm:$0xff]
        %v1428 = vld [vmem:[#allocation8 + $0xf0] sm:$0xff]
        %v1429 = vld [vmem:[#allocation8 + $0xf8] sm:$0xff]
        %v1430 = vld [vmem:[#allocation8 + $0x100] sm:$0xff]
        %v1431 = vld [vmem:[#allocation8 + $0x108] sm:$0xff]
        %v1432 = vld [vmem:[#allocation8 + $0x110] sm:$0xff]
        %v1433 = vld [vmem:[#allocation8 + $0x118] sm:$0xff]
        %v1434 = vld [vmem:[#allocation8 + $0x120] sm:$0xff]
        %v1435 = vld [vmem:[#allocation8 + $0x128] sm:$0xff]
        %v1436 = vld [vmem:[#allocation8 + $0x130] sm:$0xff]
        %v1437 = vld [vmem:[#allocation8 + $0x138] sm:$0xff]
        %v1438 = vld [vmem:[#allocation8 + $0x140] sm:$0xff]
        %v1439 = vld [vmem:[#allocation8 + $0x148] sm:$0xff]
        %v1440 = vld [vmem:[#allocation8 + $0x150] sm:$0xff]
        %v1441 = vld [vmem:[#allocation8 + $0x158] sm:$0xff]
        %v1442 = vld [vmem:[#allocation8 + $0x160] sm:$0xff]
        %v1443 = vld [vmem:[#allocation8 + $0x168] sm:$0xff]
        %v1444 = vld [vmem:[#allocation8 + $0x170] sm:$0xff]
        %v1445 = vld [vmem:[#allocation8 + $0x178] sm:$0xff]
        %v1446 = vld [vmem:[#allocation8 + $0x180] sm:$0xff]
        %v1447 = vld [vmem:[#allocation8 + $0x188] sm:$0xff]
        %v1448 = vld [vmem:[#allocation8 + $0x190] sm:$0xff]
        %v1449 = vld [vmem:[#allocation8 + $0x198] sm:$0xff]
        %v1450 = vld [vmem:[#allocation8 + $0x1a0] sm:$0xff]
        %v1451 = vld [vmem:[#allocation8 + $0x1a8] sm:$0xff]
        %v1452 = vld [vmem:[#allocation8 + $0x1b0] sm:$0xff]
        %v1453 = vld [vmem:[#allocation8 + $0x1b8] sm:$0xff]
        %v1454 = vld [vmem:[#allocation8 + $0x1c0] sm:$0xff]
        %v1455 = vld [vmem:[#allocation8 + $0x1c8] sm:$0xff]
        %v1456 = vld [vmem:[#allocation8 + $0x1d0] sm:$0xff]
        %v1457 = vld [vmem:[#allocation8 + $0x1d8] sm:$0xff]
        %v1458 = vld [vmem:[#allocation8 + $0x1e0] sm:$0xff]
        %v1459 = vld [vmem:[#allocation8 + $0x1e8] sm:$0xff]
        %v1460 = vld [vmem:[#allocation8 + $0x1f0] sm:$0xff]
        %v1461 = vld [vmem:[#allocation8 + $0x1f8] sm:$0xff]
        %v1462 = vld [vmem:[#allocation8 + $0x200] sm:$0xff]
        %v1463 = vld [vmem:[#allocation8 + $0x208] sm:$0xff]
        %v1464 = vld [vmem:[#allocation8 + $0x210] sm:$0xff]
        %v1465 = vld [vmem:[#allocation8 + $0x218] sm:$0xff]
        %v1466 = vld [vmem:[#allocation8 + $0x220] sm:$0xff]
        %v1467 = vld [vmem:[#allocation8 + $0x228] sm:$0xff]
        %v1468 = vld [vmem:[#allocation8 + $0x230] sm:$0xff]
        %v1469 = vld [vmem:[#allocation8 + $0x238] sm:$0xff]
        %v1470 = vld [vmem:[#allocation8 + $0x240] sm:$0xff]
        %v1471 = vld [vmem:[#allocation8 + $0x248] sm:$0xff]
        %v1472 = vld [vmem:[#allocation8 + $0x250] sm:$0xff]
        %v1473 = vld [vmem:[#allocation8 + $0x258] sm:$0xff]
        %v1474 = vld [vmem:[#allocation8 + $0x260] sm:$0xff]
        %v1475 = vld [vmem:[#allocation8 + $0x268] sm:$0xff]
        %v1476 = vld [vmem:[#allocation8 + $0x270] sm:$0xff]
        %v1477 = vld [vmem:[#allocation8 + $0x278] sm:$0xff]
        %v1478 = vld [vmem:[#allocation8 + $0x280] sm:$0xff]
        %v1479 = vld [vmem:[#allocation8 + $0x288] sm:$0xff]
        %v1480 = vld [vmem:[#allocation8 + $0x290] sm:$0xff]
        %v1481 = vld [vmem:[#allocation8 + $0x298] sm:$0xff]
        %v1482 = vld [vmem:[#allocation8 + $0x2a0] sm:$0xff]
        %v1483 = vld [vmem:[#allocation8 + $0x2a8] sm:$0xff]
        %v1484 = vld [vmem:[#allocation8 + $0x2b0] sm:$0xff]
        %v1485 = vld [vmem:[#allocation8 + $0x2b8] sm:$0xff]
        %v1486 = vld [vmem:[#allocation8 + $0x2c0] sm:$0xff]
        %v1487 = vld [vmem:[#allocation8 + $0x2c8] sm:$0xff]
        %v1488 = vld [vmem:[#allocation8 + $0x2d0] sm:$0xff]
        %v1489 = vld [vmem:[#allocation8 + $0x2d8] sm:$0xff]
        %v1490 = vld [vmem:[#allocation8 + $0x2e0] sm:$0xff]
        %v1491 = vld [vmem:[#allocation8 + $0x2e8] sm:$0xff]
        %v1492 = vld [vmem:[#allocation8 + $0x2f0] sm:$0xff]
        %v1493 = vld [vmem:[#allocation8 + $0x2f8] sm:$0xff]
        %v1494 = vld [vmem:[#allocation8 + $0x300] sm:$0xff]
        %v1495 = vld [vmem:[#allocation8 + $0x308] sm:$0xff]
        %v1496 = vld [vmem:[#allocation8 + $0x310] sm:$0xff]
        %v1497 = vld [vmem:[#allocation8 + $0x318] sm:$0xff]
        %v1498 = vld [vmem:[#allocation8 + $0x320] sm:$0xff]
        %v1499 = vld [vmem:[#allocation8 + $0x328] sm:$0xff]
        %v1500 = vld [vmem:[#allocation8 + $0x330] sm:$0xff]
        %v1501 = vld [vmem:[#allocation8 + $0x338] sm:$0xff]
        %v1502 = vld [vmem:[#allocation8 + $0x340] sm:$0xff]
        %v1503 = vld [vmem:[#allocation8 + $0x348] sm:$0xff]
        %v1504 = vld [vmem:[#allocation8 + $0x350] sm:$0xff]
        %v1505 = vld [vmem:[#allocation8 + $0x358] sm:$0xff]
        %v1506 = vld [vmem:[#allocation8 + $0x360] sm:$0xff]
        %v1507 = vld [vmem:[#allocation8 + $0x368] sm:$0xff]
        %v1508 = vld [vmem:[#allocation8 + $0x370] sm:$0xff]
        %v1509 = vld [vmem:[#allocation8 + $0x378] sm:$0xff]
        %v1510 = vld [vmem:[#allocation8 + $0x380] sm:$0xff]
        %v1511 = vld [vmem:[#allocation8 + $0x388] sm:$0xff]
        %v1512 = vld [vmem:[#allocation8 + $0x390] sm:$0xff]
        %v1513 = vld [vmem:[#allocation8 + $0x398] sm:$0xff]
        %v1514 = vld [vmem:[#allocation8 + $0x3a0] sm:$0xff]
        %v1515 = vld [vmem:[#allocation8 + $0x3a8] sm:$0xff]
        %v1516 = vld [vmem:[#allocation8 + $0x3b0] sm:$0xff]
        %v1517 = vld [vmem:[#allocation8 + $0x3b8] sm:$0xff]
        %v1518 = vld [vmem:[#allocation8 + $0x3c0] sm:$0xff]
        %v1519 = vld [vmem:[#allocation8 + $0x3c8] sm:$0xff]
        %v1520 = vld [vmem:[#allocation8 + $0x3d0] sm:$0xff]
        %v1521 = vld [vmem:[#allocation8 + $0x3d8] sm:$0xff]
        %v1522 = vld [vmem:[#allocation8 + $0x3e0] sm:$0xff]
        %v1523 = vld [vmem:[#allocation8 + $0x3e8] sm:$0xff]
        %v1524 = vld [vmem:[#allocation8 + $0x3f0] sm:$0xff]
        %v1525 = vld [vmem:[#allocation8 + $0x3f8] sm:$0xff]
        %v1526 = vld [vmem:[#allocation8 + $0x400] sm:$0xff]
        %v1527 = vld [vmem:[#allocation8 + $0x408] sm:$0xff]
        %v1528 = vld [vmem:[#allocation8 + $0x410] sm:$0xff]
        %v1529 = vld [vmem:[#allocation8 + $0x418] sm:$0xff]
        %v1530 = vld [vmem:[#allocation8 + $0x420] sm:$0xff]
        %v1531 = vld [vmem:[#allocation8 + $0x428] sm:$0xff]
        %v1532 = vld [vmem:[#allocation8 + $0x430] sm:$0xff]
        %v1533 = vld [vmem:[#allocation8 + $0x438] sm:$0xff]
        %v1534 = vld [vmem:[#allocation8 + $0x440] sm:$0xff]
        %v1535 = vld [vmem:[#allocation8 + $0x448] sm:$0xff]
        %v1536 = vld [vmem:[#allocation8 + $0x450] sm:$0xff]
        %v1537 = vld [vmem:[#allocation8 + $0x458] sm:$0xff]
        %v1538 = vld [vmem:[#allocation8 + $0x460] sm:$0xff]
        %v1539 = vld [vmem:[#allocation8 + $0x468] sm:$0xff]
        %v1540 = vld [vmem:[#allocation8 + $0x470] sm:$0xff]
        %v1541 = vld [vmem:[#allocation8 + $0x478] sm:$0xff]
        %v1542 = vld [vmem:[#allocation8 + $0x480] sm:$0xff]
        %v1543 = vld [vmem:[#allocation8 + $0x488] sm:$0xff]
        %v1544 = vld [vmem:[#allocation8 + $0x490] sm:$0xff]
        %v1545 = vld [vmem:[#allocation8 + $0x498] sm:$0xff]
        %v1546 = vld [vmem:[#allocation8 + $0x4a0] sm:$0xff]
        %v1547 = vld [vmem:[#allocation8 + $0x4a8] sm:$0xff]
        %v1548 = vld [vmem:[#allocation8 + $0x4b0] sm:$0xff]
        %v1549 = vld [vmem:[#allocation8 + $0x4b8] sm:$0xff]
        %v1550 = vld [vmem:[#allocation8 + $0x4c0] sm:$0xff]
        %v1551 = vld [vmem:[#allocation8 + $0x4c8] sm:$0xff]
        %v1552 = vld [vmem:[#allocation8 + $0x4d0] sm:$0xff]
        %v1553 = vld [vmem:[#allocation8 + $0x4d8] sm:$0xff]
        %v1554 = vld [vmem:[#allocation8 + $0x4e0] sm:$0xff]
        %v1555 = vld [vmem:[#allocation8 + $0x4e8] sm:$0xff]
        %v1556 = vld [vmem:[#allocation8 + $0x4f0] sm:$0xff]
        %v1557 = vld [vmem:[#allocation8 + $0x4f8] sm:$0xff]
        %v1558 = vld [vmem:[#allocation10] sm:$0xf]
        %v1560 = vlaneseq
        %v1561 = vshrl.u32 %v1560, 7
        %v1562 = vsub.s32 0, %v1561
        %v1563 = vrot.slane %v1558, %v1562
        %v1564 = vlaneseq
        %v1565 = vshrl.u32 %v1564, 7
        %v1566 = vsub.s32 1, %v1565
        %v1567 = vrot.slane %v1558, %v1566
        %v1568 = vlaneseq
        %v1569 = vshrl.u32 %v1568, 7
        %v1570 = vsub.s32 2, %v1569
        %v1571 = vrot.slane %v1558, %v1570
        %v1572 = vlaneseq
        %v1573 = vshrl.u32 %v1572, 7
        %v1574 = vsub.s32 3, %v1573
        %v1575 = vrot.slane %v1558, %v1574
        %v1740 = vunpack.c.l.b16 %v1398
        %v1741 = vunpack.c.h.b16 %v1398
        %v1742 = vunpack.c.l.b16 %v1399
        %v1743 = vunpack.c.h.b16 %v1399
        %v1744 = vunpack.c.l.b16 %v1400
        %v1745 = vunpack.c.h.b16 %v1400
        %v1746 = vunpack.c.l.b16 %v1401
        %v1747 = vunpack.c.h.b16 %v1401
        %v1748 = vunpack.c.l.b16 %v1402
        %v1749 = vunpack.c.h.b16 %v1402
        %v1750 = vunpack.c.l.b16 %v1403
        %v1751 = vunpack.c.h.b16 %v1403
        %v1752 = vunpack.c.l.b16 %v1404
        %v1753 = vunpack.c.h.b16 %v1404
        %v1754 = vunpack.c.l.b16 %v1405
        %v1755 = vunpack.c.h.b16 %v1405
        %v1756 = vunpack.c.l.b16 %v1406
        %v1757 = vunpack.c.h.b16 %v1406
        %v1758 = vunpack.c.l.b16 %v1407
        %v1759 = vunpack.c.h.b16 %v1407
        %v1760 = vunpack.c.l.b16 %v1408
        %v1761 = vunpack.c.h.b16 %v1408
        %v1762 = vunpack.c.l.b16 %v1409
        %v1763 = vunpack.c.h.b16 %v1409
        %v1764 = vunpack.c.l.b16 %v1410
        %v1765 = vunpack.c.h.b16 %v1410
        %v1766 = vunpack.c.l.b16 %v1411
        %v1767 = vunpack.c.h.b16 %v1411
        %v1768 = vunpack.c.l.b16 %v1412
        %v1769 = vunpack.c.h.b16 %v1412
        %v1770 = vunpack.c.l.b16 %v1413
        %v1771 = vunpack.c.h.b16 %v1413
        %v1772 = vunpack.c.l.b16 %v1414
        %v1773 = vunpack.c.h.b16 %v1414
        %v1774 = vunpack.c.l.b16 %v1415
        %v1775 = vunpack.c.h.b16 %v1415
        %v1776 = vunpack.c.l.b16 %v1416
        %v1777 = vunpack.c.h.b16 %v1416
        %v1778 = vunpack.c.l.b16 %v1417
        %v1779 = vunpack.c.h.b16 %v1417
        %v1780 = vunpack.c.l.b16 %v1418
        %v1781 = vunpack.c.h.b16 %v1418
        %v1782 = vunpack.c.l.b16 %v1419
        %v1783 = vunpack.c.h.b16 %v1419
        %v1784 = vunpack.c.l.b16 %v1420
        %v1785 = vunpack.c.h.b16 %v1420
        %v1786 = vunpack.c.l.b16 %v1421
        %v1787 = vunpack.c.h.b16 %v1421
        %v1788 = vunpack.c.l.b16 %v1422
        %v1789 = vunpack.c.h.b16 %v1422
        %v1790 = vunpack.c.l.b16 %v1423
        %v1791 = vunpack.c.h.b16 %v1423
        %v1792 = vunpack.c.l.b16 %v1424
        %v1793 = vunpack.c.h.b16 %v1424
        %v1794 = vunpack.c.l.b16 %v1425
        %v1795 = vunpack.c.h.b16 %v1425
        %v1796 = vunpack.c.l.b16 %v1426
        %v1797 = vunpack.c.h.b16 %v1426
        %v1798 = vunpack.c.l.b16 %v1427
        %v1799 = vunpack.c.h.b16 %v1427
        %v1800 = vunpack.c.l.b16 %v1428
        %v1801 = vunpack.c.h.b16 %v1428
        %v1802 = vunpack.c.l.b16 %v1429
        %v1803 = vunpack.c.h.b16 %v1429
        %v1804 = vunpack.c.l.b16 %v1430
        %v1805 = vunpack.c.h.b16 %v1430
        %v1806 = vunpack.c.l.b16 %v1431
        %v1807 = vunpack.c.h.b16 %v1431
        %v1808 = vunpack.c.l.b16 %v1432
        %v1809 = vunpack.c.h.b16 %v1432
        %v1810 = vunpack.c.l.b16 %v1433
        %v1811 = vunpack.c.h.b16 %v1433
        %v1812 = vunpack.c.l.b16 %v1434
        %v1813 = vunpack.c.h.b16 %v1434
        %v1814 = vunpack.c.l.b16 %v1435
        %v1815 = vunpack.c.h.b16 %v1435
        %v1816 = vunpack.c.l.b16 %v1436
        %v1817 = vunpack.c.h.b16 %v1436
        %v1818 = vunpack.c.l.b16 %v1437
        %v1819 = vunpack.c.h.b16 %v1437
        %v1820 = vunpack.c.l.b16 %v1438
        %v1821 = vunpack.c.h.b16 %v1438
        %v1822 = vunpack.c.l.b16 %v1439
        %v1823 = vunpack.c.h.b16 %v1439
        %v1824 = vunpack.c.l.b16 %v1440
        %v1825 = vunpack.c.h.b16 %v1440
        %v1826 = vunpack.c.l.b16 %v1441
        %v1827 = vunpack.c.h.b16 %v1441
        %v1828 = vunpack.c.l.b16 %v1442
        %v1829 = vunpack.c.h.b16 %v1442
        %v1830 = vunpack.c.l.b16 %v1443
        %v1831 = vunpack.c.h.b16 %v1443
        %v1832 = vunpack.c.l.b16 %v1444
        %v1833 = vunpack.c.h.b16 %v1444
        %v1834 = vunpack.c.l.b16 %v1445
        %v1835 = vunpack.c.h.b16 %v1445
        %v1836 = vunpack.c.l.b16 %v1446
        %v1837 = vunpack.c.h.b16 %v1446
        %v1838 = vunpack.c.l.b16 %v1447
        %v1839 = vunpack.c.h.b16 %v1447
        %v1840 = vunpack.c.l.b16 %v1448
        %v1841 = vunpack.c.h.b16 %v1448
        %v1842 = vunpack.c.l.b16 %v1449
        %v1843 = vunpack.c.h.b16 %v1449
        %v1844 = vunpack.c.l.b16 %v1450
        %v1845 = vunpack.c.h.b16 %v1450
        %v1846 = vunpack.c.l.b16 %v1451
        %v1847 = vunpack.c.h.b16 %v1451
        %v1848 = vunpack.c.l.b16 %v1452
        %v1849 = vunpack.c.h.b16 %v1452
        %v1850 = vunpack.c.l.b16 %v1453
        %v1851 = vunpack.c.h.b16 %v1453
        %v1852 = vunpack.c.l.b16 %v1454
        %v1853 = vunpack.c.h.b16 %v1454
        %v1854 = vunpack.c.l.b16 %v1455
        %v1855 = vunpack.c.h.b16 %v1455
        %v1856 = vunpack.c.l.b16 %v1456
        %v1857 = vunpack.c.h.b16 %v1456
        %v1858 = vunpack.c.l.b16 %v1457
        %v1859 = vunpack.c.h.b16 %v1457
        %v1860 = vunpack.c.l.b16 %v1458
        %v1861 = vunpack.c.h.b16 %v1458
        %v1862 = vunpack.c.l.b16 %v1459
        %v1863 = vunpack.c.h.b16 %v1459
        %v1864 = vunpack.c.l.b16 %v1460
        %v1865 = vunpack.c.h.b16 %v1460
        %v1866 = vunpack.c.l.b16 %v1461
        %v1867 = vunpack.c.h.b16 %v1461
        %v1868 = vunpack.c.l.b16 %v1462
        %v1869 = vunpack.c.h.b16 %v1462
        %v1870 = vunpack.c.l.b16 %v1463
        %v1871 = vunpack.c.h.b16 %v1463
        %v1872 = vunpack.c.l.b16 %v1464
        %v1873 = vunpack.c.h.b16 %v1464
        %v1874 = vunpack.c.l.b16 %v1465
        %v1875 = vunpack.c.h.b16 %v1465
        %v1876 = vunpack.c.l.b16 %v1466
        %v1877 = vunpack.c.h.b16 %v1466
        %v1878 = vunpack.c.l.b16 %v1467
        %v1879 = vunpack.c.h.b16 %v1467
        %v1880 = vunpack.c.l.b16 %v1468
        %v1881 = vunpack.c.h.b16 %v1468
        %v1882 = vunpack.c.l.b16 %v1469
        %v1883 = vunpack.c.h.b16 %v1469
        %v1884 = vunpack.c.l.b16 %v1470
        %v1885 = vunpack.c.h.b16 %v1470
        %v1886 = vunpack.c.l.b16 %v1471
        %v1887 = vunpack.c.h.b16 %v1471
        %v1888 = vunpack.c.l.b16 %v1472
        %v1889 = vunpack.c.h.b16 %v1472
        %v1890 = vunpack.c.l.b16 %v1473
        %v1891 = vunpack.c.h.b16 %v1473
        %v1892 = vunpack.c.l.b16 %v1474
        %v1893 = vunpack.c.h.b16 %v1474
        %v1894 = vunpack.c.l.b16 %v1475
        %v1895 = vunpack.c.h.b16 %v1475
        %v1896 = vunpack.c.l.b16 %v1476
        %v1897 = vunpack.c.h.b16 %v1476
        %v1898 = vunpack.c.l.b16 %v1477
        %v1899 = vunpack.c.h.b16 %v1477
        %v1900 = vunpack.c.l.b16 %v1478
        %v1901 = vunpack.c.h.b16 %v1478
        %v1902 = vunpack.c.l.b16 %v1479
        %v1903 = vunpack.c.h.b16 %v1479
        %v1904 = vunpack.c.l.b16 %v1480
        %v1905 = vunpack.c.h.b16 %v1480
        %v1906 = vunpack.c.l.b16 %v1481
        %v1907 = vunpack.c.h.b16 %v1481
        %v1908 = vunpack.c.l.b16 %v1482
        %v1909 = vunpack.c.h.b16 %v1482
        %v1910 = vunpack.c.l.b16 %v1483
        %v1911 = vunpack.c.h.b16 %v1483
        %v1912 = vunpack.c.l.b16 %v1484
        %v1913 = vunpack.c.h.b16 %v1484
        %v1914 = vunpack.c.l.b16 %v1485
        %v1915 = vunpack.c.h.b16 %v1485
        %v1916 = vunpack.c.l.b16 %v1486
        %v1917 = vunpack.c.h.b16 %v1486
        %v1918 = vunpack.c.l.b16 %v1487
        %v1919 = vunpack.c.h.b16 %v1487
        %v1920 = vunpack.c.l.b16 %v1488
        %v1921 = vunpack.c.h.b16 %v1488
        %v1922 = vunpack.c.l.b16 %v1489
        %v1923 = vunpack.c.h.b16 %v1489
        %v1924 = vunpack.c.l.b16 %v1490
        %v1925 = vunpack.c.h.b16 %v1490
        %v1926 = vunpack.c.l.b16 %v1491
        %v1927 = vunpack.c.h.b16 %v1491
        %v1928 = vunpack.c.l.b16 %v1492
        %v1929 = vunpack.c.h.b16 %v1492
        %v1930 = vunpack.c.l.b16 %v1493
        %v1931 = vunpack.c.h.b16 %v1493
        %v1932 = vunpack.c.l.b16 %v1494
        %v1933 = vunpack.c.h.b16 %v1494
        %v1934 = vunpack.c.l.b16 %v1495
        %v1935 = vunpack.c.h.b16 %v1495
        %v1936 = vunpack.c.l.b16 %v1496
        %v1937 = vunpack.c.h.b16 %v1496
        %v1938 = vunpack.c.l.b16 %v1497
        %v1939 = vunpack.c.h.b16 %v1497
        %v1940 = vunpack.c.l.b16 %v1498
        %v1941 = vunpack.c.h.b16 %v1498
        %v1942 = vunpack.c.l.b16 %v1499
        %v1943 = vunpack.c.h.b16 %v1499
        %v1944 = vunpack.c.l.b16 %v1500
        %v1945 = vunpack.c.h.b16 %v1500
        %v1946 = vunpack.c.l.b16 %v1501
        %v1947 = vunpack.c.h.b16 %v1501
        %v1948 = vunpack.c.l.b16 %v1502
        %v1949 = vunpack.c.h.b16 %v1502
        %v1950 = vunpack.c.l.b16 %v1503
        %v1951 = vunpack.c.h.b16 %v1503
        %v1952 = vunpack.c.l.b16 %v1504
        %v1953 = vunpack.c.h.b16 %v1504
        %v1954 = vunpack.c.l.b16 %v1505
        %v1955 = vunpack.c.h.b16 %v1505
        %v1956 = vunpack.c.l.b16 %v1506
        %v1957 = vunpack.c.h.b16 %v1506
        %v1958 = vunpack.c.l.b16 %v1507
        %v1959 = vunpack.c.h.b16 %v1507
        %v1960 = vunpack.c.l.b16 %v1508
        %v1961 = vunpack.c.h.b16 %v1508
        %v1962 = vunpack.c.l.b16 %v1509
        %v1963 = vunpack.c.h.b16 %v1509
        %v1964 = vunpack.c.l.b16 %v1510
        %v1965 = vunpack.c.h.b16 %v1510
        %v1966 = vunpack.c.l.b16 %v1511
        %v1967 = vunpack.c.h.b16 %v1511
        %v1968 = vunpack.c.l.b16 %v1512
        %v1969 = vunpack.c.h.b16 %v1512
        %v1970 = vunpack.c.l.b16 %v1513
        %v1971 = vunpack.c.h.b16 %v1513
        %v1972 = vunpack.c.l.b16 %v1514
        %v1973 = vunpack.c.h.b16 %v1514
        %v1974 = vunpack.c.l.b16 %v1515
        %v1975 = vunpack.c.h.b16 %v1515
        %v1976 = vunpack.c.l.b16 %v1516
        %v1977 = vunpack.c.h.b16 %v1516
        %v1978 = vunpack.c.l.b16 %v1517
        %v1979 = vunpack.c.h.b16 %v1517
        %v1980 = vunpack.c.l.b16 %v1518
        %v1981 = vunpack.c.h.b16 %v1518
        %v1982 = vunpack.c.l.b16 %v1519
        %v1983 = vunpack.c.h.b16 %v1519
        %v1984 = vunpack.c.l.b16 %v1520
        %v1985 = vunpack.c.h.b16 %v1520
        %v1986 = vunpack.c.l.b16 %v1521
        %v1987 = vunpack.c.h.b16 %v1521
        %v1988 = vunpack.c.l.b16 %v1522
        %v1989 = vunpack.c.h.b16 %v1522
        %v1990 = vunpack.c.l.b16 %v1523
        %v1991 = vunpack.c.h.b16 %v1523
        %v1992 = vunpack.c.l.b16 %v1524
        %v1993 = vunpack.c.h.b16 %v1524
        %v1994 = vunpack.c.l.b16 %v1525
        %v1995 = vunpack.c.h.b16 %v1525
        %v1996 = vunpack.c.l.b16 %v1526
        %v1997 = vunpack.c.h.b16 %v1526
        %v1998 = vunpack.c.l.b16 %v1527
        %v1999 = vunpack.c.h.b16 %v1527
        %v2000 = vunpack.c.l.b16 %v1528
        %v2001 = vunpack.c.h.b16 %v1528
        %v2002 = vunpack.c.l.b16 %v1529
        %v2003 = vunpack.c.h.b16 %v1529
        %v2004 = vunpack.c.l.b16 %v1530
        %v2005 = vunpack.c.h.b16 %v1530
        %v2006 = vunpack.c.l.b16 %v1531
        %v2007 = vunpack.c.h.b16 %v1531
        %v2008 = vunpack.c.l.b16 %v1532
        %v2009 = vunpack.c.h.b16 %v1532
        %v2010 = vunpack.c.l.b16 %v1533
        %v2011 = vunpack.c.h.b16 %v1533
        %v2012 = vunpack.c.l.b16 %v1534
        %v2013 = vunpack.c.h.b16 %v1534
        %v2014 = vunpack.c.l.b16 %v1535
        %v2015 = vunpack.c.h.b16 %v1535
        %v2016 = vunpack.c.l.b16 %v1536
        %v2017 = vunpack.c.h.b16 %v1536
        %v2018 = vunpack.c.l.b16 %v1537
        %v2019 = vunpack.c.h.b16 %v1537
        %v2020 = vunpack.c.l.b16 %v1538
        %v2021 = vunpack.c.h.b16 %v1538
        %v2022 = vunpack.c.l.b16 %v1539
        %v2023 = vunpack.c.h.b16 %v1539
        %v2024 = vunpack.c.l.b16 %v1540
        %v2025 = vunpack.c.h.b16 %v1540
        %v2026 = vunpack.c.l.b16 %v1541
        %v2027 = vunpack.c.h.b16 %v1541
        %v2028 = vunpack.c.l.b16 %v1542
        %v2029 = vunpack.c.h.b16 %v1542
        %v2030 = vunpack.c.l.b16 %v1543
        %v2031 = vunpack.c.h.b16 %v1543
        %v2032 = vunpack.c.l.b16 %v1544
        %v2033 = vunpack.c.h.b16 %v1544
        %v2034 = vunpack.c.l.b16 %v1545
        %v2035 = vunpack.c.h.b16 %v1545
        %v2036 = vunpack.c.l.b16 %v1546
        %v2037 = vunpack.c.h.b16 %v1546
        %v2038 = vunpack.c.l.b16 %v1547
        %v2039 = vunpack.c.h.b16 %v1547
        %v2040 = vunpack.c.l.b16 %v1548
        %v2041 = vunpack.c.h.b16 %v1548
        %v2042 = vunpack.c.l.b16 %v1549
        %v2043 = vunpack.c.h.b16 %v1549
        %v2044 = vunpack.c.l.b16 %v1550
        %v2045 = vunpack.c.h.b16 %v1550
        %v2046 = vunpack.c.l.b16 %v1551
        %v2047 = vunpack.c.h.b16 %v1551
        %v2048 = vunpack.c.l.b16 %v1552
        %v2049 = vunpack.c.h.b16 %v1552
        %v2050 = vunpack.c.l.b16 %v1553
        %v2051 = vunpack.c.h.b16 %v1553
        %v2052 = vunpack.c.l.b16 %v1554
        %v2053 = vunpack.c.h.b16 %v1554
        %v2054 = vunpack.c.l.b16 %v1555
        %v2055 = vunpack.c.h.b16 %v1555
        %v2056 = vunpack.c.l.b16 %v1556
        %v2057 = vunpack.c.h.b16 %v1556
        %v2058 = vunpack.c.l.b16 %v1557
        %v2059 = vunpack.c.h.b16 %v1557
        %v2060 = vpack.c.b16 %v1744, %v1740
        %v2061 = vpack.c.b16 %v1745, %v1741
        %v2062 = vpack.c.b16 %v1746, %v1742
        %v2063 = vpack.c.b16 %v1747, %v1743
        %v2064 = vpack.c.b16 %v1752, %v1748
        %v2065 = vpack.c.b16 %v1753, %v1749
        %v2066 = vpack.c.b16 %v1754, %v1750
        %v2067 = vpack.c.b16 %v1755, %v1751
        %v2068 = vpack.c.b16 %v1760, %v1756
        %v2069 = vpack.c.b16 %v1761, %v1757
        %v2070 = vpack.c.b16 %v1762, %v1758
        %v2071 = vpack.c.b16 %v1763, %v1759
        %v2072 = vpack.c.b16 %v1768, %v1764
        %v2073 = vpack.c.b16 %v1769, %v1765
        %v2074 = vpack.c.b16 %v1770, %v1766
        %v2075 = vpack.c.b16 %v1771, %v1767
        %v2076 = vpack.c.b16 %v1776, %v1772
        %v2077 = vpack.c.b16 %v1777, %v1773
        %v2078 = vpack.c.b16 %v1778, %v1774
        %v2079 = vpack.c.b16 %v1779, %v1775
        %v2080 = vpack.c.b16 %v1784, %v1780
        %v2081 = vpack.c.b16 %v1785, %v1781
        %v2082 = vpack.c.b16 %v1786, %v1782
        %v2083 = vpack.c.b16 %v1787, %v1783
        %v2084 = vpack.c.b16 %v1792, %v1788
        %v2085 = vpack.c.b16 %v1793, %v1789
        %v2086 = vpack.c.b16 %v1794, %v1790
        %v2087 = vpack.c.b16 %v1795, %v1791
        %v2088 = vpack.c.b16 %v1800, %v1796
        %v2089 = vpack.c.b16 %v1801, %v1797
        %v2090 = vpack.c.b16 %v1802, %v1798
        %v2091 = vpack.c.b16 %v1803, %v1799
        %v2092 = vpack.c.b16 %v1808, %v1804
        %v2093 = vpack.c.b16 %v1809, %v1805
        %v2094 = vpack.c.b16 %v1810, %v1806
        %v2095 = vpack.c.b16 %v1811, %v1807
        %v2096 = vpack.c.b16 %v1816, %v1812
        %v2097 = vpack.c.b16 %v1817, %v1813
        %v2098 = vpack.c.b16 %v1818, %v1814
        %v2099 = vpack.c.b16 %v1819, %v1815
        %v2100 = vpack.c.b16 %v1824, %v1820
        %v2101 = vpack.c.b16 %v1825, %v1821
        %v2102 = vpack.c.b16 %v1826, %v1822
        %v2103 = vpack.c.b16 %v1827, %v1823
        %v2104 = vpack.c.b16 %v1832, %v1828
        %v2105 = vpack.c.b16 %v1833, %v1829
        %v2106 = vpack.c.b16 %v1834, %v1830
        %v2107 = vpack.c.b16 %v1835, %v1831
        %v2108 = vpack.c.b16 %v1840, %v1836
        %v2109 = vpack.c.b16 %v1841, %v1837
        %v2110 = vpack.c.b16 %v1842, %v1838
        %v2111 = vpack.c.b16 %v1843, %v1839
        %v2112 = vpack.c.b16 %v1848, %v1844
        %v2113 = vpack.c.b16 %v1849, %v1845
        %v2114 = vpack.c.b16 %v1850, %v1846
        %v2115 = vpack.c.b16 %v1851, %v1847
        %v2116 = vpack.c.b16 %v1856, %v1852
        %v2117 = vpack.c.b16 %v1857, %v1853
        %v2118 = vpack.c.b16 %v1858, %v1854
        %v2119 = vpack.c.b16 %v1859, %v1855
        %v2120 = vpack.c.b16 %v1864, %v1860
        %v2121 = vpack.c.b16 %v1865, %v1861
        %v2122 = vpack.c.b16 %v1866, %v1862
        %v2123 = vpack.c.b16 %v1867, %v1863
        %v2124 = vpack.c.b16 %v1872, %v1868
        %v2125 = vpack.c.b16 %v1873, %v1869
        %v2126 = vpack.c.b16 %v1874, %v1870
        %v2127 = vpack.c.b16 %v1875, %v1871
        %v2128 = vpack.c.b16 %v1880, %v1876
        %v2129 = vpack.c.b16 %v1881, %v1877
        %v2130 = vpack.c.b16 %v1882, %v1878
        %v2131 = vpack.c.b16 %v1883, %v1879
        %v2132 = vpack.c.b16 %v1888, %v1884
        %v2133 = vpack.c.b16 %v1889, %v1885
        %v2134 = vpack.c.b16 %v1890, %v1886
        %v2135 = vpack.c.b16 %v1891, %v1887
        %v2136 = vpack.c.b16 %v1896, %v1892
        %v2137 = vpack.c.b16 %v1897, %v1893
        %v2138 = vpack.c.b16 %v1898, %v1894
        %v2139 = vpack.c.b16 %v1899, %v1895
        %v2140 = vpack.c.b16 %v1904, %v1900
        %v2141 = vpack.c.b16 %v1905, %v1901
        %v2142 = vpack.c.b16 %v1906, %v1902
        %v2143 = vpack.c.b16 %v1907, %v1903
        %v2144 = vpack.c.b16 %v1912, %v1908
        %v2145 = vpack.c.b16 %v1913, %v1909
        %v2146 = vpack.c.b16 %v1914, %v1910
        %v2147 = vpack.c.b16 %v1915, %v1911
        %v2148 = vpack.c.b16 %v1920, %v1916
        %v2149 = vpack.c.b16 %v1921, %v1917
        %v2150 = vpack.c.b16 %v1922, %v1918
        %v2151 = vpack.c.b16 %v1923, %v1919
        %v2152 = vpack.c.b16 %v1928, %v1924
        %v2153 = vpack.c.b16 %v1929, %v1925
        %v2154 = vpack.c.b16 %v1930, %v1926
        %v2155 = vpack.c.b16 %v1931, %v1927
        %v2156 = vpack.c.b16 %v1936, %v1932
        %v2157 = vpack.c.b16 %v1937, %v1933
        %v2158 = vpack.c.b16 %v1938, %v1934
        %v2159 = vpack.c.b16 %v1939, %v1935
        %v2160 = vpack.c.b16 %v1944, %v1940
        %v2161 = vpack.c.b16 %v1945, %v1941
        %v2162 = vpack.c.b16 %v1946, %v1942
        %v2163 = vpack.c.b16 %v1947, %v1943
        %v2164 = vpack.c.b16 %v1952, %v1948
        %v2165 = vpack.c.b16 %v1953, %v1949
        %v2166 = vpack.c.b16 %v1954, %v1950
        %v2167 = vpack.c.b16 %v1955, %v1951
        %v2168 = vpack.c.b16 %v1960, %v1956
        %v2169 = vpack.c.b16 %v1961, %v1957
        %v2170 = vpack.c.b16 %v1962, %v1958
        %v2171 = vpack.c.b16 %v1963, %v1959
        %v2172 = vpack.c.b16 %v1968, %v1964
        %v2173 = vpack.c.b16 %v1969, %v1965
        %v2174 = vpack.c.b16 %v1970, %v1966
        %v2175 = vpack.c.b16 %v1971, %v1967
        %v2176 = vpack.c.b16 %v1976, %v1972
        %v2177 = vpack.c.b16 %v1977, %v1973
        %v2178 = vpack.c.b16 %v1978, %v1974
        %v2179 = vpack.c.b16 %v1979, %v1975
        %v2180 = vpack.c.b16 %v1984, %v1980
        %v2181 = vpack.c.b16 %v1985, %v1981
        %v2182 = vpack.c.b16 %v1986, %v1982
        %v2183 = vpack.c.b16 %v1987, %v1983
        %v2184 = vpack.c.b16 %v1992, %v1988
        %v2185 = vpack.c.b16 %v1993, %v1989
        %v2186 = vpack.c.b16 %v1994, %v1990
        %v2187 = vpack.c.b16 %v1995, %v1991
        %v2188 = vpack.c.b16 %v2000, %v1996
        %v2189 = vpack.c.b16 %v2001, %v1997
        %v2190 = vpack.c.b16 %v2002, %v1998
        %v2191 = vpack.c.b16 %v2003, %v1999
        %v2192 = vpack.c.b16 %v2008, %v2004
        %v2193 = vpack.c.b16 %v2009, %v2005
        %v2194 = vpack.c.b16 %v2010, %v2006
        %v2195 = vpack.c.b16 %v2011, %v2007
        %v2196 = vpack.c.b16 %v2016, %v2012
        %v2197 = vpack.c.b16 %v2017, %v2013
        %v2198 = vpack.c.b16 %v2018, %v2014
        %v2199 = vpack.c.b16 %v2019, %v2015
        %v2200 = vpack.c.b16 %v2024, %v2020
        %v2201 = vpack.c.b16 %v2025, %v2021
        %v2202 = vpack.c.b16 %v2026, %v2022
        %v2203 = vpack.c.b16 %v2027, %v2023
        %v2204 = vpack.c.b16 %v2032, %v2028
        %v2205 = vpack.c.b16 %v2033, %v2029
        %v2206 = vpack.c.b16 %v2034, %v2030
        %v2207 = vpack.c.b16 %v2035, %v2031
        %v2208 = vpack.c.b16 %v2040, %v2036
        %v2209 = vpack.c.b16 %v2041, %v2037
        %v2210 = vpack.c.b16 %v2042, %v2038
        %v2211 = vpack.c.b16 %v2043, %v2039
        %v2212 = vpack.c.b16 %v2048, %v2044
        %v2213 = vpack.c.b16 %v2049, %v2045
        %v2214 = vpack.c.b16 %v2050, %v2046
        %v2215 = vpack.c.b16 %v2051, %v2047
        %v2216 = vpack.c.b16 %v2056, %v2052
        %v2217 = vpack.c.b16 %v2057, %v2053
        %v2218 = vpack.c.b16 %v2058, %v2054
        %v2219 = vpack.c.b16 %v2059, %v2055
        %2380 = vmatprep.subr.bf16.mxu0 %v2089
        %2381 = vmatpush1.bf16.msra.mxu0 %v2088
        %2382 = vmatprep.subr.bf16.mxu0 %v2085
        %2383 = vmatpush1.bf16.msra.mxu0 %v2084
        %2384 = vmatprep.subr.bf16.mxu0 %v2081
        %2385 = vmatpush1.bf16.msra.mxu0 %v2080
        %2386 = vmatprep.subr.bf16.mxu0 %v2077
        %2387 = vmatpush1.bf16.msra.mxu0 %v2076
        %2388 = vmatprep.subr.bf16.mxu0 %v2073
        %2389 = vmatpush1.bf16.msra.mxu0 %v2072
        %2390 = vmatprep.subr.bf16.mxu0 %v2069
        %2391 = vmatpush1.bf16.msra.mxu0 %v2068
        %2392 = vmatprep.subr.bf16.mxu0 %v2065
        %2393 = vmatpush1.bf16.msra.mxu0 %v2064
        %2394 = vmatprep.subr.bf16.mxu0 %v2061
        %2395 = vmatpush1.bf16.msra.mxu0 %v2060
        %2396 = vmatprep.subr.bf16.mxu0 %v2121
        %2397 = vmatpush2.bf16.msra.mxu0 %v2120
        %2398 = vmatprep.subr.bf16.mxu0 %v2117
        %2399 = vmatpush2.bf16.msra.mxu0 %v2116
        %2400 = vmatprep.subr.bf16.mxu0 %v2113
        %2401 = vmatpush2.bf16.msra.mxu0 %v2112
        %2402 = vmatprep.subr.bf16.mxu0 %v2109
        %2403 = vmatpush2.bf16.msra.mxu0 %v2108
        %2404 = vmatprep.subr.bf16.mxu0 %v2105
        %2405 = vmatpush2.bf16.msra.mxu0 %v2104
        %2406 = vmatprep.subr.bf16.mxu0 %v2101
        %2407 = vmatpush2.bf16.msra.mxu0 %v2100
        %2408 = vmatprep.subr.bf16.mxu0 %v2097
        %2409 = vmatpush2.bf16.msra.mxu0 %v2096
        %2410 = vmatprep.subr.bf16.mxu0 %v2093
        %2411 = vmatpush2.bf16.msra.mxu0 %v2092
        %2412 = vmatprep.mubr.bf16.mxu0 %v1349
        %2413 = vmatmul.mubr.bf16.gmra.mxu0 %v1348
        %v2414 = vpop.f32.mrf.mxu0
        %v2415 = vadd.f32 %v1563, %v2414
        %v2416 = vpop.f32.mrf.mxu0
        %v2417 = vadd.f32 %v1567, %v2416
        %v2418 = vpop.f32.mrf.mxu0
        %v2419 = vadd.f32 %v1563, %v2418
        %v2420 = vpop.f32.mrf.mxu0
        %v2421 = vadd.f32 %v1567, %v2420
        %2422 = vmatprep.mubr.bf16.mxu0 %v1354
        %2423 = vmatmul.mubr.bf16.gmra.mxu0 %v1353
        %v2424 = vpop.f32.mrf.mxu0
        %v2425 = vadd.f32 %v1563, %v2424
        %v2426 = vpop.f32.mrf.mxu0
        %v2427 = vadd.f32 %v1567, %v2426
        %v2428 = vpop.f32.mrf.mxu0
        %v2429 = vadd.f32 %v1563, %v2428
        %v2430 = vpop.f32.mrf.mxu0
        %v2431 = vadd.f32 %v1567, %v2430
        %2432 = vmatprep.mubr.bf16.mxu0 %v1359
        %2433 = vmatmul.mubr.bf16.gmra.mxu0 %v1358
        %v2434 = vpop.f32.mrf.mxu0
        %v2435 = vadd.f32 %v1563, %v2434
        %v2436 = vpop.f32.mrf.mxu0
        %v2437 = vadd.f32 %v1567, %v2436
        %v2438 = vpop.f32.mrf.mxu0
        %v2439 = vadd.f32 %v1563, %v2438
        %v2440 = vpop.f32.mrf.mxu0
        %v2441 = vadd.f32 %v1567, %v2440
        %2442 = vmatprep.mubr.bf16.mxu0 %v1364
        %2443 = vmatmul.mubr.bf16.gmra.mxu0 %v1363
        %v2444 = vpop.f32.mrf.mxu0
        %v2445 = vadd.f32 %v1563, %v2444
        %v2446 = vpop.f32.mrf.mxu0
        %v2447 = vadd.f32 %v1567, %v2446
        %v2448 = vpop.f32.mrf.mxu0
        %v2449 = vadd.f32 %v1563, %v2448
        %v2450 = vpop.f32.mrf.mxu0
        %v2451 = vadd.f32 %v1567, %v2450
        %2452 = vmatprep.mubr.bf16.mxu0 %v1369
        %2453 = vmatmul.mubr.bf16.gmra.mxu0 %v1368
        %v2454 = vpop.f32.mrf.mxu0
        %v2455 = vadd.f32 %v1563, %v2454
        %v2456 = vpop.f32.mrf.mxu0
        %v2457 = vadd.f32 %v1567, %v2456
        %v2458 = vpop.f32.mrf.mxu0
        %v2459 = vadd.f32 %v1563, %v2458
        %v2460 = vpop.f32.mrf.mxu0
        %v2461 = vadd.f32 %v1567, %v2460
        %2462 = vmatprep.mubr.bf16.mxu0 %v1374
        %2463 = vmatmul.mubr.bf16.gmra.mxu0 %v1373
        %v2464 = vpop.f32.mrf.mxu0
        %v2465 = vadd.f32 %v1563, %v2464
        %v2466 = vpop.f32.mrf.mxu0
        %v2467 = vadd.f32 %v1567, %v2466
        %v2468 = vpop.f32.mrf.mxu0
        %v2469 = vadd.f32 %v1563, %v2468
        %v2470 = vpop.f32.mrf.mxu0
        %v2471 = vadd.f32 %v1567, %v2470
        %2472 = vmatprep.mubr.bf16.mxu0 %v1379
        %2473 = vmatmul.mubr.bf16.gmra.mxu0 %v1378
        %v2474 = vpop.f32.mrf.mxu0
        %v2475 = vadd.f32 %v1563, %v2474
        %v2476 = vpop.f32.mrf.mxu0
        %v2477 = vadd.f32 %v1567, %v2476
        %v2478 = vpop.f32.mrf.mxu0
        %v2479 = vadd.f32 %v1563, %v2478
        %v2480 = vpop.f32.mrf.mxu0
        %v2481 = vadd.f32 %v1567, %v2480
        %2482 = vmatprep.mubr.bf16.mxu0 %v1384
        %2483 = vmatmul.mubr.bf16.gmra.mxu0 %v1383
        %v2484 = vpop.f32.mrf.mxu0
        %v2485 = vadd.f32 %v1563, %v2484
        %v2486 = vpop.f32.mrf.mxu0
        %v2487 = vadd.f32 %v1567, %v2486
        %v2488 = vpop.f32.mrf.mxu0
        %v2489 = vadd.f32 %v1563, %v2488
        %v2490 = vpop.f32.mrf.mxu0
        %v2491 = vadd.f32 %v1567, %v2490
        %2492 = vmatprep.mubr.bf16.mxu0 %v1389
        %2493 = vmatmul.mubr.bf16.gmra.mxu0 %v1388
        %v2494 = vpop.f32.mrf.mxu0
        %v2495 = vadd.f32 %v1563, %v2494
        %v2496 = vpop.f32.mrf.mxu0
        %v2497 = vadd.f32 %v1567, %v2496
        %v2498 = vpop.f32.mrf.mxu0
        %v2499 = vadd.f32 %v1563, %v2498
        %v2500 = vpop.f32.mrf.mxu0
        %v2501 = vadd.f32 %v1567, %v2500
        %2502 = vmatprep.mubr.bf16.mxu0 %v1394
        %2503 = vmatmul.mubr.bf16.gmra.mxu0 %v1393
        %v2504 = vpop.f32.mrf.mxu0
        %v2505 = vadd.f32 %v1563, %v2504
        %v2506 = vpop.f32.mrf.mxu0
        %v2507 = vadd.f32 %v1567, %v2506
        %v2508 = vpop.f32.mrf.mxu0
        %v2509 = vpop.f32.mrf.mxu0
        %2510 = vdwg.mxu0
        %2511 = vmatprep.subr.bf16.mxu0 %v2153
        %2512 = vmatpush1.bf16.msra.mxu0 %v2152
        %2513 = vmatprep.subr.bf16.mxu0 %v2149
        %2514 = vmatpush1.bf16.msra.mxu0 %v2148
        %2515 = vmatprep.subr.bf16.mxu0 %v2145
        %2516 = vmatpush1.bf16.msra.mxu0 %v2144
        %2517 = vmatprep.subr.bf16.mxu0 %v2141
        %2518 = vmatpush1.bf16.msra.mxu0 %v2140
        %2519 = vmatprep.subr.bf16.mxu0 %v2137
        %2520 = vmatpush1.bf16.msra.mxu0 %v2136
        %2521 = vmatprep.subr.bf16.mxu0 %v2133
        %2522 = vmatpush1.bf16.msra.mxu0 %v2132
        %2523 = vmatprep.subr.bf16.mxu0 %v2129
        %2524 = vmatpush1.bf16.msra.mxu0 %v2128
        %2525 = vmatprep.subr.bf16.mxu0 %v2125
        %2526 = vmatpush1.bf16.msra.mxu0 %v2124
        %2527 = vmatprep.subr.bf16.mxu0 %v2185
        %2528 = vmatpush2.bf16.msra.mxu0 %v2184
        %2529 = vmatprep.subr.bf16.mxu0 %v2181
        %2530 = vmatpush2.bf16.msra.mxu0 %v2180
        %2531 = vmatprep.subr.bf16.mxu0 %v2177
        %2532 = vmatpush2.bf16.msra.mxu0 %v2176
        %2533 = vmatprep.subr.bf16.mxu0 %v2173
        %2534 = vmatpush2.bf16.msra.mxu0 %v2172
        %2535 = vmatprep.subr.bf16.mxu0 %v2169
        %2536 = vmatpush2.bf16.msra.mxu0 %v2168
        %2537 = vmatprep.subr.bf16.mxu0 %v2165
        %2538 = vmatpush2.bf16.msra.mxu0 %v2164
        %2539 = vmatprep.subr.bf16.mxu0 %v2161
        %2540 = vmatpush2.bf16.msra.mxu0 %v2160
        %2541 = vmatprep.subr.bf16.mxu0 %v2157
        %2542 = vmatpush2.bf16.msra.mxu0 %v2156
        %2543 = vmatprep.mubr.bf16.mxu0 %v1351
        %2544 = vmatmul.mubr.bf16.gmra.mxu0 %v1350
        %v2545 = vpop.f32.mrf.mxu0
        %v2546 = vadd.f32 %v2415, %v2545
        %v2547 = vpop.f32.mrf.mxu0
        %v2548 = vadd.f32 %v2417, %v2547
        %v2549 = vpop.f32.mrf.mxu0
        %v2550 = vadd.f32 %v2419, %v2549
        %v2551 = vpop.f32.mrf.mxu0
        %v2552 = vadd.f32 %v2421, %v2551
        %2553 = vmatprep.mubr.bf16.mxu0 %v1356
        %2554 = vmatmul.mubr.bf16.gmra.mxu0 %v1355
        %v2555 = vpop.f32.mrf.mxu0
        %v2556 = vadd.f32 %v2425, %v2555
        %v2557 = vpop.f32.mrf.mxu0
        %v2558 = vadd.f32 %v2427, %v2557
        %v2559 = vpop.f32.mrf.mxu0
        %v2560 = vadd.f32 %v2429, %v2559
        %v2561 = vpop.f32.mrf.mxu0
        %v2562 = vadd.f32 %v2431, %v2561
        %2563 = vmatprep.mubr.bf16.mxu0 %v1361
        %2564 = vmatmul.mubr.bf16.gmra.mxu0 %v1360
        %v2565 = vpop.f32.mrf.mxu0
        %v2566 = vadd.f32 %v2435, %v2565
        %v2567 = vpop.f32.mrf.mxu0
        %v2568 = vadd.f32 %v2437, %v2567
        %v2569 = vpop.f32.mrf.mxu0
        %v2570 = vadd.f32 %v2439, %v2569
        %v2571 = vpop.f32.mrf.mxu0
        %v2572 = vadd.f32 %v2441, %v2571
        %2573 = vmatprep.mubr.bf16.mxu0 %v1366
        %2574 = vmatmul.mubr.bf16.gmra.mxu0 %v1365
        %v2575 = vpop.f32.mrf.mxu0
        %v2576 = vadd.f32 %v2445, %v2575
        %v2577 = vpop.f32.mrf.mxu0
        %v2578 = vadd.f32 %v2447, %v2577
        %v2579 = vpop.f32.mrf.mxu0
        %v2580 = vadd.f32 %v2449, %v2579
        %v2581 = vpop.f32.mrf.mxu0
        %v2582 = vadd.f32 %v2451, %v2581
        %2583 = vmatprep.mubr.bf16.mxu0 %v1371
        %2584 = vmatmul.mubr.bf16.gmra.mxu0 %v1370
        %v2585 = vpop.f32.mrf.mxu0
        %v2586 = vadd.f32 %v2455, %v2585
        %v2587 = vpop.f32.mrf.mxu0
        %v2588 = vadd.f32 %v2457, %v2587
        %v2589 = vpop.f32.mrf.mxu0
        %v2590 = vadd.f32 %v2459, %v2589
        %v2591 = vpop.f32.mrf.mxu0
        %v2592 = vadd.f32 %v2461, %v2591
        %2593 = vmatprep.mubr.bf16.mxu0 %v1376
        %2594 = vmatmul.mubr.bf16.gmra.mxu0 %v1375
        %v2595 = vpop.f32.mrf.mxu0
        %v2596 = vadd.f32 %v2465, %v2595
        %v2597 = vpop.f32.mrf.mxu0
        %v2598 = vadd.f32 %v2467, %v2597
        %v2599 = vpop.f32.mrf.mxu0
        %v2600 = vadd.f32 %v2469, %v2599
        %v2601 = vpop.f32.mrf.mxu0
        %v2602 = vadd.f32 %v2471, %v2601
        %2603 = vmatprep.mubr.bf16.mxu0 %v1381
        %2604 = vmatmul.mubr.bf16.gmra.mxu0 %v1380
        %v2605 = vpop.f32.mrf.mxu0
        %v2606 = vadd.f32 %v2475, %v2605
        %v2607 = vpop.f32.mrf.mxu0
        %v2608 = vadd.f32 %v2477, %v2607
        %v2609 = vpop.f32.mrf.mxu0
        %v2610 = vadd.f32 %v2479, %v2609
        %v2611 = vpop.f32.mrf.mxu0
        %v2612 = vadd.f32 %v2481, %v2611
        %2613 = vmatprep.mubr.bf16.mxu0 %v1386
        %2614 = vmatmul.mubr.bf16.gmra.mxu0 %v1385
        %v2615 = vpop.f32.mrf.mxu0
        %v2616 = vadd.f32 %v2485, %v2615
        %v2617 = vpop.f32.mrf.mxu0
        %v2618 = vadd.f32 %v2487, %v2617
        %v2619 = vpop.f32.mrf.mxu0
        %v2620 = vadd.f32 %v2489, %v2619
        %v2621 = vpop.f32.mrf.mxu0
        %v2622 = vadd.f32 %v2491, %v2621
        %2623 = vmatprep.mubr.bf16.mxu0 %v1391
        %2624 = vmatmul.mubr.bf16.gmra.mxu0 %v1390
        %v2625 = vpop.f32.mrf.mxu0
        %v2626 = vadd.f32 %v2495, %v2625
        %v2627 = vpop.f32.mrf.mxu0
        %v2628 = vadd.f32 %v2497, %v2627
        %v2629 = vpop.f32.mrf.mxu0
        %v2630 = vadd.f32 %v2499, %v2629
        %v2631 = vpop.f32.mrf.mxu0
        %v2632 = vadd.f32 %v2501, %v2631
        %2633 = vmatprep.mubr.bf16.mxu0 %v1396
        %2634 = vmatmul.mubr.bf16.gmra.mxu0 %v1395
        %v2635 = vpop.f32.mrf.mxu0
        %v2636 = vadd.f32 %v2505, %v2635
        %v2637 = vpop.f32.mrf.mxu0
        %v2638 = vadd.f32 %v2507, %v2637
        %v2639 = vpop.f32.mrf.mxu0
        %v2640 = vpop.f32.mrf.mxu0
        %2641 = vdwg.mxu0
        %2642 = vmatprep.subr.bf16.mxu0 %v2217
        %2643 = vmatpush1.bf16.msra.mxu0 %v2216
        %2644 = vmatprep.subr.bf16.mxu0 %v2213
        %2645 = vmatpush1.bf16.msra.mxu0 %v2212
        %2646 = vmatprep.subr.bf16.mxu0 %v2209
        %2647 = vmatpush1.bf16.msra.mxu0 %v2208
        %2648 = vmatprep.subr.bf16.mxu0 %v2205
        %2649 = vmatpush1.bf16.msra.mxu0 %v2204
        %2650 = vmatprep.subr.bf16.mxu0 %v2201
        %2651 = vmatpush1.bf16.msra.mxu0 %v2200
        %2652 = vmatprep.subr.bf16.mxu0 %v2197
        %2653 = vmatpush1.bf16.msra.mxu0 %v2196
        %2654 = vmatprep.subr.bf16.mxu0 %v2193
        %2655 = vmatpush1.bf16.msra.mxu0 %v2192
        %2656 = vmatprep.subr.bf16.mxu0 %v2189
        %2657 = vmatpush1.bf16.msra.mxu0 %v2188
        %2658 = vmatprep.subr.bf16.mxu0 0
        %2659 = vmatpush2.bf16.msra.mxu0 0
        %2660 = vmatprep.subr.bf16.mxu0 0
        %2661 = vmatpush2.bf16.msra.mxu0 0
        %2662 = vmatprep.subr.bf16.mxu0 0
        %2663 = vmatpush2.bf16.msra.mxu0 0
        %2664 = vmatprep.subr.bf16.mxu0 0
        %2665 = vmatpush2.bf16.msra.mxu0 0
        %2666 = vmatprep.subr.bf16.mxu0 0
        %2667 = vmatpush2.bf16.msra.mxu0 0
        %2668 = vmatprep.subr.bf16.mxu0 0
        %2669 = vmatpush2.bf16.msra.mxu0 0
        %2670 = vmatprep.subr.bf16.mxu0 0
        %2671 = vmatpush2.bf16.msra.mxu0 0
        %2672 = vmatprep.subr.bf16.mxu0 0
        %2673 = vmatpush2.bf16.msra.mxu0 0
        %2674 = vmatprep.mubr.bf16.mxu0 0
        %2675 = vmatmul.mubr.bf16.gmra.mxu0 %v1352
        %v2676 = vpop.f32.mrf.mxu0
        %v2677 = vadd.f32 %v2546, %v2676
        %v2678 = vpop.f32.mrf.mxu0
        %v2679 = vadd.f32 %v2548, %v2678
        %v2680 = vpop.f32.mrf.mxu0
        %v2681 = vadd.f32 %v2550, %v2680
        %v2682 = vpop.f32.mrf.mxu0
        %v2683 = vadd.f32 %v2552, %v2682
        %2684 = vmatprep.mubr.bf16.mxu0 0
        %2685 = vmatmul.mubr.bf16.gmra.mxu0 %v1357
        %v2686 = vpop.f32.mrf.mxu0
        %v2687 = vadd.f32 %v2556, %v2686
        %v2688 = vpop.f32.mrf.mxu0
        %v2689 = vadd.f32 %v2558, %v2688
        %v2690 = vpop.f32.mrf.mxu0
        %v2691 = vadd.f32 %v2560, %v2690
        %v2692 = vpop.f32.mrf.mxu0
        %v2693 = vadd.f32 %v2562, %v2692
        %2694 = vmatprep.mubr.bf16.mxu0 0
        %2695 = vmatmul.mubr.bf16.gmra.mxu0 %v1362
        %v2696 = vpop.f32.mrf.mxu0
        %v2697 = vadd.f32 %v2566, %v2696
        %v2698 = vpop.f32.mrf.mxu0
        %v2699 = vadd.f32 %v2568, %v2698
        %v2700 = vpop.f32.mrf.mxu0
        %v2701 = vadd.f32 %v2570, %v2700
        %v2702 = vpop.f32.mrf.mxu0
        %v2703 = vadd.f32 %v2572, %v2702
        %2704 = vmatprep.mubr.bf16.mxu0 0
        %2705 = vmatmul.mubr.bf16.gmra.mxu0 %v1367
        %v2706 = vpop.f32.mrf.mxu0
        %v2707 = vadd.f32 %v2576, %v2706
        %v2708 = vpop.f32.mrf.mxu0
        %v2709 = vadd.f32 %v2578, %v2708
        %v2710 = vpop.f32.mrf.mxu0
        %v2711 = vadd.f32 %v2580, %v2710
        %v2712 = vpop.f32.mrf.mxu0
        %v2713 = vadd.f32 %v2582, %v2712
        %2714 = vmatprep.mubr.bf16.mxu0 0
        %2715 = vmatmul.mubr.bf16.gmra.mxu0 %v1372
        %v2716 = vpop.f32.mrf.mxu0
        %v2717 = vadd.f32 %v2586, %v2716
        %v2718 = vpop.f32.mrf.mxu0
        %v2719 = vadd.f32 %v2588, %v2718
        %v2720 = vpop.f32.mrf.mxu0
        %v2721 = vadd.f32 %v2590, %v2720
        %v2722 = vpop.f32.mrf.mxu0
        %v2723 = vadd.f32 %v2592, %v2722
        %2724 = vmatprep.mubr.bf16.mxu0 0
        %2725 = vmatmul.mubr.bf16.gmra.mxu0 %v1377
        %v2726 = vpop.f32.mrf.mxu0
        %v2727 = vadd.f32 %v2596, %v2726
        %v2728 = vpop.f32.mrf.mxu0
        %v2729 = vadd.f32 %v2598, %v2728
        %v2730 = vpop.f32.mrf.mxu0
        %v2731 = vadd.f32 %v2600, %v2730
        %v2732 = vpop.f32.mrf.mxu0
        %v2733 = vadd.f32 %v2602, %v2732
        %2734 = vmatprep.mubr.bf16.mxu0 0
        %2735 = vmatmul.mubr.bf16.gmra.mxu0 %v1382
        %v2736 = vpop.f32.mrf.mxu0
        %v2737 = vadd.f32 %v2606, %v2736
        %v2738 = vpop.f32.mrf.mxu0
        %v2739 = vadd.f32 %v2608, %v2738
        %v2740 = vpop.f32.mrf.mxu0
        %v2741 = vadd.f32 %v2610, %v2740
        %v2742 = vpop.f32.mrf.mxu0
        %v2743 = vadd.f32 %v2612, %v2742
        %2744 = vmatprep.mubr.bf16.mxu0 0
        %2745 = vmatmul.mubr.bf16.gmra.mxu0 %v1387
        %v2746 = vpop.f32.mrf.mxu0
        %v2747 = vadd.f32 %v2616, %v2746
        %v2748 = vpop.f32.mrf.mxu0
        %v2749 = vadd.f32 %v2618, %v2748
        %v2750 = vpop.f32.mrf.mxu0
        %v2751 = vadd.f32 %v2620, %v2750
        %v2752 = vpop.f32.mrf.mxu0
        %v2753 = vadd.f32 %v2622, %v2752
        %2754 = vmatprep.mubr.bf16.mxu0 0
        %2755 = vmatmul.mubr.bf16.gmra.mxu0 %v1392
        %v2756 = vpop.f32.mrf.mxu0
        %v2757 = vadd.f32 %v2626, %v2756
        %v2758 = vpop.f32.mrf.mxu0
        %v2759 = vadd.f32 %v2628, %v2758
        %v2760 = vpop.f32.mrf.mxu0
        %v2761 = vadd.f32 %v2630, %v2760
        %v2762 = vpop.f32.mrf.mxu0
        %v2763 = vadd.f32 %v2632, %v2762
        %2764 = vmatprep.mubr.bf16.mxu0 0
        %2765 = vmatmul.mubr.bf16.gmra.mxu0 %v1397
        %v2766 = vpop.f32.mrf.mxu0
        %v2767 = vadd.f32 %v2636, %v2766
        %v2768 = vpop.f32.mrf.mxu0
        %v2769 = vadd.f32 %v2638, %v2768
        %v2770 = vpop.f32.mrf.mxu0
        %v2771 = vpop.f32.mrf.mxu0
        %2772 = vdwg.mxu0
        %2773 = vmatprep.subr.bf16.mxu0 %v2091
        %2774 = vmatpush1.bf16.msra.mxu0 %v2090
        %2775 = vmatprep.subr.bf16.mxu0 %v2087
        %2776 = vmatpush1.bf16.msra.mxu0 %v2086
        %2777 = vmatprep.subr.bf16.mxu0 %v2083
        %2778 = vmatpush1.bf16.msra.mxu0 %v2082
        %2779 = vmatprep.subr.bf16.mxu0 %v2079
        %2780 = vmatpush1.bf16.msra.mxu0 %v2078
        %2781 = vmatprep.subr.bf16.mxu0 %v2075
        %2782 = vmatpush1.bf16.msra.mxu0 %v2074
        %2783 = vmatprep.subr.bf16.mxu0 %v2071
        %2784 = vmatpush1.bf16.msra.mxu0 %v2070
        %2785 = vmatprep.subr.bf16.mxu0 %v2067
        %2786 = vmatpush1.bf16.msra.mxu0 %v2066
        %2787 = vmatprep.subr.bf16.mxu0 %v2063
        %2788 = vmatpush1.bf16.msra.mxu0 %v2062
        %2789 = vmatprep.subr.bf16.mxu0 %v2123
        %2790 = vmatpush2.bf16.msra.mxu0 %v2122
        %2791 = vmatprep.subr.bf16.mxu0 %v2119
        %2792 = vmatpush2.bf16.msra.mxu0 %v2118
        %2793 = vmatprep.subr.bf16.mxu0 %v2115
        %2794 = vmatpush2.bf16.msra.mxu0 %v2114
        %2795 = vmatprep.subr.bf16.mxu0 %v2111
        %2796 = vmatpush2.bf16.msra.mxu0 %v2110
        %2797 = vmatprep.subr.bf16.mxu0 %v2107
        %2798 = vmatpush2.bf16.msra.mxu0 %v2106
        %2799 = vmatprep.subr.bf16.mxu0 %v2103
        %2800 = vmatpush2.bf16.msra.mxu0 %v2102
        %2801 = vmatprep.subr.bf16.mxu0 %v2099
        %2802 = vmatpush2.bf16.msra.mxu0 %v2098
        %2803 = vmatprep.subr.bf16.mxu0 %v2095
        %2804 = vmatpush2.bf16.msra.mxu0 %v2094
        %2805 = vmatprep.mubr.bf16.mxu0 %v1349
        %2806 = vmatmul.mubr.bf16.gmra.mxu0 %v1348
        %v2807 = vpop.f32.mrf.mxu0
        %v2808 = vadd.f32 %v1571, %v2807
        %v2809 = vpop.f32.mrf.mxu0
        %v2810 = vadd.f32 %v1575, %v2809
        %v2811 = vpop.f32.mrf.mxu0
        %v2812 = vadd.f32 %v1571, %v2811
        %v2813 = vpop.f32.mrf.mxu0
        %v2814 = vadd.f32 %v1575, %v2813
        %2815 = vmatprep.mubr.bf16.mxu0 %v1354
        %2816 = vmatmul.mubr.bf16.gmra.mxu0 %v1353
        %v2817 = vpop.f32.mrf.mxu0
        %v2818 = vadd.f32 %v1571, %v2817
        %v2819 = vpop.f32.mrf.mxu0
        %v2820 = vadd.f32 %v1575, %v2819
        %v2821 = vpop.f32.mrf.mxu0
        %v2822 = vadd.f32 %v1571, %v2821
        %v2823 = vpop.f32.mrf.mxu0
        %v2824 = vadd.f32 %v1575, %v2823
        %2825 = vmatprep.mubr.bf16.mxu0 %v1359
        %2826 = vmatmul.mubr.bf16.gmra.mxu0 %v1358
        %v2827 = vpop.f32.mrf.mxu0
        %v2828 = vadd.f32 %v1571, %v2827
        %v2829 = vpop.f32.mrf.mxu0
        %v2830 = vadd.f32 %v1575, %v2829
        %v2831 = vpop.f32.mrf.mxu0
        %v2832 = vadd.f32 %v1571, %v2831
        %v2833 = vpop.f32.mrf.mxu0
        %v2834 = vadd.f32 %v1575, %v2833
        %2835 = vmatprep.mubr.bf16.mxu0 %v1364
        %2836 = vmatmul.mubr.bf16.gmra.mxu0 %v1363
        %v2837 = vpop.f32.mrf.mxu0
        %v2838 = vadd.f32 %v1571, %v2837
        %v2839 = vpop.f32.mrf.mxu0
        %v2840 = vadd.f32 %v1575, %v2839
        %v2841 = vpop.f32.mrf.mxu0
        %v2842 = vadd.f32 %v1571, %v2841
        %v2843 = vpop.f32.mrf.mxu0
        %v2844 = vadd.f32 %v1575, %v2843
        %2845 = vmatprep.mubr.bf16.mxu0 %v1369
        %2846 = vmatmul.mubr.bf16.gmra.mxu0 %v1368
        %v2847 = vpop.f32.mrf.mxu0
        %v2848 = vadd.f32 %v1571, %v2847
        %v2849 = vpop.f32.mrf.mxu0
        %v2850 = vadd.f32 %v1575, %v2849
        %v2851 = vpop.f32.mrf.mxu0
        %v2852 = vadd.f32 %v1571, %v2851
        %v2853 = vpop.f32.mrf.mxu0
        %v2854 = vadd.f32 %v1575, %v2853
        %2855 = vmatprep.mubr.bf16.mxu0 %v1374
        %2856 = vmatmul.mubr.bf16.gmra.mxu0 %v1373
        %v2857 = vpop.f32.mrf.mxu0
        %v2858 = vadd.f32 %v1571, %v2857
        %v2859 = vpop.f32.mrf.mxu0
        %v2860 = vadd.f32 %v1575, %v2859
        %v2861 = vpop.f32.mrf.mxu0
        %v2862 = vadd.f32 %v1571, %v2861
        %v2863 = vpop.f32.mrf.mxu0
        %v2864 = vadd.f32 %v1575, %v2863
        %2865 = vmatprep.mubr.bf16.mxu0 %v1379
        %2866 = vmatmul.mubr.bf16.gmra.mxu0 %v1378
        %v2867 = vpop.f32.mrf.mxu0
        %v2868 = vadd.f32 %v1571, %v2867
        %v2869 = vpop.f32.mrf.mxu0
        %v2870 = vadd.f32 %v1575, %v2869
        %v2871 = vpop.f32.mrf.mxu0
        %v2872 = vadd.f32 %v1571, %v2871
        %v2873 = vpop.f32.mrf.mxu0
        %v2874 = vadd.f32 %v1575, %v2873
        %2875 = vmatprep.mubr.bf16.mxu0 %v1384
        %2876 = vmatmul.mubr.bf16.gmra.mxu0 %v1383
        %v2877 = vpop.f32.mrf.mxu0
        %v2878 = vadd.f32 %v1571, %v2877
        %v2879 = vpop.f32.mrf.mxu0
        %v2880 = vadd.f32 %v1575, %v2879
        %v2881 = vpop.f32.mrf.mxu0
        %v2882 = vadd.f32 %v1571, %v2881
        %v2883 = vpop.f32.mrf.mxu0
        %v2884 = vadd.f32 %v1575, %v2883
        %2885 = vmatprep.mubr.bf16.mxu0 %v1389
        %2886 = vmatmul.mubr.bf16.gmra.mxu0 %v1388
        %v2887 = vpop.f32.mrf.mxu0
        %v2888 = vadd.f32 %v1571, %v2887
        %v2889 = vpop.f32.mrf.mxu0
        %v2890 = vadd.f32 %v1575, %v2889
        %v2891 = vpop.f32.mrf.mxu0
        %v2892 = vadd.f32 %v1571, %v2891
        %v2893 = vpop.f32.mrf.mxu0
        %v2894 = vadd.f32 %v1575, %v2893
        %2895 = vmatprep.mubr.bf16.mxu0 %v1394
        %2896 = vmatmul.mubr.bf16.gmra.mxu0 %v1393
        %v2897 = vpop.f32.mrf.mxu0
        %v2898 = vadd.f32 %v1571, %v2897
        %v2899 = vpop.f32.mrf.mxu0
        %v2900 = vadd.f32 %v1575, %v2899
        %v2901 = vpop.f32.mrf.mxu0
        %v2902 = vpop.f32.mrf.mxu0
        %2903 = vdwg.mxu0
        %2904 = vmatprep.subr.bf16.mxu0 %v2155
        %2905 = vmatpush1.bf16.msra.mxu0 %v2154
        %2906 = vmatprep.subr.bf16.mxu0 %v2151
        %2907 = vmatpush1.bf16.msra.mxu0 %v2150
        %2908 = vmatprep.subr.bf16.mxu0 %v2147
        %2909 = vmatpush1.bf16.msra.mxu0 %v2146
        %2910 = vmatprep.subr.bf16.mxu0 %v2143
        %2911 = vmatpush1.bf16.msra.mxu0 %v2142
        %2912 = vmatprep.subr.bf16.mxu0 %v2139
        %2913 = vmatpush1.bf16.msra.mxu0 %v2138
        %2914 = vmatprep.subr.bf16.mxu0 %v2135
        %2915 = vmatpush1.bf16.msra.mxu0 %v2134
        %2916 = vmatprep.subr.bf16.mxu0 %v2131
        %2917 = vmatpush1.bf16.msra.mxu0 %v2130
        %2918 = vmatprep.subr.bf16.mxu0 %v2127
        %2919 = vmatpush1.bf16.msra.mxu0 %v2126
        %2920 = vmatprep.subr.bf16.mxu0 %v2187
        %2921 = vmatpush2.bf16.msra.mxu0 %v2186
        %2922 = vmatprep.subr.bf16.mxu0 %v2183
        %2923 = vmatpush2.bf16.msra.mxu0 %v2182
        %2924 = vmatprep.subr.bf16.mxu0 %v2179
        %2925 = vmatpush2.bf16.msra.mxu0 %v2178
        %2926 = vmatprep.subr.bf16.mxu0 %v2175
        %2927 = vmatpush2.bf16.msra.mxu0 %v2174
        %2928 = vmatprep.subr.bf16.mxu0 %v2171
        %2929 = vmatpush2.bf16.msra.mxu0 %v2170
        %2930 = vmatprep.subr.bf16.mxu0 %v2167
        %2931 = vmatpush2.bf16.msra.mxu0 %v2166
        %2932 = vmatprep.subr.bf16.mxu0 %v2163
        %2933 = vmatpush2.bf16.msra.mxu0 %v2162
        %2934 = vmatprep.subr.bf16.mxu0 %v2159
        %2935 = vmatpush2.bf16.msra.mxu0 %v2158
        %2936 = vmatprep.mubr.bf16.mxu0 %v1351
        %2937 = vmatmul.mubr.bf16.gmra.mxu0 %v1350
        %v2938 = vpop.f32.mrf.mxu0
        %v2939 = vadd.f32 %v2808, %v2938
        %v2940 = vpop.f32.mrf.mxu0
        %v2941 = vadd.f32 %v2810, %v2940
        %v2942 = vpop.f32.mrf.mxu0
        %v2943 = vadd.f32 %v2812, %v2942
        %v2944 = vpop.f32.mrf.mxu0
        %v2945 = vadd.f32 %v2814, %v2944
        %2946 = vmatprep.mubr.bf16.mxu0 %v1356
        %2947 = vmatmul.mubr.bf16.gmra.mxu0 %v1355
        %v2948 = vpop.f32.mrf.mxu0
        %v2949 = vadd.f32 %v2818, %v2948
        %v2950 = vpop.f32.mrf.mxu0
        %v2951 = vadd.f32 %v2820, %v2950
        %v2952 = vpop.f32.mrf.mxu0
        %v2953 = vadd.f32 %v2822, %v2952
        %v2954 = vpop.f32.mrf.mxu0
        %v2955 = vadd.f32 %v2824, %v2954
        %2956 = vmatprep.mubr.bf16.mxu0 %v1361
        %2957 = vmatmul.mubr.bf16.gmra.mxu0 %v1360
        %v2958 = vpop.f32.mrf.mxu0
        %v2959 = vadd.f32 %v2828, %v2958
        %v2960 = vpop.f32.mrf.mxu0
        %v2961 = vadd.f32 %v2830, %v2960
        %v2962 = vpop.f32.mrf.mxu0
        %v2963 = vadd.f32 %v2832, %v2962
        %v2964 = vpop.f32.mrf.mxu0
        %v2965 = vadd.f32 %v2834, %v2964
        %2966 = vmatprep.mubr.bf16.mxu0 %v1366
        %2967 = vmatmul.mubr.bf16.gmra.mxu0 %v1365
        %v2968 = vpop.f32.mrf.mxu0
        %v2969 = vadd.f32 %v2838, %v2968
        %v2970 = vpop.f32.mrf.mxu0
        %v2971 = vadd.f32 %v2840, %v2970
        %v2972 = vpop.f32.mrf.mxu0
        %v2973 = vadd.f32 %v2842, %v2972
        %v2974 = vpop.f32.mrf.mxu0
        %v2975 = vadd.f32 %v2844, %v2974
        %2976 = vmatprep.mubr.bf16.mxu0 %v1371
        %2977 = vmatmul.mubr.bf16.gmra.mxu0 %v1370
        %v2978 = vpop.f32.mrf.mxu0
        %v2979 = vadd.f32 %v2848, %v2978
        %v2980 = vpop.f32.mrf.mxu0
        %v2981 = vadd.f32 %v2850, %v2980
        %v2982 = vpop.f32.mrf.mxu0
        %v2983 = vadd.f32 %v2852, %v2982
        %v2984 = vpop.f32.mrf.mxu0
        %v2985 = vadd.f32 %v2854, %v2984
        %2986 = vmatprep.mubr.bf16.mxu0 %v1376
        %2987 = vmatmul.mubr.bf16.gmra.mxu0 %v1375
        %v2988 = vpop.f32.mrf.mxu0
        %v2989 = vadd.f32 %v2858, %v2988
        %v2990 = vpop.f32.mrf.mxu0
        %v2991 = vadd.f32 %v2860, %v2990
        %v2992 = vpop.f32.mrf.mxu0
        %v2993 = vadd.f32 %v2862, %v2992
        %v2994 = vpop.f32.mrf.mxu0
        %v2995 = vadd.f32 %v2864, %v2994
        %2996 = vmatprep.mubr.bf16.mxu0 %v1381
        %2997 = vmatmul.mubr.bf16.gmra.mxu0 %v1380
        %v2998 = vpop.f32.mrf.mxu0
        %v2999 = vadd.f32 %v2868, %v2998
        %v3000 = vpop.f32.mrf.mxu0
        %v3001 = vadd.f32 %v2870, %v3000
        %v3002 = vpop.f32.mrf.mxu0
        %v3003 = vadd.f32 %v2872, %v3002
        %v3004 = vpop.f32.mrf.mxu0
        %v3005 = vadd.f32 %v2874, %v3004
        %3006 = vmatprep.mubr.bf16.mxu0 %v1386
        %3007 = vmatmul.mubr.bf16.gmra.mxu0 %v1385
        %v3008 = vpop.f32.mrf.mxu0
        %v3009 = vadd.f32 %v2878, %v3008
        %v3010 = vpop.f32.mrf.mxu0
        %v3011 = vadd.f32 %v2880, %v3010
        %v3012 = vpop.f32.mrf.mxu0
        %v3013 = vadd.f32 %v2882, %v3012
        %v3014 = vpop.f32.mrf.mxu0
        %v3015 = vadd.f32 %v2884, %v3014
        %3016 = vmatprep.mubr.bf16.mxu0 %v1391
        %3017 = vmatmul.mubr.bf16.gmra.mxu0 %v1390
        %v3018 = vpop.f32.mrf.mxu0
        %v3019 = vadd.f32 %v2888, %v3018
        %v3020 = vpop.f32.mrf.mxu0
        %v3021 = vadd.f32 %v2890, %v3020
        %v3022 = vpop.f32.mrf.mxu0
        %v3023 = vadd.f32 %v2892, %v3022
        %v3024 = vpop.f32.mrf.mxu0
        %v3025 = vadd.f32 %v2894, %v3024
        %3026 = vmatprep.mubr.bf16.mxu0 %v1396
        %3027 = vmatmul.mubr.bf16.gmra.mxu0 %v1395
        %v3028 = vpop.f32.mrf.mxu0
        %v3029 = vadd.f32 %v2898, %v3028
        %v3030 = vpop.f32.mrf.mxu0
        %v3031 = vadd.f32 %v2900, %v3030
        %v3032 = vpop.f32.mrf.mxu0
        %v3033 = vpop.f32.mrf.mxu0
        %3034 = vdwg.mxu0
        %3035 = vmatprep.subr.bf16.mxu0 %v2219
        %3036 = vmatpush1.bf16.msra.mxu0 %v2218
        %3037 = vmatprep.subr.bf16.mxu0 %v2215
        %3038 = vmatpush1.bf16.msra.mxu0 %v2214
        %3039 = vmatprep.subr.bf16.mxu0 %v2211
        %3040 = vmatpush1.bf16.msra.mxu0 %v2210
        %3041 = vmatprep.subr.bf16.mxu0 %v2207
        %3042 = vmatpush1.bf16.msra.mxu0 %v2206
        %3043 = vmatprep.subr.bf16.mxu0 %v2203
        %3044 = vmatpush1.bf16.msra.mxu0 %v2202
        %3045 = vmatprep.subr.bf16.mxu0 %v2199
        %3046 = vmatpush1.bf16.msra.mxu0 %v2198
        %3047 = vmatprep.subr.bf16.mxu0 %v2195
        %3048 = vmatpush1.bf16.msra.mxu0 %v2194
        %3049 = vmatprep.subr.bf16.mxu0 %v2191
        %3050 = vmatpush1.bf16.msra.mxu0 %v2190
        %3051 = vmatprep.subr.bf16.mxu0 0
        %3052 = vmatpush2.bf16.msra.mxu0 0
        %3053 = vmatprep.subr.bf16.mxu0 0
        %3054 = vmatpush2.bf16.msra.mxu0 0
        %3055 = vmatprep.subr.bf16.mxu0 0
        %3056 = vmatpush2.bf16.msra.mxu0 0
        %3057 = vmatprep.subr.bf16.mxu0 0
        %3058 = vmatpush2.bf16.msra.mxu0 0
        %3059 = vmatprep.subr.bf16.mxu0 0
        %3060 = vmatpush2.bf16.msra.mxu0 0
        %3061 = vmatprep.subr.bf16.mxu0 0
        %3062 = vmatpush2.bf16.msra.mxu0 0
        %3063 = vmatprep.subr.bf16.mxu0 0
        %3064 = vmatpush2.bf16.msra.mxu0 0
        %3065 = vmatprep.subr.bf16.mxu0 0
        %3066 = vmatpush2.bf16.msra.mxu0 0
        %3067 = vmatprep.mubr.bf16.mxu0 0
        %3068 = vmatmul.mubr.bf16.gmra.mxu0 %v1352
        %v3069 = vpop.f32.mrf.mxu0
        %v3070 = vadd.f32 %v2939, %v3069
        %v3071 = vpop.f32.mrf.mxu0
        %v3072 = vadd.f32 %v2941, %v3071
        %v3073 = vpop.f32.mrf.mxu0
        %v3074 = vadd.f32 %v2943, %v3073
        %v3075 = vpop.f32.mrf.mxu0
        %v3076 = vadd.f32 %v2945, %v3075
        %3077 = vmatprep.mubr.bf16.mxu0 0
        %3078 = vmatmul.mubr.bf16.gmra.mxu0 %v1357
        %v3079 = vpop.f32.mrf.mxu0
        %v3080 = vadd.f32 %v2949, %v3079
        %v3081 = vpop.f32.mrf.mxu0
        %v3082 = vadd.f32 %v2951, %v3081
        %v3083 = vpop.f32.mrf.mxu0
        %v3084 = vadd.f32 %v2953, %v3083
        %v3085 = vpop.f32.mrf.mxu0
        %v3086 = vadd.f32 %v2955, %v3085
        %3087 = vmatprep.mubr.bf16.mxu0 0
        %3088 = vmatmul.mubr.bf16.gmra.mxu0 %v1362
        %v3089 = vpop.f32.mrf.mxu0
        %v3090 = vadd.f32 %v2959, %v3089
        %v3091 = vpop.f32.mrf.mxu0
        %v3092 = vadd.f32 %v2961, %v3091
        %v3093 = vpop.f32.mrf.mxu0
        %v3094 = vadd.f32 %v2963, %v3093
        %v3095 = vpop.f32.mrf.mxu0
        %v3096 = vadd.f32 %v2965, %v3095
        %3097 = vmatprep.mubr.bf16.mxu0 0
        %3098 = vmatmul.mubr.bf16.gmra.mxu0 %v1367
        %v3099 = vpop.f32.mrf.mxu0
        %v3100 = vadd.f32 %v2969, %v3099
        %v3101 = vpop.f32.mrf.mxu0
        %v3102 = vadd.f32 %v2971, %v3101
        %v3103 = vpop.f32.mrf.mxu0
        %v3104 = vadd.f32 %v2973, %v3103
        %v3105 = vpop.f32.mrf.mxu0
        %v3106 = vadd.f32 %v2975, %v3105
        %3107 = vmatprep.mubr.bf16.mxu0 0
        %3108 = vmatmul.mubr.bf16.gmra.mxu0 %v1372
        %v3109 = vpop.f32.mrf.mxu0
        %v3110 = vadd.f32 %v2979, %v3109
        %v3111 = vpop.f32.mrf.mxu0
        %v3112 = vadd.f32 %v2981, %v3111
        %v3113 = vpop.f32.mrf.mxu0
        %v3114 = vadd.f32 %v2983, %v3113
        %v3115 = vpop.f32.mrf.mxu0
        %v3116 = vadd.f32 %v2985, %v3115
        %3117 = vmatprep.mubr.bf16.mxu0 0
        %3118 = vmatmul.mubr.bf16.gmra.mxu0 %v1377
        %v3119 = vpop.f32.mrf.mxu0
        %v3120 = vadd.f32 %v2989, %v3119
        %v3121 = vpop.f32.mrf.mxu0
        %v3122 = vadd.f32 %v2991, %v3121
        %v3123 = vpop.f32.mrf.mxu0
        %v3124 = vadd.f32 %v2993, %v3123
        %v3125 = vpop.f32.mrf.mxu0
        %v3126 = vadd.f32 %v2995, %v3125
        %3127 = vmatprep.mubr.bf16.mxu0 0
        %3128 = vmatmul.mubr.bf16.gmra.mxu0 %v1382
        %v3129 = vpop.f32.mrf.mxu0
        %v3130 = vadd.f32 %v2999, %v3129
        %v3131 = vpop.f32.mrf.mxu0
        %v3132 = vadd.f32 %v3001, %v3131
        %v3133 = vpop.f32.mrf.mxu0
        %v3134 = vadd.f32 %v3003, %v3133
        %v3135 = vpop.f32.mrf.mxu0
        %v3136 = vadd.f32 %v3005, %v3135
        %3137 = vmatprep.mubr.bf16.mxu0 0
        %3138 = vmatmul.mubr.bf16.gmra.mxu0 %v1387
        %v3139 = vpop.f32.mrf.mxu0
        %v3140 = vadd.f32 %v3009, %v3139
        %v3141 = vpop.f32.mrf.mxu0
        %v3142 = vadd.f32 %v3011, %v3141
        %v3143 = vpop.f32.mrf.mxu0
        %v3144 = vadd.f32 %v3013, %v3143
        %v3145 = vpop.f32.mrf.mxu0
        %v3146 = vadd.f32 %v3015, %v3145
        %3147 = vmatprep.mubr.bf16.mxu0 0
        %3148 = vmatmul.mubr.bf16.gmra.mxu0 %v1392
        %v3149 = vpop.f32.mrf.mxu0
        %v3150 = vadd.f32 %v3019, %v3149
        %v3151 = vpop.f32.mrf.mxu0
        %v3152 = vadd.f32 %v3021, %v3151
        %v3153 = vpop.f32.mrf.mxu0
        %v3154 = vadd.f32 %v3023, %v3153
        %v3155 = vpop.f32.mrf.mxu0
        %v3156 = vadd.f32 %v3025, %v3155
        %3157 = vmatprep.mubr.bf16.mxu0 0
        %3158 = vmatmul.mubr.bf16.gmra.mxu0 %v1397
        %v3159 = vpop.f32.mrf.mxu0
        %v3160 = vadd.f32 %v3029, %v3159
        %v3161 = vpop.f32.mrf.mxu0
        %v3162 = vadd.f32 %v3031, %v3161
        %v3163 = vpop.f32.mrf.mxu0
        %v3164 = vpop.f32.mrf.mxu0
        %3165 = vdwg.mxu0
        %v3166 = vld [vmem:[%s485] sm:$0xff]
        %v3167 = vld [vmem:[%s485 + $0x8] sm:$0xff]
        %v3168 = vld [vmem:[%s485 + $0x10] sm:$0xff]
        %v3169 = vld [vmem:[%s485 + $0x18] sm:$0xff]
        %v3170 = vld [vmem:[%s485 + $0x20] sm:$0xff]
        %v3171 = vld [vmem:[%s485 + $0x28] sm:$0xff]
        %v3172 = vld [vmem:[%s485 + $0x30] sm:$0xff]
        %v3173 = vld [vmem:[%s485 + $0x38] sm:$0xff]
        %v3174 = vld [vmem:[%s485 + $0x40] sm:$0xff]
        %v3175 = vld [vmem:[%s485 + $0x48] sm:$0xff]
        %v3176 = vld [vmem:[%s485 + $0x50] sm:$0xff]
        %v3177 = vld [vmem:[%s485 + $0x58] sm:$0xff]
        %v3178 = vld [vmem:[%s485 + $0x60] sm:$0xff]
        %v3179 = vld [vmem:[%s485 + $0x68] sm:$0xff]
        %v3180 = vld [vmem:[%s485 + $0x70] sm:$0xff]
        %v3181 = vld [vmem:[%s485 + $0x78] sm:$0xff]
        %v3182 = vld [vmem:[%s485 + $0x80] sm:$0xff]
        %v3183 = vld [vmem:[%s485 + $0x88] sm:$0xff]
        %v3184 = vld [vmem:[%s485 + $0x90] sm:$0xff]
        %v3185 = vld [vmem:[%s485 + $0x98] sm:$0xff]
        %v3186 = vld [vmem:[%s485 + $0xa0] sm:$0xff]
        %v3187 = vld [vmem:[%s485 + $0xa8] sm:$0xff]
        %v3188 = vld [vmem:[%s485 + $0xb0] sm:$0xff]
        %v3189 = vld [vmem:[%s485 + $0xb8] sm:$0xff]
        %v3190 = vld [vmem:[%s485 + $0xc0] sm:$0xff]
        %v3191 = vld [vmem:[%s485 + $0xc8] sm:$0xff]
        %v3192 = vld [vmem:[%s485 + $0xd0] sm:$0xff]
        %v3193 = vld [vmem:[%s485 + $0xd8] sm:$0xff]
        %v3194 = vld [vmem:[%s485 + $0xe0] sm:$0xff]
        %v3195 = vld [vmem:[%s485 + $0xe8] sm:$0xff]
        %v3196 = vld [vmem:[%s485 + $0xf0] sm:$0xff]
        %v3197 = vld [vmem:[%s485 + $0xf8] sm:$0xff]
        %v3198 = vld [vmem:[%s485 + $0x100] sm:$0xff]
        %v3199 = vld [vmem:[%s485 + $0x108] sm:$0xff]
        %v3200 = vld [vmem:[%s485 + $0x110] sm:$0xff]
        %v3201 = vld [vmem:[%s485 + $0x118] sm:$0xff]
        %v3202 = vld [vmem:[%s485 + $0x120] sm:$0xff]
        %v3203 = vld [vmem:[%s485 + $0x128] sm:$0xff]
        %v3204 = vmul.f32 %v3070, 0.5
        %v3205 = vmul.f32 %v3072, 0.5
        %v3206 = vmul.f32 %v3074, 0.5
        %v3207 = vmul.f32 %v3076, 0.5
        %v3208 = vmul.f32 %v3080, 0.5
        %v3209 = vmul.f32 %v3082, 0.5
        %v3210 = vmul.f32 %v3084, 0.5
        %v3211 = vmul.f32 %v3086, 0.5
        %v3212 = vmul.f32 %v3090, 0.5
        %v3213 = vmul.f32 %v3092, 0.5
        %v3214 = vmul.f32 %v3094, 0.5
        %v3215 = vmul.f32 %v3096, 0.5
        %v3216 = vmul.f32 %v3100, 0.5
        %v3217 = vmul.f32 %v3102, 0.5
        %v3218 = vmul.f32 %v3104, 0.5
        %v3219 = vmul.f32 %v3106, 0.5
        %v3220 = vmul.f32 %v3110, 0.5
        %v3221 = vmul.f32 %v3112, 0.5
        %v3222 = vmul.f32 %v3114, 0.5
        %v3223 = vmul.f32 %v3116, 0.5
        %v3224 = vmul.f32 %v3120, 0.5
        %v3225 = vmul.f32 %v3122, 0.5
        %v3226 = vmul.f32 %v3124, 0.5
        %v3227 = vmul.f32 %v3126, 0.5
        %v3228 = vmul.f32 %v3130, 0.5
        %v3229 = vmul.f32 %v3132, 0.5
        %v3230 = vmul.f32 %v3134, 0.5
        %v3231 = vmul.f32 %v3136, 0.5
        %v3232 = vmul.f32 %v3140, 0.5
        %v3233 = vmul.f32 %v3142, 0.5
        %v3234 = vmul.f32 %v3144, 0.5
        %v3235 = vmul.f32 %v3146, 0.5
        %v3236 = vmul.f32 %v3150, 0.5
        %v3237 = vmul.f32 %v3152, 0.5
        %v3238 = vmul.f32 %v3154, 0.5
        %v3239 = vmul.f32 %v3156, 0.5
        %v3240 = vmul.f32 %v3160, 0.5
        %v3241 = vmul.f32 %v3162, 0.5
        %v3242 = vmul.f32 %v3204, 1.442695
        %v3243 = vpow.pop %v3242
        %v3244 = vmul.f32 %v3205, 1.442695
        %v3245 = vpow.pop %v3244
        %v3246 = vmul.f32 %v3206, 1.442695
        %v3247 = vpow.pop %v3246
        %v3248 = vmul.f32 %v3207, 1.442695
        %v3249 = vpow.pop %v3248
        %v3250 = vmul.f32 %v3208, 1.442695
        %v3251 = vpow.pop %v3250
        %v3252 = vmul.f32 %v3209, 1.442695
        %v3253 = vpow.pop %v3252
        %v3254 = vmul.f32 %v3210, 1.442695
        %v3255 = vpow.pop %v3254
        %v3256 = vmul.f32 %v3211, 1.442695
        %v3257 = vpow.pop %v3256
        %v3258 = vmul.f32 %v3212, 1.442695
        %v3259 = vpow.pop %v3258
        %v3260 = vmul.f32 %v3213, 1.442695
        %v3261 = vpow.pop %v3260
        %v3262 = vmul.f32 %v3214, 1.442695
        %v3263 = vpow.pop %v3262
        %v3264 = vmul.f32 %v3215, 1.442695
        %v3265 = vpow.pop %v3264
        %v3266 = vmul.f32 %v3216, 1.442695
        %v3267 = vpow.pop %v3266
        %v3268 = vmul.f32 %v3217, 1.442695
        %v3269 = vpow.pop %v3268
        %v3270 = vmul.f32 %v3218, 1.442695
        %v3271 = vpow.pop %v3270
        %v3272 = vmul.f32 %v3219, 1.442695
        %v3273 = vpow.pop %v3272
        %v3274 = vmul.f32 %v3220, 1.442695
        %v3275 = vpow.pop %v3274
        %v3276 = vmul.f32 %v3221, 1.442695
        %v3277 = vpow.pop %v3276
        %v3278 = vmul.f32 %v3222, 1.442695
        %v3279 = vpow.pop %v3278
        %v3280 = vmul.f32 %v3223, 1.442695
        %v3281 = vpow.pop %v3280
        %v3282 = vmul.f32 %v3224, 1.442695
        %v3283 = vpow.pop %v3282
        %v3284 = vmul.f32 %v3225, 1.442695
        %v3285 = vpow.pop %v3284
        %v3286 = vmul.f32 %v3226, 1.442695
        %v3287 = vpow.pop %v3286
        %v3288 = vmul.f32 %v3227, 1.442695
        %v3289 = vpow.pop %v3288
        %v3290 = vmul.f32 %v3228, 1.442695
        %v3291 = vpow.pop %v3290
        %v3292 = vmul.f32 %v3229, 1.442695
        %v3293 = vpow.pop %v3292
        %v3294 = vmul.f32 %v3230, 1.442695
        %v3295 = vpow.pop %v3294
        %v3296 = vmul.f32 %v3231, 1.442695
        %v3297 = vpow.pop %v3296
        %v3298 = vmul.f32 %v3232, 1.442695
        %v3299 = vpow.pop %v3298
        %v3300 = vmul.f32 %v3233, 1.442695
        %v3301 = vpow.pop %v3300
        %v3302 = vmul.f32 %v3234, 1.442695
        %v3303 = vpow.pop %v3302
        %v3304 = vmul.f32 %v3235, 1.442695
        %v3305 = vpow.pop %v3304
        %v3306 = vmul.f32 %v3236, 1.442695
        %v3307 = vpow.pop %v3306
        %v3308 = vmul.f32 %v3237, 1.442695
        %v3309 = vpow.pop %v3308
        %v3310 = vmul.f32 %v3238, 1.442695
        %v3311 = vpow.pop %v3310
        %v3312 = vmul.f32 %v3239, 1.442695
        %v3313 = vpow.pop %v3312
        %v3314 = vmul.f32 %v3240, 1.442695
        %v3315 = vpow.pop %v3314
        %v3316 = vmul.f32 %v3241, 1.442695
        %v3317 = vpow.pop %v3316
        %v3318 = vmul.f32 %v3166, %v3243
        %v3319 = vmul.f32 %v3167, %v3245
        %v3320 = vmul.f32 %v3168, %v3247
        %v3321 = vmul.f32 %v3169, %v3249
        %v3322 = vmul.f32 %v3170, %v3251
        %v3323 = vmul.f32 %v3171, %v3253
        %v3324 = vmul.f32 %v3172, %v3255
        %v3325 = vmul.f32 %v3173, %v3257
        %v3326 = vmul.f32 %v3174, %v3259
        %v3327 = vmul.f32 %v3175, %v3261
        %v3328 = vmul.f32 %v3176, %v3263
        %v3329 = vmul.f32 %v3177, %v3265
        %v3330 = vmul.f32 %v3178, %v3267
        %v3331 = vmul.f32 %v3179, %v3269
        %v3332 = vmul.f32 %v3180, %v3271
        %v3333 = vmul.f32 %v3181, %v3273
        %v3334 = vmul.f32 %v3182, %v3275
        %v3335 = vmul.f32 %v3183, %v3277
        %v3336 = vmul.f32 %v3184, %v3279
        %v3337 = vmul.f32 %v3185, %v3281
        %v3338 = vmul.f32 %v3186, %v3283
        %v3339 = vmul.f32 %v3187, %v3285
        %v3340 = vmul.f32 %v3188, %v3287
        %v3341 = vmul.f32 %v3189, %v3289
        %v3342 = vmul.f32 %v3190, %v3291
        %v3343 = vmul.f32 %v3191, %v3293
        %v3344 = vmul.f32 %v3192, %v3295
        %v3345 = vmul.f32 %v3193, %v3297
        %v3346 = vmul.f32 %v3194, %v3299
        %v3347 = vmul.f32 %v3195, %v3301
        %v3348 = vmul.f32 %v3196, %v3303
        %v3349 = vmul.f32 %v3197, %v3305
        %v3350 = vmul.f32 %v3198, %v3307
        %v3351 = vmul.f32 %v3199, %v3309
        %v3352 = vmul.f32 %v3200, %v3311
        %v3353 = vmul.f32 %v3201, %v3313
        %v3354 = vmul.f32 %v3202, %v3315
        %v3355 = vmul.f32 %v3203, %v3317
        %v3356 = vadd.f32 %v2677, %v3318
        %v3357 = vadd.f32 %v2679, %v3319
        %v3358 = vadd.f32 %v2681, %v3320
        %v3359 = vadd.f32 %v2683, %v3321
        %v3360 = vadd.f32 %v2687, %v3322
        %v3361 = vadd.f32 %v2689, %v3323
        %v3362 = vadd.f32 %v2691, %v3324
        %v3363 = vadd.f32 %v2693, %v3325
        %v3364 = vadd.f32 %v2697, %v3326
        %v3365 = vadd.f32 %v2699, %v3327
        %v3366 = vadd.f32 %v2701, %v3328
        %v3367 = vadd.f32 %v2703, %v3329
        %v3368 = vadd.f32 %v2707, %v3330
        %v3369 = vadd.f32 %v2709, %v3331
        %v3370 = vadd.f32 %v2711, %v3332
        %v3371 = vadd.f32 %v2713, %v3333
        %v3372 = vadd.f32 %v2717, %v3334
        %v3373 = vadd.f32 %v2719, %v3335
        %v3374 = vadd.f32 %v2721, %v3336
        %v3375 = vadd.f32 %v2723, %v3337
        %v3376 = vadd.f32 %v2727, %v3338
        %v3377 = vadd.f32 %v2729, %v3339
        %v3378 = vadd.f32 %v2731, %v3340
        %v3379 = vadd.f32 %v2733, %v3341
        %v3380 = vadd.f32 %v2737, %v3342
        %v3381 = vadd.f32 %v2739, %v3343
        %v3382 = vadd.f32 %v2741, %v3344
        %v3383 = vadd.f32 %v2743, %v3345
        %v3384 = vadd.f32 %v2747, %v3346
        %v3385 = vadd.f32 %v2749, %v3347
        %v3386 = vadd.f32 %v2751, %v3348
        %v3387 = vadd.f32 %v2753, %v3349
        %v3388 = vadd.f32 %v2757, %v3350
        %v3389 = vadd.f32 %v2759, %v3351
        %v3390 = vadd.f32 %v2761, %v3352
        %v3391 = vadd.f32 %v2763, %v3353
        %v3392 = vadd.f32 %v2767, %v3354
        %v3393 = vadd.f32 %v2769, %v3355
        %v3394 = vpack.c.bf16 %v3358, %v3356
        %v3395 = vpack.c.bf16 %v3359, %v3357
        %v3396 = vpack.c.bf16 %v3362, %v3360
        %v3397 = vpack.c.bf16 %v3363, %v3361
        %v3398 = vpack.c.bf16 %v3366, %v3364
        %v3399 = vpack.c.bf16 %v3367, %v3365
        %v3400 = vpack.c.bf16 %v3370, %v3368
        %v3401 = vpack.c.bf16 %v3371, %v3369
        %v3402 = vpack.c.bf16 %v3374, %v3372
        %v3403 = vpack.c.bf16 %v3375, %v3373
        %v3404 = vpack.c.bf16 %v3378, %v3376
        %v3405 = vpack.c.bf16 %v3379, %v3377
        %v3406 = vpack.c.bf16 %v3382, %v3380
        %v3407 = vpack.c.bf16 %v3383, %v3381
        %v3408 = vpack.c.bf16 %v3386, %v3384
        %v3409 = vpack.c.bf16 %v3387, %v3385
        %v3410 = vpack.c.bf16 %v3390, %v3388
        %v3411 = vpack.c.bf16 %v3391, %v3389
        %v3412 = vpack.c.bf16 %v3392, %v3392
        %v3413 = vpack.c.bf16 %v3393, %v3393
        %v3414 = vld [vmem:[#allocation11] sm:$0xff]
        %v3415 = vld [vmem:[#allocation11 + $0x8] sm:$0xff]
        %v3416 = vld [vmem:[#allocation11 + $0x10] sm:$0xf]
        %v3417 = vld [vmem:[#allocation11 + $0x14] sm:$0xff]
        %v3418 = vld [vmem:[#allocation11 + $0x1c] sm:$0xff]
        %v3419 = vld [vmem:[#allocation11 + $0x24] sm:$0xf]
        %v3420 = vld [vmem:[#allocation11 + $0x28] sm:$0xff]
        %v3421 = vld [vmem:[#allocation11 + $0x30] sm:$0xff]
        %v3422 = vld [vmem:[#allocation11 + $0x38] sm:$0xf]
        %v3423 = vld [vmem:[#allocation11 + $0x3c] sm:$0xff]
        %v3424 = vld [vmem:[#allocation11 + $0x44] sm:$0xff]
        %v3425 = vld [vmem:[#allocation11 + $0x4c] sm:$0xf]
        %v3426 = vld [vmem:[#allocation11 + $0x50] sm:$0xff]
        %v3427 = vld [vmem:[#allocation11 + $0x58] sm:$0xff]
        %v3428 = vld [vmem:[#allocation11 + $0x60] sm:$0xf]
        %v3429 = vld [vmem:[#allocation11 + $0x64] sm:$0xff]
        %v3430 = vld [vmem:[#allocation11 + $0x6c] sm:$0xff]
        %v3431 = vld [vmem:[#allocation11 + $0x74] sm:$0xf]
        %v3432 = vld [vmem:[#allocation11 + $0x78] sm:$0xff]
        %v3433 = vld [vmem:[#allocation11 + $0x80] sm:$0xff]
        %v3434 = vld [vmem:[#allocation11 + $0x88] sm:$0xf]
        %v3435 = vld [vmem:[#allocation11 + $0x8c] sm:$0xff]
        %v3436 = vld [vmem:[#allocation11 + $0x94] sm:$0xff]
        %v3437 = vld [vmem:[#allocation11 + $0x9c] sm:$0xf]
        %v3438 = vld [vmem:[#allocation11 + $0xa0] sm:$0xff]
        %v3439 = vld [vmem:[#allocation11 + $0xa8] sm:$0xff]
        %v3440 = vld [vmem:[#allocation11 + $0xb0] sm:$0xf]
        %v3441 = vld [vmem:[#allocation11 + $0xb4] sm:$0xff]
        %v3442 = vld [vmem:[#allocation11 + $0xbc] sm:$0xff]
        %v3443 = vld [vmem:[#allocation11 + $0xc4] sm:$0xf]
        %v3444 = vld [vmem:[#allocation11 + $0xc8] sm:$0xff]
        %v3445 = vld [vmem:[#allocation11 + $0xd0] sm:$0xff]
        %v3446 = vld [vmem:[#allocation11 + $0xd8] sm:$0xf]
        %v3447 = vld [vmem:[#allocation11 + $0xdc] sm:$0xff]
        %v3448 = vld [vmem:[#allocation11 + $0xe4] sm:$0xff]
        %v3449 = vld [vmem:[#allocation11 + $0xec] sm:$0xf]
        %v3450 = vld [vmem:[#allocation11 + $0xf0] sm:$0xff]
        %v3451 = vld [vmem:[#allocation11 + $0xf8] sm:$0xff]
        %v3452 = vld [vmem:[#allocation11 + $0x100] sm:$0xf]
        %v3453 = vld [vmem:[#allocation11 + $0x104] sm:$0xff]
        %v3454 = vld [vmem:[#allocation11 + $0x10c] sm:$0xff]
        %v3455 = vld [vmem:[#allocation11 + $0x114] sm:$0xf]
        %v3456 = vld [vmem:[#allocation11 + $0x118] sm:$0xff]
        %v3457 = vld [vmem:[#allocation11 + $0x120] sm:$0xff]
        %v3458 = vld [vmem:[#allocation11 + $0x128] sm:$0xf]
        %v3459 = vld [vmem:[#allocation11 + $0x12c] sm:$0xff]
        %v3460 = vld [vmem:[#allocation11 + $0x134] sm:$0xff]
        %v3461 = vld [vmem:[#allocation11 + $0x13c] sm:$0xf]
        %v3462 = vld [vmem:[#allocation11 + $0x140] sm:$0xff]
        %v3463 = vld [vmem:[#allocation11 + $0x148] sm:$0xff]
        %v3464 = vld [vmem:[#allocation11 + $0x150] sm:$0xf]
        %v3465 = vld [vmem:[#allocation11 + $0x154] sm:$0xff]
        %v3466 = vld [vmem:[#allocation11 + $0x15c] sm:$0xff]
        %v3467 = vld [vmem:[#allocation11 + $0x164] sm:$0xf]
        %v3468 = vld [vmem:[#allocation11 + $0x168] sm:$0xff]
        %v3469 = vld [vmem:[#allocation11 + $0x170] sm:$0xff]
        %v3470 = vld [vmem:[#allocation11 + $0x178] sm:$0xf]
        %v3471 = vld [vmem:[#allocation11 + $0x17c] sm:$0xff]
        %v3472 = vld [vmem:[#allocation11 + $0x184] sm:$0xff]
        %v3473 = vld [vmem:[#allocation11 + $0x18c] sm:$0xf]
        %v3474 = vld [vmem:[#allocation11 + $0x190] sm:$0xff]
        %v3475 = vld [vmem:[#allocation11 + $0x198] sm:$0xff]
        %v3476 = vld [vmem:[#allocation11 + $0x1a0] sm:$0xf]
        %v3477 = vld [vmem:[#allocation11 + $0x1a4] sm:$0xff]
        %v3478 = vld [vmem:[#allocation11 + $0x1ac] sm:$0xff]
        %v3479 = vld [vmem:[#allocation11 + $0x1b4] sm:$0xf]
        %v3480 = vld [vmem:[#allocation11 + $0x1b8] sm:$0xff]
        %v3481 = vld [vmem:[#allocation11 + $0x1c0] sm:$0xff]
        %v3482 = vld [vmem:[#allocation11 + $0x1c8] sm:$0xf]
        %v3483 = vld [vmem:[#allocation11 + $0x1cc] sm:$0xff]
        %v3484 = vld [vmem:[#allocation11 + $0x1d4] sm:$0xff]
        %v3485 = vld [vmem:[#allocation11 + $0x1dc] sm:$0xf]
        %v3486 = vld [vmem:[#allocation11 + $0x1e0] sm:$0xff]
        %v3487 = vld [vmem:[#allocation11 + $0x1e8] sm:$0xff]
        %v3488 = vld [vmem:[#allocation11 + $0x1f0] sm:$0xf]
        %v3489 = vld [vmem:[#allocation11 + $0x1f4] sm:$0xff]
        %v3490 = vld [vmem:[#allocation11 + $0x1fc] sm:$0xff]
        %v3491 = vld [vmem:[#allocation11 + $0x204] sm:$0xf]
        %v3492 = vld [vmem:[#allocation11 + $0x208] sm:$0xff]
        %v3493 = vld [vmem:[#allocation11 + $0x210] sm:$0xff]
        %v3494 = vld [vmem:[#allocation11 + $0x218] sm:$0xf]
        %v3495 = vld [vmem:[#allocation11 + $0x21c] sm:$0xff]
        %v3496 = vld [vmem:[#allocation11 + $0x224] sm:$0xff]
        %v3497 = vld [vmem:[#allocation11 + $0x22c] sm:$0xf]
        %v3498 = vld [vmem:[#allocation11 + $0x230] sm:$0xff]
        %v3499 = vld [vmem:[#allocation11 + $0x238] sm:$0xff]
        %v3500 = vld [vmem:[#allocation11 + $0x240] sm:$0xf]
        %v3501 = vld [vmem:[#allocation11 + $0x244] sm:$0xff]
        %v3502 = vld [vmem:[#allocation11 + $0x24c] sm:$0xff]
        %v3503 = vld [vmem:[#allocation11 + $0x254] sm:$0xf]
        %v3504 = vld [vmem:[#allocation11 + $0x258] sm:$0xff]
        %v3505 = vld [vmem:[#allocation11 + $0x260] sm:$0xff]
        %v3506 = vld [vmem:[#allocation11 + $0x268] sm:$0xf]
        %v3507 = vld [vmem:[#allocation11 + $0x26c] sm:$0xff]
        %v3508 = vld [vmem:[#allocation11 + $0x274] sm:$0xff]
        %v3509 = vld [vmem:[#allocation11 + $0x27c] sm:$0xf]
        %v3510 = vld [vmem:[%s7] sm:$0x1f]
        %v3512 = vlaneseq
        %v3513 = vshrl.u32 %v3512, 7
        %v3514 = vsub.s32 0, %v3513
        %v3515 = vrot.slane %v3510, %v3514
        %v3516 = vlaneseq
        %v3517 = vshrl.u32 %v3516, 7
        %v3518 = vsub.s32 1, %v3517
        %v3519 = vrot.slane %v3510, %v3518
        %v3520 = vlaneseq
        %v3521 = vshrl.u32 %v3520, 7
        %v3522 = vsub.s32 2, %v3521
        %v3523 = vrot.slane %v3510, %v3522
        %v3524 = vlaneseq
        %v3525 = vshrl.u32 %v3524, 7
        %v3526 = vsub.s32 3, %v3525
        %v3527 = vrot.slane %v3510, %v3526
        %v3528 = vlaneseq
        %v3529 = vshrl.u32 %v3528, 7
        %v3530 = vsub.s32 4, %v3529
        %v3531 = vrot.slane %v3510, %v3530
        %v3633 = vunpack.c.l.b16 %v3414
        %v3634 = vunpack.c.h.b16 %v3414
        %v3635 = vunpack.c.l.b16 %v3415
        %v3636 = vunpack.c.h.b16 %v3415
        %v3637 = vunpack.c.l.b16 %v3416
        %v3638 = vunpack.c.l.b16 %v3417
        %v3639 = vunpack.c.h.b16 %v3417
        %v3640 = vunpack.c.l.b16 %v3418
        %v3641 = vunpack.c.h.b16 %v3418
        %v3642 = vunpack.c.l.b16 %v3419
        %v3643 = vunpack.c.l.b16 %v3420
        %v3644 = vunpack.c.h.b16 %v3420
        %v3645 = vunpack.c.l.b16 %v3421
        %v3646 = vunpack.c.h.b16 %v3421
        %v3647 = vunpack.c.l.b16 %v3422
        %v3648 = vunpack.c.l.b16 %v3423
        %v3649 = vunpack.c.h.b16 %v3423
        %v3650 = vunpack.c.l.b16 %v3424
        %v3651 = vunpack.c.h.b16 %v3424
        %v3652 = vunpack.c.l.b16 %v3425
        %v3653 = vunpack.c.l.b16 %v3426
        %v3654 = vunpack.c.h.b16 %v3426
        %v3655 = vunpack.c.l.b16 %v3427
        %v3656 = vunpack.c.h.b16 %v3427
        %v3657 = vunpack.c.l.b16 %v3428
        %v3658 = vunpack.c.l.b16 %v3429
        %v3659 = vunpack.c.h.b16 %v3429
        %v3660 = vunpack.c.l.b16 %v3430
        %v3661 = vunpack.c.h.b16 %v3430
        %v3662 = vunpack.c.l.b16 %v3431
        %v3663 = vunpack.c.l.b16 %v3432
        %v3664 = vunpack.c.h.b16 %v3432
        %v3665 = vunpack.c.l.b16 %v3433
        %v3666 = vunpack.c.h.b16 %v3433
        %v3667 = vunpack.c.l.b16 %v3434
        %v3668 = vunpack.c.l.b16 %v3435
        %v3669 = vunpack.c.h.b16 %v3435
        %v3670 = vunpack.c.l.b16 %v3436
        %v3671 = vunpack.c.h.b16 %v3436
        %v3672 = vunpack.c.l.b16 %v3437
        %v3673 = vunpack.c.l.b16 %v3438
        %v3674 = vunpack.c.h.b16 %v3438
        %v3675 = vunpack.c.l.b16 %v3439
        %v3676 = vunpack.c.h.b16 %v3439
        %v3677 = vunpack.c.l.b16 %v3440
        %v3678 = vunpack.c.l.b16 %v3441
        %v3679 = vunpack.c.h.b16 %v3441
        %v3680 = vunpack.c.l.b16 %v3442
        %v3681 = vunpack.c.h.b16 %v3442
        %v3682 = vunpack.c.l.b16 %v3443
        %v3683 = vunpack.c.l.b16 %v3444
        %v3684 = vunpack.c.h.b16 %v3444
        %v3685 = vunpack.c.l.b16 %v3445
        %v3686 = vunpack.c.h.b16 %v3445
        %v3687 = vunpack.c.l.b16 %v3446
        %v3688 = vunpack.c.l.b16 %v3447
        %v3689 = vunpack.c.h.b16 %v3447
        %v3690 = vunpack.c.l.b16 %v3448
        %v3691 = vunpack.c.h.b16 %v3448
        %v3692 = vunpack.c.l.b16 %v3449
        %v3693 = vunpack.c.l.b16 %v3450
        %v3694 = vunpack.c.h.b16 %v3450
        %v3695 = vunpack.c.l.b16 %v3451
        %v3696 = vunpack.c.h.b16 %v3451
        %v3697 = vunpack.c.l.b16 %v3452
        %v3698 = vunpack.c.l.b16 %v3453
        %v3699 = vunpack.c.h.b16 %v3453
        %v3700 = vunpack.c.l.b16 %v3454
        %v3701 = vunpack.c.h.b16 %v3454
        %v3702 = vunpack.c.l.b16 %v3455
        %v3703 = vunpack.c.l.b16 %v3456
        %v3704 = vunpack.c.h.b16 %v3456
        %v3705 = vunpack.c.l.b16 %v3457
        %v3706 = vunpack.c.h.b16 %v3457
        %v3707 = vunpack.c.l.b16 %v3458
        %v3708 = vunpack.c.l.b16 %v3459
        %v3709 = vunpack.c.h.b16 %v3459
        %v3710 = vunpack.c.l.b16 %v3460
        %v3711 = vunpack.c.h.b16 %v3460
        %v3712 = vunpack.c.l.b16 %v3461
        %v3713 = vunpack.c.l.b16 %v3462
        %v3714 = vunpack.c.h.b16 %v3462
        %v3715 = vunpack.c.l.b16 %v3463
        %v3716 = vunpack.c.h.b16 %v3463
        %v3717 = vunpack.c.l.b16 %v3464
        %v3718 = vunpack.c.l.b16 %v3465
        %v3719 = vunpack.c.h.b16 %v3465
        %v3720 = vunpack.c.l.b16 %v3466
        %v3721 = vunpack.c.h.b16 %v3466
        %v3722 = vunpack.c.l.b16 %v3467
        %v3723 = vunpack.c.l.b16 %v3468
        %v3724 = vunpack.c.h.b16 %v3468
        %v3725 = vunpack.c.l.b16 %v3469
        %v3726 = vunpack.c.h.b16 %v3469
        %v3727 = vunpack.c.l.b16 %v3470
        %v3728 = vunpack.c.l.b16 %v3471
        %v3729 = vunpack.c.h.b16 %v3471
        %v3730 = vunpack.c.l.b16 %v3472
        %v3731 = vunpack.c.h.b16 %v3472
        %v3732 = vunpack.c.l.b16 %v3473
        %v3733 = vunpack.c.l.b16 %v3474
        %v3734 = vunpack.c.h.b16 %v3474
        %v3735 = vunpack.c.l.b16 %v3475
        %v3736 = vunpack.c.h.b16 %v3475
        %v3737 = vunpack.c.l.b16 %v3476
        %v3738 = vunpack.c.l.b16 %v3477
        %v3739 = vunpack.c.h.b16 %v3477
        %v3740 = vunpack.c.l.b16 %v3478
        %v3741 = vunpack.c.h.b16 %v3478
        %v3742 = vunpack.c.l.b16 %v3479
        %v3743 = vunpack.c.l.b16 %v3480
        %v3744 = vunpack.c.h.b16 %v3480
        %v3745 = vunpack.c.l.b16 %v3481
        %v3746 = vunpack.c.h.b16 %v3481
        %v3747 = vunpack.c.l.b16 %v3482
        %v3748 = vunpack.c.l.b16 %v3483
        %v3749 = vunpack.c.h.b16 %v3483
        %v3750 = vunpack.c.l.b16 %v3484
        %v3751 = vunpack.c.h.b16 %v3484
        %v3752 = vunpack.c.l.b16 %v3485
        %v3753 = vunpack.c.l.b16 %v3486
        %v3754 = vunpack.c.h.b16 %v3486
        %v3755 = vunpack.c.l.b16 %v3487
        %v3756 = vunpack.c.h.b16 %v3487
        %v3757 = vunpack.c.l.b16 %v3488
        %v3758 = vunpack.c.l.b16 %v3489
        %v3759 = vunpack.c.h.b16 %v3489
        %v3760 = vunpack.c.l.b16 %v3490
        %v3761 = vunpack.c.h.b16 %v3490
        %v3762 = vunpack.c.l.b16 %v3491
        %v3763 = vunpack.c.l.b16 %v3492
        %v3764 = vunpack.c.h.b16 %v3492
        %v3765 = vunpack.c.l.b16 %v3493
        %v3766 = vunpack.c.h.b16 %v3493
        %v3767 = vunpack.c.l.b16 %v3494
        %v3768 = vunpack.c.l.b16 %v3495
        %v3769 = vunpack.c.h.b16 %v3495
        %v3770 = vunpack.c.l.b16 %v3496
        %v3771 = vunpack.c.h.b16 %v3496
        %v3772 = vunpack.c.l.b16 %v3497
        %v3773 = vunpack.c.l.b16 %v3498
        %v3774 = vunpack.c.h.b16 %v3498
        %v3775 = vunpack.c.l.b16 %v3499
        %v3776 = vunpack.c.h.b16 %v3499
        %v3777 = vunpack.c.l.b16 %v3500
        %v3778 = vunpack.c.l.b16 %v3501
        %v3779 = vunpack.c.h.b16 %v3501
        %v3780 = vunpack.c.l.b16 %v3502
        %v3781 = vunpack.c.h.b16 %v3502
        %v3782 = vunpack.c.l.b16 %v3503
        %v3783 = vunpack.c.l.b16 %v3504
        %v3784 = vunpack.c.h.b16 %v3504
        %v3785 = vunpack.c.l.b16 %v3505
        %v3786 = vunpack.c.h.b16 %v3505
        %v3787 = vunpack.c.l.b16 %v3506
        %v3788 = vunpack.c.l.b16 %v3507
        %v3789 = vunpack.c.h.b16 %v3507
        %v3790 = vunpack.c.l.b16 %v3508
        %v3791 = vunpack.c.h.b16 %v3508
        %v3792 = vunpack.c.l.b16 %v3509
        %v3793 = vpack.c.b16 %v3638, %v3633
        %v3794 = vpack.c.b16 %v3639, %v3634
        %v3795 = vpack.c.b16 %v3640, %v3635
        %v3796 = vpack.c.b16 %v3641, %v3636
        %v3797 = vpack.c.b16 %v3642, %v3637
        %v3798 = vpack.c.b16 %v3648, %v3643
        %v3799 = vpack.c.b16 %v3649, %v3644
        %v3800 = vpack.c.b16 %v3650, %v3645
        %v3801 = vpack.c.b16 %v3651, %v3646
        %v3802 = vpack.c.b16 %v3652, %v3647
        %v3803 = vpack.c.b16 %v3658, %v3653
        %v3804 = vpack.c.b16 %v3659, %v3654
        %v3805 = vpack.c.b16 %v3660, %v3655
        %v3806 = vpack.c.b16 %v3661, %v3656
        %v3807 = vpack.c.b16 %v3662, %v3657
        %v3808 = vpack.c.b16 %v3668, %v3663
        %v3809 = vpack.c.b16 %v3669, %v3664
        %v3810 = vpack.c.b16 %v3670, %v3665
        %v3811 = vpack.c.b16 %v3671, %v3666
        %v3812 = vpack.c.b16 %v3672, %v3667
        %v3813 = vpack.c.b16 %v3678, %v3673
        %v3814 = vpack.c.b16 %v3679, %v3674
        %v3815 = vpack.c.b16 %v3680, %v3675
        %v3816 = vpack.c.b16 %v3681, %v3676
        %v3817 = vpack.c.b16 %v3682, %v3677
        %v3818 = vpack.c.b16 %v3688, %v3683
        %v3819 = vpack.c.b16 %v3689, %v3684
        %v3820 = vpack.c.b16 %v3690, %v3685
        %v3821 = vpack.c.b16 %v3691, %v3686
        %v3822 = vpack.c.b16 %v3692, %v3687
        %v3823 = vpack.c.b16 %v3698, %v3693
        %v3824 = vpack.c.b16 %v3699, %v3694
        %v3825 = vpack.c.b16 %v3700, %v3695
        %v3826 = vpack.c.b16 %v3701, %v3696
        %v3827 = vpack.c.b16 %v3702, %v3697
        %v3828 = vpack.c.b16 %v3708, %v3703
        %v3829 = vpack.c.b16 %v3709, %v3704
        %v3830 = vpack.c.b16 %v3710, %v3705
        %v3831 = vpack.c.b16 %v3711, %v3706
        %v3832 = vpack.c.b16 %v3712, %v3707
        %v3833 = vpack.c.b16 %v3718, %v3713
        %v3834 = vpack.c.b16 %v3719, %v3714
        %v3835 = vpack.c.b16 %v3720, %v3715
        %v3836 = vpack.c.b16 %v3721, %v3716
        %v3837 = vpack.c.b16 %v3722, %v3717
        %v3838 = vpack.c.b16 %v3728, %v3723
        %v3839 = vpack.c.b16 %v3729, %v3724
        %v3840 = vpack.c.b16 %v3730, %v3725
        %v3841 = vpack.c.b16 %v3731, %v3726
        %v3842 = vpack.c.b16 %v3732, %v3727
        %v3843 = vpack.c.b16 %v3738, %v3733
        %v3844 = vpack.c.b16 %v3739, %v3734
        %v3845 = vpack.c.b16 %v3740, %v3735
        %v3846 = vpack.c.b16 %v3741, %v3736
        %v3847 = vpack.c.b16 %v3742, %v3737
        %v3848 = vpack.c.b16 %v3748, %v3743
        %v3849 = vpack.c.b16 %v3749, %v3744
        %v3850 = vpack.c.b16 %v3750, %v3745
        %v3851 = vpack.c.b16 %v3751, %v3746
        %v3852 = vpack.c.b16 %v3752, %v3747
        %v3853 = vpack.c.b16 %v3758, %v3753
        %v3854 = vpack.c.b16 %v3759, %v3754
        %v3855 = vpack.c.b16 %v3760, %v3755
        %v3856 = vpack.c.b16 %v3761, %v3756
        %v3857 = vpack.c.b16 %v3762, %v3757
        %v3858 = vpack.c.b16 %v3768, %v3763
        %v3859 = vpack.c.b16 %v3769, %v3764
        %v3860 = vpack.c.b16 %v3770, %v3765
        %v3861 = vpack.c.b16 %v3771, %v3766
        %v3862 = vpack.c.b16 %v3772, %v3767
        %v3863 = vpack.c.b16 %v3778, %v3773
        %v3864 = vpack.c.b16 %v3779, %v3774
        %v3865 = vpack.c.b16 %v3780, %v3775
        %v3866 = vpack.c.b16 %v3781, %v3776
        %v3867 = vpack.c.b16 %v3782, %v3777
        %v3868 = vpack.c.b16 %v3788, %v3783
        %v3869 = vpack.c.b16 %v3789, %v3784
        %v3870 = vpack.c.b16 %v3790, %v3785
        %v3871 = vpack.c.b16 %v3791, %v3786
        %v3872 = vpack.c.b16 %v3792, %v3787
        %3953 = vmatprep.subr.bf16.mxu0 %v3829
        %3954 = vmatpush1.bf16.msra.mxu0 %v3828
        %3955 = vmatprep.subr.bf16.mxu0 %v3824
        %3956 = vmatpush1.bf16.msra.mxu0 %v3823
        %3957 = vmatprep.subr.bf16.mxu0 %v3819
        %3958 = vmatpush1.bf16.msra.mxu0 %v3818
        %3959 = vmatprep.subr.bf16.mxu0 %v3814
        %3960 = vmatpush1.bf16.msra.mxu0 %v3813
        %3961 = vmatprep.subr.bf16.mxu0 %v3809
        %3962 = vmatpush1.bf16.msra.mxu0 %v3808
        %3963 = vmatprep.subr.bf16.mxu0 %v3804
        %3964 = vmatpush1.bf16.msra.mxu0 %v3803
        %3965 = vmatprep.subr.bf16.mxu0 %v3799
        %3966 = vmatpush1.bf16.msra.mxu0 %v3798
        %3967 = vmatprep.subr.bf16.mxu0 %v3794
        %3968 = vmatpush1.bf16.msra.mxu0 %v3793
        %3969 = vmatprep.subr.bf16.mxu0 %v3869
        %3970 = vmatpush2.bf16.msra.mxu0 %v3868
        %3971 = vmatprep.subr.bf16.mxu0 %v3864
        %3972 = vmatpush2.bf16.msra.mxu0 %v3863
        %3973 = vmatprep.subr.bf16.mxu0 %v3859
        %3974 = vmatpush2.bf16.msra.mxu0 %v3858
        %3975 = vmatprep.subr.bf16.mxu0 %v3854
        %3976 = vmatpush2.bf16.msra.mxu0 %v3853
        %3977 = vmatprep.subr.bf16.mxu0 %v3849
        %3978 = vmatpush2.bf16.msra.mxu0 %v3848
        %3979 = vmatprep.subr.bf16.mxu0 %v3844
        %3980 = vmatpush2.bf16.msra.mxu0 %v3843
        %3981 = vmatprep.subr.bf16.mxu0 %v3839
        %3982 = vmatpush2.bf16.msra.mxu0 %v3838
        %3983 = vmatprep.subr.bf16.mxu0 %v3834
        %3984 = vmatpush2.bf16.msra.mxu0 %v3833
        %3985 = vmatprep.mubr.bf16.mxu0 %v3395
        %3986 = vmatmul.mubr.bf16.gmra.mxu0 %v3394
        %v3987 = vpop.f32.mrf.mxu0
        %v3988 = vadd.f32 %v3515, %v3987
        %v3989 = vpop.f32.mrf.mxu0
        %v3990 = vadd.f32 %v3519, %v3989
        %v3991 = vpop.f32.mrf.mxu0
        %v3992 = vadd.f32 %v3515, %v3991
        %v3993 = vpop.f32.mrf.mxu0
        %v3994 = vadd.f32 %v3519, %v3993
        %3995 = vmatprep.mubr.bf16.mxu0 %v3397
        %3996 = vmatmul.mubr.bf16.gmra.mxu0 %v3396
        %v3997 = vpop.f32.mrf.mxu0
        %v3998 = vadd.f32 %v3515, %v3997
        %v3999 = vpop.f32.mrf.mxu0
        %v4000 = vadd.f32 %v3519, %v3999
        %v4001 = vpop.f32.mrf.mxu0
        %v4002 = vadd.f32 %v3515, %v4001
        %v4003 = vpop.f32.mrf.mxu0
        %v4004 = vadd.f32 %v3519, %v4003
        %4005 = vmatprep.mubr.bf16.mxu0 %v3399
        %4006 = vmatmul.mubr.bf16.gmra.mxu0 %v3398
        %v4007 = vpop.f32.mrf.mxu0
        %v4008 = vadd.f32 %v3515, %v4007
        %v4009 = vpop.f32.mrf.mxu0
        %v4010 = vadd.f32 %v3519, %v4009
        %v4011 = vpop.f32.mrf.mxu0
        %v4012 = vadd.f32 %v3515, %v4011
        %v4013 = vpop.f32.mrf.mxu0
        %v4014 = vadd.f32 %v3519, %v4013
        %4015 = vmatprep.mubr.bf16.mxu0 %v3401
        %4016 = vmatmul.mubr.bf16.gmra.mxu0 %v3400
        %v4017 = vpop.f32.mrf.mxu0
        %v4018 = vadd.f32 %v3515, %v4017
        %v4019 = vpop.f32.mrf.mxu0
        %v4020 = vadd.f32 %v3519, %v4019
        %v4021 = vpop.f32.mrf.mxu0
        %v4022 = vadd.f32 %v3515, %v4021
        %v4023 = vpop.f32.mrf.mxu0
        %v4024 = vadd.f32 %v3519, %v4023
        %4025 = vmatprep.mubr.bf16.mxu0 %v3403
        %4026 = vmatmul.mubr.bf16.gmra.mxu0 %v3402
        %v4027 = vpop.f32.mrf.mxu0
        %v4028 = vadd.f32 %v3515, %v4027
        %v4029 = vpop.f32.mrf.mxu0
        %v4030 = vadd.f32 %v3519, %v4029
        %v4031 = vpop.f32.mrf.mxu0
        %v4032 = vadd.f32 %v3515, %v4031
        %v4033 = vpop.f32.mrf.mxu0
        %v4034 = vadd.f32 %v3519, %v4033
        %4035 = vmatprep.mubr.bf16.mxu0 %v3405
        %4036 = vmatmul.mubr.bf16.gmra.mxu0 %v3404
        %v4037 = vpop.f32.mrf.mxu0
        %v4038 = vadd.f32 %v3515, %v4037
        %v4039 = vpop.f32.mrf.mxu0
        %v4040 = vadd.f32 %v3519, %v4039
        %v4041 = vpop.f32.mrf.mxu0
        %v4042 = vadd.f32 %v3515, %v4041
        %v4043 = vpop.f32.mrf.mxu0
        %v4044 = vadd.f32 %v3519, %v4043
        %4045 = vmatprep.mubr.bf16.mxu0 %v3407
        %4046 = vmatmul.mubr.bf16.gmra.mxu0 %v3406
        %v4047 = vpop.f32.mrf.mxu0
        %v4048 = vadd.f32 %v3515, %v4047
        %v4049 = vpop.f32.mrf.mxu0
        %v4050 = vadd.f32 %v3519, %v4049
        %v4051 = vpop.f32.mrf.mxu0
        %v4052 = vadd.f32 %v3515, %v4051
        %v4053 = vpop.f32.mrf.mxu0
        %v4054 = vadd.f32 %v3519, %v4053
        %4055 = vmatprep.mubr.bf16.mxu0 %v3409
        %4056 = vmatmul.mubr.bf16.gmra.mxu0 %v3408
        %v4057 = vpop.f32.mrf.mxu0
        %v4058 = vadd.f32 %v3515, %v4057
        %v4059 = vpop.f32.mrf.mxu0
        %v4060 = vadd.f32 %v3519, %v4059
        %v4061 = vpop.f32.mrf.mxu0
        %v4062 = vadd.f32 %v3515, %v4061
        %v4063 = vpop.f32.mrf.mxu0
        %v4064 = vadd.f32 %v3519, %v4063
        %4065 = vmatprep.mubr.bf16.mxu0 %v3411
        %4066 = vmatmul.mubr.bf16.gmra.mxu0 %v3410
        %v4067 = vpop.f32.mrf.mxu0
        %v4068 = vadd.f32 %v3515, %v4067
        %v4069 = vpop.f32.mrf.mxu0
        %v4070 = vadd.f32 %v3519, %v4069
        %v4071 = vpop.f32.mrf.mxu0
        %v4072 = vadd.f32 %v3515, %v4071
        %v4073 = vpop.f32.mrf.mxu0
        %v4074 = vadd.f32 %v3519, %v4073
        %4075 = vmatprep.mubr.bf16.mxu0 %v3413
        %4076 = vmatmul.mubr.bf16.gmra.mxu0 %v3412
        %v4077 = vpop.f32.mrf.mxu0
        %v4078 = vadd.f32 %v3515, %v4077
        %v4079 = vpop.f32.mrf.mxu0
        %v4080 = vadd.f32 %v3519, %v4079
        %v4081 = vpop.f32.mrf.mxu0
        %v4082 = vpop.f32.mrf.mxu0
        %4083 = vdwg.mxu0
        %4084 = vmatprep.subr.bf16.mxu0 %v3831
        %4085 = vmatpush1.bf16.msra.mxu0 %v3830
        %4086 = vmatprep.subr.bf16.mxu0 %v3826
        %4087 = vmatpush1.bf16.msra.mxu0 %v3825
        %4088 = vmatprep.subr.bf16.mxu0 %v3821
        %4089 = vmatpush1.bf16.msra.mxu0 %v3820
        %4090 = vmatprep.subr.bf16.mxu0 %v3816
        %4091 = vmatpush1.bf16.msra.mxu0 %v3815
        %4092 = vmatprep.subr.bf16.mxu0 %v3811
        %4093 = vmatpush1.bf16.msra.mxu0 %v3810
        %4094 = vmatprep.subr.bf16.mxu0 %v3806
        %4095 = vmatpush1.bf16.msra.mxu0 %v3805
        %4096 = vmatprep.subr.bf16.mxu0 %v3801
        %4097 = vmatpush1.bf16.msra.mxu0 %v3800
        %4098 = vmatprep.subr.bf16.mxu0 %v3796
        %4099 = vmatpush1.bf16.msra.mxu0 %v3795
        %4100 = vmatprep.subr.bf16.mxu0 %v3871
        %4101 = vmatpush2.bf16.msra.mxu0 %v3870
        %4102 = vmatprep.subr.bf16.mxu0 %v3866
        %4103 = vmatpush2.bf16.msra.mxu0 %v3865
        %4104 = vmatprep.subr.bf16.mxu0 %v3861
        %4105 = vmatpush2.bf16.msra.mxu0 %v3860
        %4106 = vmatprep.subr.bf16.mxu0 %v3856
        %4107 = vmatpush2.bf16.msra.mxu0 %v3855
        %4108 = vmatprep.subr.bf16.mxu0 %v3851
        %4109 = vmatpush2.bf16.msra.mxu0 %v3850
        %4110 = vmatprep.subr.bf16.mxu0 %v3846
        %4111 = vmatpush2.bf16.msra.mxu0 %v3845
        %4112 = vmatprep.subr.bf16.mxu0 %v3841
        %4113 = vmatpush2.bf16.msra.mxu0 %v3840
        %4114 = vmatprep.subr.bf16.mxu0 %v3836
        %4115 = vmatpush2.bf16.msra.mxu0 %v3835
        %4116 = vmatprep.mubr.bf16.mxu0 %v3395
        %4117 = vmatmul.mubr.bf16.gmra.mxu0 %v3394
        %v4118 = vpop.f32.mrf.mxu0
        %v4119 = vadd.f32 %v3523, %v4118
        %v4120 = vpop.f32.mrf.mxu0
        %v4121 = vadd.f32 %v3527, %v4120
        %v4122 = vpop.f32.mrf.mxu0
        %v4123 = vadd.f32 %v3523, %v4122
        %v4124 = vpop.f32.mrf.mxu0
        %v4125 = vadd.f32 %v3527, %v4124
        %4126 = vmatprep.mubr.bf16.mxu0 %v3397
        %4127 = vmatmul.mubr.bf16.gmra.mxu0 %v3396
        %v4128 = vpop.f32.mrf.mxu0
        %v4129 = vadd.f32 %v3523, %v4128
        %v4130 = vpop.f32.mrf.mxu0
        %v4131 = vadd.f32 %v3527, %v4130
        %v4132 = vpop.f32.mrf.mxu0
        %v4133 = vadd.f32 %v3523, %v4132
        %v4134 = vpop.f32.mrf.mxu0
        %v4135 = vadd.f32 %v3527, %v4134
        %4136 = vmatprep.mubr.bf16.mxu0 %v3399
        %4137 = vmatmul.mubr.bf16.gmra.mxu0 %v3398
        %v4138 = vpop.f32.mrf.mxu0
        %v4139 = vadd.f32 %v3523, %v4138
        %v4140 = vpop.f32.mrf.mxu0
        %v4141 = vadd.f32 %v3527, %v4140
        %v4142 = vpop.f32.mrf.mxu0
        %v4143 = vadd.f32 %v3523, %v4142
        %v4144 = vpop.f32.mrf.mxu0
        %v4145 = vadd.f32 %v3527, %v4144
        %4146 = vmatprep.mubr.bf16.mxu0 %v3401
        %4147 = vmatmul.mubr.bf16.gmra.mxu0 %v3400
        %v4148 = vpop.f32.mrf.mxu0
        %v4149 = vadd.f32 %v3523, %v4148
        %v4150 = vpop.f32.mrf.mxu0
        %v4151 = vadd.f32 %v3527, %v4150
        %v4152 = vpop.f32.mrf.mxu0
        %v4153 = vadd.f32 %v3523, %v4152
        %v4154 = vpop.f32.mrf.mxu0
        %v4155 = vadd.f32 %v3527, %v4154
        %4156 = vmatprep.mubr.bf16.mxu0 %v3403
        %4157 = vmatmul.mubr.bf16.gmra.mxu0 %v3402
        %v4158 = vpop.f32.mrf.mxu0
        %v4159 = vadd.f32 %v3523, %v4158
        %v4160 = vpop.f32.mrf.mxu0
        %v4161 = vadd.f32 %v3527, %v4160
        %v4162 = vpop.f32.mrf.mxu0
        %v4163 = vadd.f32 %v3523, %v4162
        %v4164 = vpop.f32.mrf.mxu0
        %v4165 = vadd.f32 %v3527, %v4164
        %4166 = vmatprep.mubr.bf16.mxu0 %v3405
        %4167 = vmatmul.mubr.bf16.gmra.mxu0 %v3404
        %v4168 = vpop.f32.mrf.mxu0
        %v4169 = vadd.f32 %v3523, %v4168
        %v4170 = vpop.f32.mrf.mxu0
        %v4171 = vadd.f32 %v3527, %v4170
        %v4172 = vpop.f32.mrf.mxu0
        %v4173 = vadd.f32 %v3523, %v4172
        %v4174 = vpop.f32.mrf.mxu0
        %v4175 = vadd.f32 %v3527, %v4174
        %4176 = vmatprep.mubr.bf16.mxu0 %v3407
        %4177 = vmatmul.mubr.bf16.gmra.mxu0 %v3406
        %v4178 = vpop.f32.mrf.mxu0
        %v4179 = vadd.f32 %v3523, %v4178
        %v4180 = vpop.f32.mrf.mxu0
        %v4181 = vadd.f32 %v3527, %v4180
        %v4182 = vpop.f32.mrf.mxu0
        %v4183 = vadd.f32 %v3523, %v4182
        %v4184 = vpop.f32.mrf.mxu0
        %v4185 = vadd.f32 %v3527, %v4184
        %4186 = vmatprep.mubr.bf16.mxu0 %v3409
        %4187 = vmatmul.mubr.bf16.gmra.mxu0 %v3408
        %v4188 = vpop.f32.mrf.mxu0
        %v4189 = vadd.f32 %v3523, %v4188
        %v4190 = vpop.f32.mrf.mxu0
        %v4191 = vadd.f32 %v3527, %v4190
        %v4192 = vpop.f32.mrf.mxu0
        %v4193 = vadd.f32 %v3523, %v4192
        %v4194 = vpop.f32.mrf.mxu0
        %v4195 = vadd.f32 %v3527, %v4194
        %4196 = vmatprep.mubr.bf16.mxu0 %v3411
        %4197 = vmatmul.mubr.bf16.gmra.mxu0 %v3410
        %v4198 = vpop.f32.mrf.mxu0
        %v4199 = vadd.f32 %v3523, %v4198
        %v4200 = vpop.f32.mrf.mxu0
        %v4201 = vadd.f32 %v3527, %v4200
        %v4202 = vpop.f32.mrf.mxu0
        %v4203 = vadd.f32 %v3523, %v4202
        %v4204 = vpop.f32.mrf.mxu0
        %v4205 = vadd.f32 %v3527, %v4204
        %4206 = vmatprep.mubr.bf16.mxu0 %v3413
        %4207 = vmatmul.mubr.bf16.gmra.mxu0 %v3412
        %v4208 = vpop.f32.mrf.mxu0
        %v4209 = vadd.f32 %v3523, %v4208
        %v4210 = vpop.f32.mrf.mxu0
        %v4211 = vadd.f32 %v3527, %v4210
        %v4212 = vpop.f32.mrf.mxu0
        %v4213 = vpop.f32.mrf.mxu0
        %4214 = vdwg.mxu0
        %4215 = vmatprep.subr.bf16.mxu0 0
        %4216 = vmatpush1.bf16.msra.mxu0 %v3832
        %4217 = vmatprep.subr.bf16.mxu0 0
        %4218 = vmatpush1.bf16.msra.mxu0 %v3827
        %4219 = vmatprep.subr.bf16.mxu0 0
        %4220 = vmatpush1.bf16.msra.mxu0 %v3822
        %4221 = vmatprep.subr.bf16.mxu0 0
        %4222 = vmatpush1.bf16.msra.mxu0 %v3817
        %4223 = vmatprep.subr.bf16.mxu0 0
        %4224 = vmatpush1.bf16.msra.mxu0 %v3812
        %4225 = vmatprep.subr.bf16.mxu0 0
        %4226 = vmatpush1.bf16.msra.mxu0 %v3807
        %4227 = vmatprep.subr.bf16.mxu0 0
        %4228 = vmatpush1.bf16.msra.mxu0 %v3802
        %4229 = vmatprep.subr.bf16.mxu0 0
        %4230 = vmatpush1.bf16.msra.mxu0 %v3797
        %4231 = vmatprep.subr.bf16.mxu0 0
        %4232 = vmatpush2.bf16.msra.mxu0 %v3872
        %4233 = vmatprep.subr.bf16.mxu0 0
        %4234 = vmatpush2.bf16.msra.mxu0 %v3867
        %4235 = vmatprep.subr.bf16.mxu0 0
        %4236 = vmatpush2.bf16.msra.mxu0 %v3862
        %4237 = vmatprep.subr.bf16.mxu0 0
        %4238 = vmatpush2.bf16.msra.mxu0 %v3857
        %4239 = vmatprep.subr.bf16.mxu0 0
        %4240 = vmatpush2.bf16.msra.mxu0 %v3852
        %4241 = vmatprep.subr.bf16.mxu0 0
        %4242 = vmatpush2.bf16.msra.mxu0 %v3847
        %4243 = vmatprep.subr.bf16.mxu0 0
        %4244 = vmatpush2.bf16.msra.mxu0 %v3842
        %4245 = vmatprep.subr.bf16.mxu0 0
        %4246 = vmatpush2.bf16.msra.mxu0 %v3837
        %4247 = vmatprep.mubr.bf16.mxu0 %v3395
        %4248 = vmatmul.mubr.bf16.gmra.mxu0 %v3394
        %v4249 = vpop.f32.mrf.mxu0
        %v4250 = vadd.f32 %v3531, %v4249
        %v4251 = vpop.f32.mrf.mxu0
        %v4252 = vpop.f32.mrf.mxu0
        %v4253 = vadd.f32 %v3531, %v4252
        %v4254 = vpop.f32.mrf.mxu0
        %4255 = vmatprep.mubr.bf16.mxu0 %v3397
        %4256 = vmatmul.mubr.bf16.gmra.mxu0 %v3396
        %v4257 = vpop.f32.mrf.mxu0
        %v4258 = vadd.f32 %v3531, %v4257
        %v4259 = vpop.f32.mrf.mxu0
        %v4260 = vpop.f32.mrf.mxu0
        %v4261 = vadd.f32 %v3531, %v4260
        %v4262 = vpop.f32.mrf.mxu0
        %4263 = vmatprep.mubr.bf16.mxu0 %v3399
        %4264 = vmatmul.mubr.bf16.gmra.mxu0 %v3398
        %v4265 = vpop.f32.mrf.mxu0
        %v4266 = vadd.f32 %v3531, %v4265
        %v4267 = vpop.f32.mrf.mxu0
        %v4268 = vpop.f32.mrf.mxu0
        %v4269 = vadd.f32 %v3531, %v4268
        %v4270 = vpop.f32.mrf.mxu0
        %4271 = vmatprep.mubr.bf16.mxu0 %v3401
        %4272 = vmatmul.mubr.bf16.gmra.mxu0 %v3400
        %v4273 = vpop.f32.mrf.mxu0
        %v4274 = vadd.f32 %v3531, %v4273
        %v4275 = vpop.f32.mrf.mxu0
        %v4276 = vpop.f32.mrf.mxu0
        %v4277 = vadd.f32 %v3531, %v4276
        %v4278 = vpop.f32.mrf.mxu0
        %4279 = vmatprep.mubr.bf16.mxu0 %v3403
        %4280 = vmatmul.mubr.bf16.gmra.mxu0 %v3402
        %v4281 = vpop.f32.mrf.mxu0
        %v4282 = vadd.f32 %v3531, %v4281
        %v4283 = vpop.f32.mrf.mxu0
        %v4284 = vpop.f32.mrf.mxu0
        %v4285 = vadd.f32 %v3531, %v4284
        %v4286 = vpop.f32.mrf.mxu0
        %4287 = vmatprep.mubr.bf16.mxu0 %v3405
        %4288 = vmatmul.mubr.bf16.gmra.mxu0 %v3404
        %v4289 = vpop.f32.mrf.mxu0
        %v4290 = vadd.f32 %v3531, %v4289
        %v4291 = vpop.f32.mrf.mxu0
        %v4292 = vpop.f32.mrf.mxu0
        %v4293 = vadd.f32 %v3531, %v4292
        %v4294 = vpop.f32.mrf.mxu0
        %4295 = vmatprep.mubr.bf16.mxu0 %v3407
        %4296 = vmatmul.mubr.bf16.gmra.mxu0 %v3406
        %v4297 = vpop.f32.mrf.mxu0
        %v4298 = vadd.f32 %v3531, %v4297
        %v4299 = vpop.f32.mrf.mxu0
        %v4300 = vpop.f32.mrf.mxu0
        %v4301 = vadd.f32 %v3531, %v4300
        %v4302 = vpop.f32.mrf.mxu0
        %4303 = vmatprep.mubr.bf16.mxu0 %v3409
        %4304 = vmatmul.mubr.bf16.gmra.mxu0 %v3408
        %v4305 = vpop.f32.mrf.mxu0
        %v4306 = vadd.f32 %v3531, %v4305
        %v4307 = vpop.f32.mrf.mxu0
        %v4308 = vpop.f32.mrf.mxu0
        %v4309 = vadd.f32 %v3531, %v4308
        %v4310 = vpop.f32.mrf.mxu0
        %4311 = vmatprep.mubr.bf16.mxu0 %v3411
        %4312 = vmatmul.mubr.bf16.gmra.mxu0 %v3410
        %v4313 = vpop.f32.mrf.mxu0
        %v4314 = vadd.f32 %v3531, %v4313
        %v4315 = vpop.f32.mrf.mxu0
        %v4316 = vpop.f32.mrf.mxu0
        %v4317 = vadd.f32 %v3531, %v4316
        %v4318 = vpop.f32.mrf.mxu0
        %4319 = vmatprep.mubr.bf16.mxu0 %v3413
        %4320 = vmatmul.mubr.bf16.gmra.mxu0 %v3412
        %v4321 = vpop.f32.mrf.mxu0
        %v4322 = vadd.f32 %v3531, %v4321
        %v4323 = vpop.f32.mrf.mxu0
        %v4324 = vpop.f32.mrf.mxu0
        %v4325 = vpop.f32.mrf.mxu0
        %4326 = vdwg.mxu0
        %v4327 = vmax.f32 %v3988, 0.0
        %v4328 = vmax.f32 %v3990, 0.0
        %v4329 = vmax.f32 %v4119, 0.0
        %v4330 = vmax.f32 %v4121, 0.0
        %v4331 = vmax.f32 %v4250, 0.0
        %v4332 = vmax.f32 %v3992, 0.0
        %v4333 = vmax.f32 %v3994, 0.0
        %v4334 = vmax.f32 %v4123, 0.0
        %v4335 = vmax.f32 %v4125, 0.0
        %v4336 = vmax.f32 %v4253, 0.0
        %v4337 = vmax.f32 %v3998, 0.0
        %v4338 = vmax.f32 %v4000, 0.0
        %v4339 = vmax.f32 %v4129, 0.0
        %v4340 = vmax.f32 %v4131, 0.0
        %v4341 = vmax.f32 %v4258, 0.0
        %v4342 = vmax.f32 %v4002, 0.0
        %v4343 = vmax.f32 %v4004, 0.0
        %v4344 = vmax.f32 %v4133, 0.0
        %v4345 = vmax.f32 %v4135, 0.0
        %v4346 = vmax.f32 %v4261, 0.0
        %v4347 = vmax.f32 %v4008, 0.0
        %v4348 = vmax.f32 %v4010, 0.0
        %v4349 = vmax.f32 %v4139, 0.0
        %v4350 = vmax.f32 %v4141, 0.0
        %v4351 = vmax.f32 %v4266, 0.0
        %v4352 = vmax.f32 %v4012, 0.0
        %v4353 = vmax.f32 %v4014, 0.0
        %v4354 = vmax.f32 %v4143, 0.0
        %v4355 = vmax.f32 %v4145, 0.0
        %v4356 = vmax.f32 %v4269, 0.0
        %v4357 = vmax.f32 %v4018, 0.0
        %v4358 = vmax.f32 %v4020, 0.0
        %v4359 = vmax.f32 %v4149, 0.0
        %v4360 = vmax.f32 %v4151, 0.0
        %v4361 = vmax.f32 %v4274, 0.0
        %v4362 = vmax.f32 %v4022, 0.0
        %v4363 = vmax.f32 %v4024, 0.0
        %v4364 = vmax.f32 %v4153, 0.0
        %v4365 = vmax.f32 %v4155, 0.0
        %v4366 = vmax.f32 %v4277, 0.0
        %v4367 = vmax.f32 %v4028, 0.0
        %v4368 = vmax.f32 %v4030, 0.0
        %v4369 = vmax.f32 %v4159, 0.0
        %v4370 = vmax.f32 %v4161, 0.0
        %v4371 = vmax.f32 %v4282, 0.0
        %v4372 = vmax.f32 %v4032, 0.0
        %v4373 = vmax.f32 %v4034, 0.0
        %v4374 = vmax.f32 %v4163, 0.0
        %v4375 = vmax.f32 %v4165, 0.0
        %v4376 = vmax.f32 %v4285, 0.0
        %v4377 = vmax.f32 %v4038, 0.0
        %v4378 = vmax.f32 %v4040, 0.0
        %v4379 = vmax.f32 %v4169, 0.0
        %v4380 = vmax.f32 %v4171, 0.0
        %v4381 = vmax.f32 %v4290, 0.0
        %v4382 = vmax.f32 %v4042, 0.0
        %v4383 = vmax.f32 %v4044, 0.0
        %v4384 = vmax.f32 %v4173, 0.0
        %v4385 = vmax.f32 %v4175, 0.0
        %v4386 = vmax.f32 %v4293, 0.0
        %v4387 = vmax.f32 %v4048, 0.0
        %v4388 = vmax.f32 %v4050, 0.0
        %v4389 = vmax.f32 %v4179, 0.0
        %v4390 = vmax.f32 %v4181, 0.0
        %v4391 = vmax.f32 %v4298, 0.0
        %v4392 = vmax.f32 %v4052, 0.0
        %v4393 = vmax.f32 %v4054, 0.0
        %v4394 = vmax.f32 %v4183, 0.0
        %v4395 = vmax.f32 %v4185, 0.0
        %v4396 = vmax.f32 %v4301, 0.0
        %v4397 = vmax.f32 %v4058, 0.0
        %v4398 = vmax.f32 %v4060, 0.0
        %v4399 = vmax.f32 %v4189, 0.0
        %v4400 = vmax.f32 %v4191, 0.0
        %v4401 = vmax.f32 %v4306, 0.0
        %v4402 = vmax.f32 %v4062, 0.0
        %v4403 = vmax.f32 %v4064, 0.0
        %v4404 = vmax.f32 %v4193, 0.0
        %v4405 = vmax.f32 %v4195, 0.0
        %v4406 = vmax.f32 %v4309, 0.0
        %v4407 = vmax.f32 %v4068, 0.0
        %v4408 = vmax.f32 %v4070, 0.0
        %v4409 = vmax.f32 %v4199, 0.0
        %v4410 = vmax.f32 %v4201, 0.0
        %v4411 = vmax.f32 %v4314, 0.0
        %v4412 = vmax.f32 %v4072, 0.0
        %v4413 = vmax.f32 %v4074, 0.0
        %v4414 = vmax.f32 %v4203, 0.0
        %v4415 = vmax.f32 %v4205, 0.0
        %v4416 = vmax.f32 %v4317, 0.0
        %v4417 = vmax.f32 %v4078, 0.0
        %v4418 = vmax.f32 %v4080, 0.0
        %v4419 = vmax.f32 %v4209, 0.0
        %v4420 = vmax.f32 %v4211, 0.0
        %v4421 = vmax.f32 %v4322, 0.0
        %v4422 = vpack.c.bf16 %v4332, %v4327
        %v4423 = vpack.c.bf16 %v4333, %v4328
        %v4424 = vpack.c.bf16 %v4334, %v4329
        %v4425 = vpack.c.bf16 %v4335, %v4330
        %v4426 = vpack.c.bf16 %v4336, %v4331
        %v4427 = vpack.c.bf16 %v4342, %v4337
        %v4428 = vpack.c.bf16 %v4343, %v4338
        %v4429 = vpack.c.bf16 %v4344, %v4339
        %v4430 = vpack.c.bf16 %v4345, %v4340
        %v4431 = vpack.c.bf16 %v4346, %v4341
        %v4432 = vpack.c.bf16 %v4352, %v4347
        %v4433 = vpack.c.bf16 %v4353, %v4348
        %v4434 = vpack.c.bf16 %v4354, %v4349
        %v4435 = vpack.c.bf16 %v4355, %v4350
        %v4436 = vpack.c.bf16 %v4356, %v4351
        %v4437 = vpack.c.bf16 %v4362, %v4357
        %v4438 = vpack.c.bf16 %v4363, %v4358
        %v4439 = vpack.c.bf16 %v4364, %v4359
        %v4440 = vpack.c.bf16 %v4365, %v4360
        %v4441 = vpack.c.bf16 %v4366, %v4361
        %v4442 = vpack.c.bf16 %v4372, %v4367
        %v4443 = vpack.c.bf16 %v4373, %v4368
        %v4444 = vpack.c.bf16 %v4374, %v4369
        %v4445 = vpack.c.bf16 %v4375, %v4370
        %v4446 = vpack.c.bf16 %v4376, %v4371
        %v4447 = vpack.c.bf16 %v4382, %v4377
        %v4448 = vpack.c.bf16 %v4383, %v4378
        %v4449 = vpack.c.bf16 %v4384, %v4379
        %v4450 = vpack.c.bf16 %v4385, %v4380
        %v4451 = vpack.c.bf16 %v4386, %v4381
        %v4452 = vpack.c.bf16 %v4392, %v4387
        %v4453 = vpack.c.bf16 %v4393, %v4388
        %v4454 = vpack.c.bf16 %v4394, %v4389
        %v4455 = vpack.c.bf16 %v4395, %v4390
        %v4456 = vpack.c.bf16 %v4396, %v4391
        %v4457 = vpack.c.bf16 %v4402, %v4397
        %v4458 = vpack.c.bf16 %v4403, %v4398
        %v4459 = vpack.c.bf16 %v4404, %v4399
        %v4460 = vpack.c.bf16 %v4405, %v4400
        %v4461 = vpack.c.bf16 %v4406, %v4401
        %v4462 = vpack.c.bf16 %v4412, %v4407
        %v4463 = vpack.c.bf16 %v4413, %v4408
        %v4464 = vpack.c.bf16 %v4414, %v4409
        %v4465 = vpack.c.bf16 %v4415, %v4410
        %v4466 = vpack.c.bf16 %v4416, %v4411
        %v4467 = vpack.c.bf16 %v4417, %v4417
        %v4468 = vpack.c.bf16 %v4418, %v4418
        %v4469 = vpack.c.bf16 %v4419, %v4419
        %v4470 = vpack.c.bf16 %v4420, %v4420
        %v4471 = vpack.c.bf16 %v4421, %v4421
        %v4472 = vld [vmem:[#allocation13] sm:$0xf]
        %v4473 = vld [vmem:[#allocation13 + $0x4] sm:$0xf]
        %v4474 = vld [vmem:[#allocation13 + $0x8] sm:$0xf]
        %v4475 = vld [vmem:[#allocation13 + $0xc] sm:$0xf]
        %v4476 = vld [vmem:[#allocation13 + $0x10] sm:$0xf]
        %v4477 = vld [vmem:[#allocation13 + $0x14] sm:$0xf]
        %v4478 = vld [vmem:[#allocation13 + $0x18] sm:$0xf]
        %v4479 = vld [vmem:[#allocation13 + $0x1c] sm:$0xf]
        %v4480 = vld [vmem:[#allocation13 + $0x20] sm:$0xf]
        %v4481 = vld [vmem:[#allocation13 + $0x24] sm:$0xf]
        %v4482 = vld [vmem:[#allocation13 + $0x28] sm:$0xf]
        %v4483 = vld [vmem:[#allocation13 + $0x2c] sm:$0xf]
        %v4484 = vld [vmem:[#allocation13 + $0x30] sm:$0xf]
        %v4485 = vld [vmem:[#allocation13 + $0x34] sm:$0xf]
        %v4486 = vld [vmem:[#allocation13 + $0x38] sm:$0xf]
        %v4487 = vld [vmem:[#allocation13 + $0x3c] sm:$0xf]
        %v4488 = vld [vmem:[#allocation13 + $0x40] sm:$0xf]
        %v4489 = vld [vmem:[#allocation13 + $0x44] sm:$0xf]
        %v4490 = vld [vmem:[#allocation13 + $0x48] sm:$0xf]
        %v4491 = vld [vmem:[#allocation13 + $0x4c] sm:$0xf]
        %v4492 = vld [vmem:[#allocation13 + $0x50] sm:$0xf]
        %v4493 = vld [vmem:[#allocation13 + $0x54] sm:$0xf]
        %v4494 = vld [vmem:[#allocation13 + $0x58] sm:$0xf]
        %v4495 = vld [vmem:[#allocation13 + $0x5c] sm:$0xf]
        %v4496 = vld [vmem:[#allocation13 + $0x60] sm:$0xf]
        %v4497 = vld [vmem:[#allocation13 + $0x64] sm:$0xf]
        %v4498 = vld [vmem:[#allocation13 + $0x68] sm:$0xf]
        %v4499 = vld [vmem:[#allocation13 + $0x6c] sm:$0xf]
        %v4500 = vld [vmem:[#allocation13 + $0x70] sm:$0xf]
        %v4501 = vld [vmem:[#allocation13 + $0x74] sm:$0xf]
        %v4502 = vld [vmem:[#allocation13 + $0x78] sm:$0xf]
        %v4503 = vld [vmem:[#allocation13 + $0x7c] sm:$0xf]
        %v4504 = vld [vmem:[#allocation13 + $0x80] sm:$0xf]
        %v4505 = vld [vmem:[#allocation13 + $0x84] sm:$0xf]
        %v4506 = vld [vmem:[#allocation13 + $0x88] sm:$0xf]
        %v4507 = vld [vmem:[#allocation13 + $0x8c] sm:$0xf]
        %v4508 = vld [vmem:[#allocation13 + $0x90] sm:$0xf]
        %v4509 = vld [vmem:[#allocation13 + $0x94] sm:$0xf]
        %v4510 = vld [vmem:[#allocation13 + $0x98] sm:$0xf]
        %v4511 = vld [vmem:[#allocation13 + $0x9c] sm:$0xf]
        %v4512 = vld [vmem:[#allocation13 + $0xa0] sm:$0xf]
        %v4513 = vld [vmem:[#allocation13 + $0xa4] sm:$0xf]
        %v4514 = vld [vmem:[#allocation13 + $0xa8] sm:$0xf]
        %v4515 = vld [vmem:[#allocation13 + $0xac] sm:$0xf]
        %v4516 = vld [vmem:[#allocation13 + $0xb0] sm:$0xf]
        %v4517 = vld [vmem:[#allocation13 + $0xb4] sm:$0xf]
        %v4518 = vld [vmem:[#allocation13 + $0xb8] sm:$0xf]
        %v4519 = vld [vmem:[#allocation13 + $0xbc] sm:$0xf]
        %v4520 = vld [vmem:[#allocation13 + $0xc0] sm:$0xf]
        %v4521 = vld [vmem:[#allocation13 + $0xc4] sm:$0xf]
        %v4522 = vld [vmem:[#allocation13 + $0xc8] sm:$0xf]
        %v4523 = vld [vmem:[#allocation13 + $0xcc] sm:$0xf]
        %v4524 = vld [vmem:[#allocation13 + $0xd0] sm:$0xf]
        %v4525 = vld [vmem:[#allocation13 + $0xd4] sm:$0xf]
        %v4526 = vld [vmem:[#allocation13 + $0xd8] sm:$0xf]
        %v4527 = vld [vmem:[#allocation13 + $0xdc] sm:$0xf]
        %v4528 = vld [vmem:[#allocation13 + $0xe0] sm:$0xf]
        %v4529 = vld [vmem:[#allocation13 + $0xe4] sm:$0xf]
        %v4530 = vld [vmem:[#allocation13 + $0xe8] sm:$0xf]
        %v4531 = vld [vmem:[#allocation13 + $0xec] sm:$0xf]
        %v4532 = vld [vmem:[#allocation13 + $0xf0] sm:$0xf]
        %v4533 = vld [vmem:[#allocation13 + $0xf4] sm:$0xf]
        %v4534 = vld [vmem:[#allocation13 + $0xf8] sm:$0xf]
        %v4535 = vld [vmem:[#allocation13 + $0xfc] sm:$0xf]
        %v4536 = vld [vmem:[#allocation13 + $0x100] sm:$0xf]
        %v4537 = vld [vmem:[#allocation13 + $0x104] sm:$0xf]
        %v4538 = vld [vmem:[#allocation13 + $0x108] sm:$0xf]
        %v4539 = vld [vmem:[#allocation13 + $0x10c] sm:$0xf]
        %v4540 = vld [vmem:[#allocation13 + $0x110] sm:$0xf]
        %v4541 = vld [vmem:[#allocation13 + $0x114] sm:$0xf]
        %v4542 = vld [vmem:[#allocation13 + $0x118] sm:$0xf]
        %v4543 = vld [vmem:[#allocation13 + $0x11c] sm:$0xf]
        %v4544 = vld [vmem:[#allocation13 + $0x120] sm:$0xf]
        %v4545 = vld [vmem:[#allocation13 + $0x124] sm:$0xf]
        %v4546 = vld [vmem:[#allocation13 + $0x128] sm:$0xf]
        %v4547 = vld [vmem:[#allocation13 + $0x12c] sm:$0xf]
        %v4548 = vld [vmem:[#allocation13 + $0x130] sm:$0xf]
        %v4549 = vld [vmem:[#allocation13 + $0x134] sm:$0xf]
        %v4550 = vld [vmem:[#allocation13 + $0x138] sm:$0xf]
        %v4551 = vld [vmem:[#allocation13 + $0x13c] sm:$0xf]
        %v4552 = vld [vmem:[%s9] sm:$0x1]
        %v4554 = vlaneseq
        %v4555 = vshrl.u32 %v4554, 7
        %v4556 = vsub.s32 0, %v4555
        %v4557 = vrot.slane %v4552, %v4556
        %v4639 = vunpack.c.l.b16 %v4472
        %v4640 = vunpack.c.l.b16 %v4473
        %v4641 = vunpack.c.l.b16 %v4474
        %v4642 = vunpack.c.l.b16 %v4475
        %v4643 = vunpack.c.l.b16 %v4476
        %v4644 = vunpack.c.l.b16 %v4477
        %v4645 = vunpack.c.l.b16 %v4478
        %v4646 = vunpack.c.l.b16 %v4479
        %v4647 = vunpack.c.l.b16 %v4480
        %v4648 = vunpack.c.l.b16 %v4481
        %v4649 = vunpack.c.l.b16 %v4482
        %v4650 = vunpack.c.l.b16 %v4483
        %v4651 = vunpack.c.l.b16 %v4484
        %v4652 = vunpack.c.l.b16 %v4485
        %v4653 = vunpack.c.l.b16 %v4486
        %v4654 = vunpack.c.l.b16 %v4487
        %v4655 = vunpack.c.l.b16 %v4488
        %v4656 = vunpack.c.l.b16 %v4489
        %v4657 = vunpack.c.l.b16 %v4490
        %v4658 = vunpack.c.l.b16 %v4491
        %v4659 = vunpack.c.l.b16 %v4492
        %v4660 = vunpack.c.l.b16 %v4493
        %v4661 = vunpack.c.l.b16 %v4494
        %v4662 = vunpack.c.l.b16 %v4495
        %v4663 = vunpack.c.l.b16 %v4496
        %v4664 = vunpack.c.l.b16 %v4497
        %v4665 = vunpack.c.l.b16 %v4498
        %v4666 = vunpack.c.l.b16 %v4499
        %v4667 = vunpack.c.l.b16 %v4500
        %v4668 = vunpack.c.l.b16 %v4501
        %v4669 = vunpack.c.l.b16 %v4502
        %v4670 = vunpack.c.l.b16 %v4503
        %v4671 = vunpack.c.l.b16 %v4504
        %v4672 = vunpack.c.l.b16 %v4505
        %v4673 = vunpack.c.l.b16 %v4506
        %v4674 = vunpack.c.l.b16 %v4507
        %v4675 = vunpack.c.l.b16 %v4508
        %v4676 = vunpack.c.l.b16 %v4509
        %v4677 = vunpack.c.l.b16 %v4510
        %v4678 = vunpack.c.l.b16 %v4511
        %v4679 = vunpack.c.l.b16 %v4512
        %v4680 = vunpack.c.l.b16 %v4513
        %v4681 = vunpack.c.l.b16 %v4514
        %v4682 = vunpack.c.l.b16 %v4515
        %v4683 = vunpack.c.l.b16 %v4516
        %v4684 = vunpack.c.l.b16 %v4517
        %v4685 = vunpack.c.l.b16 %v4518
        %v4686 = vunpack.c.l.b16 %v4519
        %v4687 = vunpack.c.l.b16 %v4520
        %v4688 = vunpack.c.l.b16 %v4521
        %v4689 = vunpack.c.l.b16 %v4522
        %v4690 = vunpack.c.l.b16 %v4523
        %v4691 = vunpack.c.l.b16 %v4524
        %v4692 = vunpack.c.l.b16 %v4525
        %v4693 = vunpack.c.l.b16 %v4526
        %v4694 = vunpack.c.l.b16 %v4527
        %v4695 = vunpack.c.l.b16 %v4528
        %v4696 = vunpack.c.l.b16 %v4529
        %v4697 = vunpack.c.l.b16 %v4530
        %v4698 = vunpack.c.l.b16 %v4531
        %v4699 = vunpack.c.l.b16 %v4532
        %v4700 = vunpack.c.l.b16 %v4533
        %v4701 = vunpack.c.l.b16 %v4534
        %v4702 = vunpack.c.l.b16 %v4535
        %v4703 = vunpack.c.l.b16 %v4536
        %v4704 = vunpack.c.l.b16 %v4537
        %v4705 = vunpack.c.l.b16 %v4538
        %v4706 = vunpack.c.l.b16 %v4539
        %v4707 = vunpack.c.l.b16 %v4540
        %v4708 = vunpack.c.l.b16 %v4541
        %v4709 = vunpack.c.l.b16 %v4542
        %v4710 = vunpack.c.l.b16 %v4543
        %v4711 = vunpack.c.l.b16 %v4544
        %v4712 = vunpack.c.l.b16 %v4545
        %v4713 = vunpack.c.l.b16 %v4546
        %v4714 = vunpack.c.l.b16 %v4547
        %v4715 = vunpack.c.l.b16 %v4548
        %v4716 = vunpack.c.l.b16 %v4549
        %v4717 = vunpack.c.l.b16 %v4550
        %v4718 = vunpack.c.l.b16 %v4551
        %v4719 = vpack.c.b16 %v4640, %v4639
        %v4720 = vpack.c.b16 %v4642, %v4641
        %v4721 = vpack.c.b16 %v4644, %v4643
        %v4722 = vpack.c.b16 %v4646, %v4645
        %v4723 = vpack.c.b16 %v4648, %v4647
        %v4724 = vpack.c.b16 %v4650, %v4649
        %v4725 = vpack.c.b16 %v4652, %v4651
        %v4726 = vpack.c.b16 %v4654, %v4653
        %v4727 = vpack.c.b16 %v4656, %v4655
        %v4728 = vpack.c.b16 %v4658, %v4657
        %v4729 = vpack.c.b16 %v4660, %v4659
        %v4730 = vpack.c.b16 %v4662, %v4661
        %v4731 = vpack.c.b16 %v4664, %v4663
        %v4732 = vpack.c.b16 %v4666, %v4665
        %v4733 = vpack.c.b16 %v4668, %v4667
        %v4734 = vpack.c.b16 %v4670, %v4669
        %v4735 = vpack.c.b16 %v4672, %v4671
        %v4736 = vpack.c.b16 %v4674, %v4673
        %v4737 = vpack.c.b16 %v4676, %v4675
        %v4738 = vpack.c.b16 %v4678, %v4677
        %v4739 = vpack.c.b16 %v4680, %v4679
        %v4740 = vpack.c.b16 %v4682, %v4681
        %v4741 = vpack.c.b16 %v4684, %v4683
        %v4742 = vpack.c.b16 %v4686, %v4685
        %v4743 = vpack.c.b16 %v4688, %v4687
        %v4744 = vpack.c.b16 %v4690, %v4689
        %v4745 = vpack.c.b16 %v4692, %v4691
        %v4746 = vpack.c.b16 %v4694, %v4693
        %v4747 = vpack.c.b16 %v4696, %v4695
        %v4748 = vpack.c.b16 %v4698, %v4697
        %v4749 = vpack.c.b16 %v4700, %v4699
        %v4750 = vpack.c.b16 %v4702, %v4701
        %v4751 = vpack.c.b16 %v4704, %v4703
        %v4752 = vpack.c.b16 %v4706, %v4705
        %v4753 = vpack.c.b16 %v4708, %v4707
        %v4754 = vpack.c.b16 %v4710, %v4709
        %v4755 = vpack.c.b16 %v4712, %v4711
        %v4756 = vpack.c.b16 %v4714, %v4713
        %v4757 = vpack.c.b16 %v4716, %v4715
        %v4758 = vpack.c.b16 %v4718, %v4717
        %4799 = vmatprep.subr.bf16.mxu0 0
        %4800 = vmatpush1.bf16.msra.mxu0 %v4726
        %4801 = vmatprep.subr.bf16.mxu0 0
        %4802 = vmatpush1.bf16.msra.mxu0 %v4725
        %4803 = vmatprep.subr.bf16.mxu0 0
        %4804 = vmatpush1.bf16.msra.mxu0 %v4724
        %4805 = vmatprep.subr.bf16.mxu0 0
        %4806 = vmatpush1.bf16.msra.mxu0 %v4723
        %4807 = vmatprep.subr.bf16.mxu0 0
        %4808 = vmatpush1.bf16.msra.mxu0 %v4722
        %4809 = vmatprep.subr.bf16.mxu0 0
        %4810 = vmatpush1.bf16.msra.mxu0 %v4721
        %4811 = vmatprep.subr.bf16.mxu0 0
        %4812 = vmatpush1.bf16.msra.mxu0 %v4720
        %4813 = vmatprep.subr.bf16.mxu0 0
        %4814 = vmatpush1.bf16.msra.mxu0 %v4719
        %4815 = vmatprep.subr.bf16.mxu0 0
        %4816 = vmatpush2.bf16.msra.mxu0 %v4734
        %4817 = vmatprep.subr.bf16.mxu0 0
        %4818 = vmatpush2.bf16.msra.mxu0 %v4733
        %4819 = vmatprep.subr.bf16.mxu0 0
        %4820 = vmatpush2.bf16.msra.mxu0 %v4732
        %4821 = vmatprep.subr.bf16.mxu0 0
        %4822 = vmatpush2.bf16.msra.mxu0 %v4731
        %4823 = vmatprep.subr.bf16.mxu0 0
        %4824 = vmatpush2.bf16.msra.mxu0 %v4730
        %4825 = vmatprep.subr.bf16.mxu0 0
        %4826 = vmatpush2.bf16.msra.mxu0 %v4729
        %4827 = vmatprep.subr.bf16.mxu0 0
        %4828 = vmatpush2.bf16.msra.mxu0 %v4728
        %4829 = vmatprep.subr.bf16.mxu0 0
        %4830 = vmatpush2.bf16.msra.mxu0 %v4727
        %4831 = vmatprep.mubr.bf16.mxu0 %v4423
        %4832 = vmatmul.mubr.bf16.gmra.mxu0 %v4422
        %v4833 = vpop.f32.mrf.mxu0
        %v4834 = vadd.f32 %v4557, %v4833
        %v4835 = vpop.f32.mrf.mxu0
        %v4836 = vpop.f32.mrf.mxu0
        %v4837 = vadd.f32 %v4557, %v4836
        %v4838 = vpop.f32.mrf.mxu0
        %4839 = vmatprep.mubr.bf16.mxu0 %v4428
        %4840 = vmatmul.mubr.bf16.gmra.mxu0 %v4427
        %v4841 = vpop.f32.mrf.mxu0
        %v4842 = vadd.f32 %v4557, %v4841
        %v4843 = vpop.f32.mrf.mxu0
        %v4844 = vpop.f32.mrf.mxu0
        %v4845 = vadd.f32 %v4557, %v4844
        %v4846 = vpop.f32.mrf.mxu0
        %4847 = vmatprep.mubr.bf16.mxu0 %v4433
        %4848 = vmatmul.mubr.bf16.gmra.mxu0 %v4432
        %v4849 = vpop.f32.mrf.mxu0
        %v4850 = vadd.f32 %v4557, %v4849
        %v4851 = vpop.f32.mrf.mxu0
        %v4852 = vpop.f32.mrf.mxu0
        %v4853 = vadd.f32 %v4557, %v4852
        %v4854 = vpop.f32.mrf.mxu0
        %4855 = vmatprep.mubr.bf16.mxu0 %v4438
        %4856 = vmatmul.mubr.bf16.gmra.mxu0 %v4437
        %v4857 = vpop.f32.mrf.mxu0
        %v4858 = vadd.f32 %v4557, %v4857
        %v4859 = vpop.f32.mrf.mxu0
        %v4860 = vpop.f32.mrf.mxu0
        %v4861 = vadd.f32 %v4557, %v4860
        %v4862 = vpop.f32.mrf.mxu0
        %4863 = vmatprep.mubr.bf16.mxu0 %v4443
        %4864 = vmatmul.mubr.bf16.gmra.mxu0 %v4442
        %v4865 = vpop.f32.mrf.mxu0
        %v4866 = vadd.f32 %v4557, %v4865
        %v4867 = vpop.f32.mrf.mxu0
        %v4868 = vpop.f32.mrf.mxu0
        %v4869 = vadd.f32 %v4557, %v4868
        %v4870 = vpop.f32.mrf.mxu0
        %4871 = vmatprep.mubr.bf16.mxu0 %v4448
        %4872 = vmatmul.mubr.bf16.gmra.mxu0 %v4447
        %v4873 = vpop.f32.mrf.mxu0
        %v4874 = vadd.f32 %v4557, %v4873
        %v4875 = vpop.f32.mrf.mxu0
        %v4876 = vpop.f32.mrf.mxu0
        %v4877 = vadd.f32 %v4557, %v4876
        %v4878 = vpop.f32.mrf.mxu0
        %4879 = vmatprep.mubr.bf16.mxu0 %v4453
        %4880 = vmatmul.mubr.bf16.gmra.mxu0 %v4452
        %v4881 = vpop.f32.mrf.mxu0
        %v4882 = vadd.f32 %v4557, %v4881
        %v4883 = vpop.f32.mrf.mxu0
        %v4884 = vpop.f32.mrf.mxu0
        %v4885 = vadd.f32 %v4557, %v4884
        %v4886 = vpop.f32.mrf.mxu0
        %4887 = vmatprep.mubr.bf16.mxu0 %v4458
        %4888 = vmatmul.mubr.bf16.gmra.mxu0 %v4457
        %v4889 = vpop.f32.mrf.mxu0
        %v4890 = vadd.f32 %v4557, %v4889
        %v4891 = vpop.f32.mrf.mxu0
        %v4892 = vpop.f32.mrf.mxu0
        %v4893 = vadd.f32 %v4557, %v4892
        %v4894 = vpop.f32.mrf.mxu0
        %4895 = vmatprep.mubr.bf16.mxu0 %v4463
        %4896 = vmatmul.mubr.bf16.gmra.mxu0 %v4462
        %v4897 = vpop.f32.mrf.mxu0
        %v4898 = vadd.f32 %v4557, %v4897
        %v4899 = vpop.f32.mrf.mxu0
        %v4900 = vpop.f32.mrf.mxu0
        %v4901 = vadd.f32 %v4557, %v4900
        %v4902 = vpop.f32.mrf.mxu0
        %4903 = vmatprep.mubr.bf16.mxu0 %v4468
        %4904 = vmatmul.mubr.bf16.gmra.mxu0 %v4467
        %v4905 = vpop.f32.mrf.mxu0
        %v4906 = vadd.f32 %v4557, %v4905
        %v4907 = vpop.f32.mrf.mxu0
        %v4908 = vpop.f32.mrf.mxu0
        %v4909 = vpop.f32.mrf.mxu0
        %4910 = vdwg.mxu0
        %4911 = vmatprep.subr.bf16.mxu0 0
        %4912 = vmatpush1.bf16.msra.mxu0 %v4742
        %4913 = vmatprep.subr.bf16.mxu0 0
        %4914 = vmatpush1.bf16.msra.mxu0 %v4741
        %4915 = vmatprep.subr.bf16.mxu0 0
        %4916 = vmatpush1.bf16.msra.mxu0 %v4740
        %4917 = vmatprep.subr.bf16.mxu0 0
        %4918 = vmatpush1.bf16.msra.mxu0 %v4739
        %4919 = vmatprep.subr.bf16.mxu0 0
        %4920 = vmatpush1.bf16.msra.mxu0 %v4738
        %4921 = vmatprep.subr.bf16.mxu0 0
        %4922 = vmatpush1.bf16.msra.mxu0 %v4737
        %4923 = vmatprep.subr.bf16.mxu0 0
        %4924 = vmatpush1.bf16.msra.mxu0 %v4736
        %4925 = vmatprep.subr.bf16.mxu0 0
        %4926 = vmatpush1.bf16.msra.mxu0 %v4735
        %4927 = vmatprep.subr.bf16.mxu0 0
        %4928 = vmatpush2.bf16.msra.mxu0 %v4750
        %4929 = vmatprep.subr.bf16.mxu0 0
        %4930 = vmatpush2.bf16.msra.mxu0 %v4749
        %4931 = vmatprep.subr.bf16.mxu0 0
        %4932 = vmatpush2.bf16.msra.mxu0 %v4748
        %4933 = vmatprep.subr.bf16.mxu0 0
        %4934 = vmatpush2.bf16.msra.mxu0 %v4747
        %4935 = vmatprep.subr.bf16.mxu0 0
        %4936 = vmatpush2.bf16.msra.mxu0 %v4746
        %4937 = vmatprep.subr.bf16.mxu0 0
        %4938 = vmatpush2.bf16.msra.mxu0 %v4745
        %4939 = vmatprep.subr.bf16.mxu0 0
        %4940 = vmatpush2.bf16.msra.mxu0 %v4744
        %4941 = vmatprep.subr.bf16.mxu0 0
        %4942 = vmatpush2.bf16.msra.mxu0 %v4743
        %4943 = vmatprep.mubr.bf16.mxu0 %v4425
        %4944 = vmatmul.mubr.bf16.gmra.mxu0 %v4424
        %v4945 = vpop.f32.mrf.mxu0
        %v4946 = vadd.f32 %v4834, %v4945
        %v4947 = vpop.f32.mrf.mxu0
        %v4948 = vpop.f32.mrf.mxu0
        %v4949 = vadd.f32 %v4837, %v4948
        %v4950 = vpop.f32.mrf.mxu0
        %4951 = vmatprep.mubr.bf16.mxu0 %v4430
        %4952 = vmatmul.mubr.bf16.gmra.mxu0 %v4429
        %v4953 = vpop.f32.mrf.mxu0
        %v4954 = vadd.f32 %v4842, %v4953
        %v4955 = vpop.f32.mrf.mxu0
        %v4956 = vpop.f32.mrf.mxu0
        %v4957 = vadd.f32 %v4845, %v4956
        %v4958 = vpop.f32.mrf.mxu0
        %4959 = vmatprep.mubr.bf16.mxu0 %v4435
        %4960 = vmatmul.mubr.bf16.gmra.mxu0 %v4434
        %v4961 = vpop.f32.mrf.mxu0
        %v4962 = vadd.f32 %v4850, %v4961
        %v4963 = vpop.f32.mrf.mxu0
        %v4964 = vpop.f32.mrf.mxu0
        %v4965 = vadd.f32 %v4853, %v4964
        %v4966 = vpop.f32.mrf.mxu0
        %4967 = vmatprep.mubr.bf16.mxu0 %v4440
        %4968 = vmatmul.mubr.bf16.gmra.mxu0 %v4439
        %v4969 = vpop.f32.mrf.mxu0
        %v4970 = vadd.f32 %v4858, %v4969
        %v4971 = vpop.f32.mrf.mxu0
        %v4972 = vpop.f32.mrf.mxu0
        %v4973 = vadd.f32 %v4861, %v4972
        %v4974 = vpop.f32.mrf.mxu0
        %4975 = vmatprep.mubr.bf16.mxu0 %v4445
        %4976 = vmatmul.mubr.bf16.gmra.mxu0 %v4444
        %v4977 = vpop.f32.mrf.mxu0
        %v4978 = vadd.f32 %v4866, %v4977
        %v4979 = vpop.f32.mrf.mxu0
        %v4980 = vpop.f32.mrf.mxu0
        %v4981 = vadd.f32 %v4869, %v4980
        %v4982 = vpop.f32.mrf.mxu0
        %4983 = vmatprep.mubr.bf16.mxu0 %v4450
        %4984 = vmatmul.mubr.bf16.gmra.mxu0 %v4449
        %v4985 = vpop.f32.mrf.mxu0
        %v4986 = vadd.f32 %v4874, %v4985
        %v4987 = vpop.f32.mrf.mxu0
        %v4988 = vpop.f32.mrf.mxu0
        %v4989 = vadd.f32 %v4877, %v4988
        %v4990 = vpop.f32.mrf.mxu0
        %4991 = vmatprep.mubr.bf16.mxu0 %v4455
        %4992 = vmatmul.mubr.bf16.gmra.mxu0 %v4454
        %v4993 = vpop.f32.mrf.mxu0
        %v4994 = vadd.f32 %v4882, %v4993
        %v4995 = vpop.f32.mrf.mxu0
        %v4996 = vpop.f32.mrf.mxu0
        %v4997 = vadd.f32 %v4885, %v4996
        %v4998 = vpop.f32.mrf.mxu0
        %4999 = vmatprep.mubr.bf16.mxu0 %v4460
        %5000 = vmatmul.mubr.bf16.gmra.mxu0 %v4459
        %v5001 = vpop.f32.mrf.mxu0
        %v5002 = vadd.f32 %v4890, %v5001
        %v5003 = vpop.f32.mrf.mxu0
        %v5004 = vpop.f32.mrf.mxu0
        %v5005 = vadd.f32 %v4893, %v5004
        %v5006 = vpop.f32.mrf.mxu0
        %5007 = vmatprep.mubr.bf16.mxu0 %v4465
        %5008 = vmatmul.mubr.bf16.gmra.mxu0 %v4464
        %v5009 = vpop.f32.mrf.mxu0
        %v5010 = vadd.f32 %v4898, %v5009
        %v5011 = vpop.f32.mrf.mxu0
        %v5012 = vpop.f32.mrf.mxu0
        %v5013 = vadd.f32 %v4901, %v5012
        %v5014 = vpop.f32.mrf.mxu0
        %5015 = vmatprep.mubr.bf16.mxu0 %v4470
        %5016 = vmatmul.mubr.bf16.gmra.mxu0 %v4469
        %v5017 = vpop.f32.mrf.mxu0
        %v5018 = vadd.f32 %v4906, %v5017
        %v5019 = vpop.f32.mrf.mxu0
        %v5020 = vpop.f32.mrf.mxu0
        %v5021 = vpop.f32.mrf.mxu0
        %5022 = vdwg.mxu0
        %5023 = vmatprep.subr.bf16.mxu0 0
        %5024 = vmatpush1.bf16.msra.mxu0 %v4758
        %5025 = vmatprep.subr.bf16.mxu0 0
        %5026 = vmatpush1.bf16.msra.mxu0 %v4757
        %5027 = vmatprep.subr.bf16.mxu0 0
        %5028 = vmatpush1.bf16.msra.mxu0 %v4756
        %5029 = vmatprep.subr.bf16.mxu0 0
        %5030 = vmatpush1.bf16.msra.mxu0 %v4755
        %5031 = vmatprep.subr.bf16.mxu0 0
        %5032 = vmatpush1.bf16.msra.mxu0 %v4754
        %5033 = vmatprep.subr.bf16.mxu0 0
        %5034 = vmatpush1.bf16.msra.mxu0 %v4753
        %5035 = vmatprep.subr.bf16.mxu0 0
        %5036 = vmatpush1.bf16.msra.mxu0 %v4752
        %5037 = vmatprep.subr.bf16.mxu0 0
        %5038 = vmatpush1.bf16.msra.mxu0 %v4751
        %5039 = vmatprep.subr.bf16.mxu0 0
        %5040 = vmatpush2.bf16.msra.mxu0 0
        %5041 = vmatprep.subr.bf16.mxu0 0
        %5042 = vmatpush2.bf16.msra.mxu0 0
        %5043 = vmatprep.subr.bf16.mxu0 0
        %5044 = vmatpush2.bf16.msra.mxu0 0
        %5045 = vmatprep.subr.bf16.mxu0 0
        %5046 = vmatpush2.bf16.msra.mxu0 0
        %5047 = vmatprep.subr.bf16.mxu0 0
        %5048 = vmatpush2.bf16.msra.mxu0 0
        %5049 = vmatprep.subr.bf16.mxu0 0
        %5050 = vmatpush2.bf16.msra.mxu0 0
        %5051 = vmatprep.subr.bf16.mxu0 0
        %5052 = vmatpush2.bf16.msra.mxu0 0
        %5053 = vmatprep.subr.bf16.mxu0 0
        %5054 = vmatpush2.bf16.msra.mxu0 0
        %5055 = vmatprep.mubr.bf16.mxu0 0
        %5056 = vmatmul.mubr.bf16.gmra.mxu0 %v4426
        %v5057 = vpop.f32.mrf.mxu0
        %v5058 = vadd.f32 %v4946, %v5057
        %v5059 = vpop.f32.mrf.mxu0
        %v5060 = vpop.f32.mrf.mxu0
        %v5061 = vadd.f32 %v4949, %v5060
        %v5062 = vpop.f32.mrf.mxu0
        %5063 = vmatprep.mubr.bf16.mxu0 0
        %5064 = vmatmul.mubr.bf16.gmra.mxu0 %v4431
        %v5065 = vpop.f32.mrf.mxu0
        %v5066 = vadd.f32 %v4954, %v5065
        %v5067 = vpop.f32.mrf.mxu0
        %v5068 = vpop.f32.mrf.mxu0
        %v5069 = vadd.f32 %v4957, %v5068
        %v5070 = vpop.f32.mrf.mxu0
        %5071 = vmatprep.mubr.bf16.mxu0 0
        %5072 = vmatmul.mubr.bf16.gmra.mxu0 %v4436
        %v5073 = vpop.f32.mrf.mxu0
        %v5074 = vadd.f32 %v4962, %v5073
        %v5075 = vpop.f32.mrf.mxu0
        %v5076 = vpop.f32.mrf.mxu0
        %v5077 = vadd.f32 %v4965, %v5076
        %v5078 = vpop.f32.mrf.mxu0
        %5079 = vmatprep.mubr.bf16.mxu0 0
        %5080 = vmatmul.mubr.bf16.gmra.mxu0 %v4441
        %v5081 = vpop.f32.mrf.mxu0
        %v5082 = vadd.f32 %v4970, %v5081
        %v5083 = vpop.f32.mrf.mxu0
        %v5084 = vpop.f32.mrf.mxu0
        %v5085 = vadd.f32 %v4973, %v5084
        %v5086 = vpop.f32.mrf.mxu0
        %5087 = vmatprep.mubr.bf16.mxu0 0
        %5088 = vmatmul.mubr.bf16.gmra.mxu0 %v4446
        %v5089 = vpop.f32.mrf.mxu0
        %v5090 = vadd.f32 %v4978, %v5089
        %v5091 = vpop.f32.mrf.mxu0
        %v5092 = vpop.f32.mrf.mxu0
        %v5093 = vadd.f32 %v4981, %v5092
        %v5094 = vpop.f32.mrf.mxu0
        %5095 = vmatprep.mubr.bf16.mxu0 0
        %5096 = vmatmul.mubr.bf16.gmra.mxu0 %v4451
        %v5097 = vpop.f32.mrf.mxu0
        %v5098 = vadd.f32 %v4986, %v5097
        %v5099 = vpop.f32.mrf.mxu0
        %v5100 = vpop.f32.mrf.mxu0
        %v5101 = vadd.f32 %v4989, %v5100
        %v5102 = vpop.f32.mrf.mxu0
        %5103 = vmatprep.mubr.bf16.mxu0 0
        %5104 = vmatmul.mubr.bf16.gmra.mxu0 %v4456
        %v5105 = vpop.f32.mrf.mxu0
        %v5106 = vadd.f32 %v4994, %v5105
        %v5107 = vpop.f32.mrf.mxu0
        %v5108 = vpop.f32.mrf.mxu0
        %v5109 = vadd.f32 %v4997, %v5108
        %v5110 = vpop.f32.mrf.mxu0
        %5111 = vmatprep.mubr.bf16.mxu0 0
        %5112 = vmatmul.mubr.bf16.gmra.mxu0 %v4461
        %v5113 = vpop.f32.mrf.mxu0
        %v5114 = vadd.f32 %v5002, %v5113
        %v5115 = vpop.f32.mrf.mxu0
        %v5116 = vpop.f32.mrf.mxu0
        %v5117 = vadd.f32 %v5005, %v5116
        %v5118 = vpop.f32.mrf.mxu0
        %5119 = vmatprep.mubr.bf16.mxu0 0
        %5120 = vmatmul.mubr.bf16.gmra.mxu0 %v4466
        %v5121 = vpop.f32.mrf.mxu0
        %v5122 = vadd.f32 %v5010, %v5121
        %v5123 = vpop.f32.mrf.mxu0
        %v5124 = vpop.f32.mrf.mxu0
        %v5125 = vadd.f32 %v5013, %v5124
        %v5126 = vpop.f32.mrf.mxu0
        %5127 = vmatprep.mubr.bf16.mxu0 0
        %5128 = vmatmul.mubr.bf16.gmra.mxu0 %v4471
        %v5129 = vpop.f32.mrf.mxu0
        %v5130 = vadd.f32 %v5018, %v5129
        %v5131 = vpop.f32.mrf.mxu0
        %v5132 = vpop.f32.mrf.mxu0
        %v5133 = vpop.f32.mrf.mxu0
        %5134 = vdwg.mxu0
        %5135 = vmax.xlane.f32.xlu0 %v5058
        %v5136 = vpop.xlane.xlu0 %5135
        %5137 = vmax.xlane.f32.xlu0 %v5061
        %v5138 = vpop.xlane.xlu0 %5137
        %5139 = vmax.xlane.f32.xlu0 %v5066
        %v5140 = vpop.xlane.xlu0 %5139
        %5141 = vmax.xlane.f32.xlu0 %v5069
        %v5142 = vpop.xlane.xlu0 %5141
        %5143 = vmax.xlane.f32.xlu0 %v5074
        %v5144 = vpop.xlane.xlu0 %5143
        %5145 = vmax.xlane.f32.xlu0 %v5077
        %v5146 = vpop.xlane.xlu0 %5145
        %5147 = vmax.xlane.f32.xlu0 %v5082
        %v5148 = vpop.xlane.xlu0 %5147
        %5149 = vmax.xlane.f32.xlu0 %v5085
        %v5150 = vpop.xlane.xlu0 %5149
        %5151 = vmax.xlane.f32.xlu0 %v5090
        %v5152 = vpop.xlane.xlu0 %5151
        %5153 = vmax.xlane.f32.xlu0 %v5093
        %v5154 = vpop.xlane.xlu0 %5153
        %5155 = vmax.xlane.f32.xlu0 %v5098
        %v5156 = vpop.xlane.xlu0 %5155
        %5157 = vmax.xlane.f32.xlu0 %v5101
        %v5158 = vpop.xlane.xlu0 %5157
        %5159 = vmax.xlane.f32.xlu0 %v5106
        %v5160 = vpop.xlane.xlu0 %5159
        %5161 = vmax.xlane.f32.xlu0 %v5109
        %v5162 = vpop.xlane.xlu0 %5161
        %5163 = vmax.xlane.f32.xlu0 %v5114
        %v5164 = vpop.xlane.xlu0 %5163
        %5165 = vmax.xlane.f32.xlu0 %v5117
        %v5166 = vpop.xlane.xlu0 %5165
        %5167 = vmax.xlane.f32.xlu0 %v5122
        %v5168 = vpop.xlane.xlu0 %5167
        %5169 = vmax.xlane.f32.xlu0 %v5125
        %v5170 = vpop.xlane.xlu0 %5169
        %5171 = vmax.xlane.f32.xlu0 %v5130
        %v5172 = vpop.xlane.xlu0 %5171
        %v5173 = vsub.f32 %v5058, %v5136
        %v5174 = vsub.f32 %v5061, %v5138
        %v5175 = vsub.f32 %v5066, %v5140
        %v5176 = vsub.f32 %v5069, %v5142
        %v5177 = vsub.f32 %v5074, %v5144
        %v5178 = vsub.f32 %v5077, %v5146
        %v5179 = vsub.f32 %v5082, %v5148
        %v5180 = vsub.f32 %v5085, %v5150
        %v5181 = vsub.f32 %v5090, %v5152
        %v5182 = vsub.f32 %v5093, %v5154
        %v5183 = vsub.f32 %v5098, %v5156
        %v5184 = vsub.f32 %v5101, %v5158
        %v5185 = vsub.f32 %v5106, %v5160
        %v5186 = vsub.f32 %v5109, %v5162
        %v5187 = vsub.f32 %v5114, %v5164
        %v5188 = vsub.f32 %v5117, %v5166
        %v5189 = vsub.f32 %v5122, %v5168
        %v5190 = vsub.f32 %v5125, %v5170
        %v5191 = vsub.f32 %v5130, %v5172
        %v5192 = vmul.f32 %v5173, 1.442695
        %v5193 = vpow.pop %v5192
        %v5194 = vmul.f32 %v5174, 1.442695
        %v5195 = vpow.pop %v5194
        %v5196 = vmul.f32 %v5175, 1.442695
        %v5197 = vpow.pop %v5196
        %v5198 = vmul.f32 %v5176, 1.442695
        %v5199 = vpow.pop %v5198
        %v5200 = vmul.f32 %v5177, 1.442695
        %v5201 = vpow.pop %v5200
        %v5202 = vmul.f32 %v5178, 1.442695
        %v5203 = vpow.pop %v5202
        %v5204 = vmul.f32 %v5179, 1.442695
        %v5205 = vpow.pop %v5204
        %v5206 = vmul.f32 %v5180, 1.442695
        %v5207 = vpow.pop %v5206
        %v5208 = vmul.f32 %v5181, 1.442695
        %v5209 = vpow.pop %v5208
        %v5210 = vmul.f32 %v5182, 1.442695
        %v5211 = vpow.pop %v5210
        %v5212 = vmul.f32 %v5183, 1.442695
        %v5213 = vpow.pop %v5212
        %v5214 = vmul.f32 %v5184, 1.442695
        %v5215 = vpow.pop %v5214
        %v5216 = vmul.f32 %v5185, 1.442695
        %v5217 = vpow.pop %v5216
        %v5218 = vmul.f32 %v5186, 1.442695
        %v5219 = vpow.pop %v5218
        %v5220 = vmul.f32 %v5187, 1.442695
        %v5221 = vpow.pop %v5220
        %v5222 = vmul.f32 %v5188, 1.442695
        %v5223 = vpow.pop %v5222
        %v5224 = vmul.f32 %v5189, 1.442695
        %v5225 = vpow.pop %v5224
        %v5226 = vmul.f32 %v5190, 1.442695
        %v5227 = vpow.pop %v5226
        %v5228 = vmul.f32 %v5191, 1.442695
        %v5229 = vpow.pop %v5228
        %5230 = vadd.xlane.f32.xlu0 %v5193
        %v5231 = vpop.xlane.xlu0 %5230
        %5232 = vadd.xlane.f32.xlu0 %v5195
        %v5233 = vpop.xlane.xlu0 %5232
        %5234 = vadd.xlane.f32.xlu0 %v5197
        %v5235 = vpop.xlane.xlu0 %5234
        %5236 = vadd.xlane.f32.xlu0 %v5199
        %v5237 = vpop.xlane.xlu0 %5236
        %5238 = vadd.xlane.f32.xlu0 %v5201
        %v5239 = vpop.xlane.xlu0 %5238
        %5240 = vadd.xlane.f32.xlu0 %v5203
        %v5241 = vpop.xlane.xlu0 %5240
        %5242 = vadd.xlane.f32.xlu0 %v5205
        %v5243 = vpop.xlane.xlu0 %5242
        %5244 = vadd.xlane.f32.xlu0 %v5207
        %v5245 = vpop.xlane.xlu0 %5244
        %5246 = vadd.xlane.f32.xlu0 %v5209
        %v5247 = vpop.xlane.xlu0 %5246
        %5248 = vadd.xlane.f32.xlu0 %v5211
        %v5249 = vpop.xlane.xlu0 %5248
        %5250 = vadd.xlane.f32.xlu0 %v5213
        %v5251 = vpop.xlane.xlu0 %5250
        %5252 = vadd.xlane.f32.xlu0 %v5215
        %v5253 = vpop.xlane.xlu0 %5252
        %5254 = vadd.xlane.f32.xlu0 %v5217
        %v5255 = vpop.xlane.xlu0 %5254
        %5256 = vadd.xlane.f32.xlu0 %v5219
        %v5257 = vpop.xlane.xlu0 %5256
        %5258 = vadd.xlane.f32.xlu0 %v5221
        %v5259 = vpop.xlane.xlu0 %5258
        %5260 = vadd.xlane.f32.xlu0 %v5223
        %v5261 = vpop.xlane.xlu0 %5260
        %5262 = vadd.xlane.f32.xlu0 %v5225
        %v5263 = vpop.xlane.xlu0 %5262
        %5264 = vadd.xlane.f32.xlu0 %v5227
        %v5265 = vpop.xlane.xlu0 %5264
        %5266 = vadd.xlane.f32.xlu0 %v5229
        %v5267 = vpop.xlane.xlu0 %5266
        %v5268 = vrcp.pop %v5231
        %v5269 = vrcp.pop %v5233
        %v5270 = vrcp.pop %v5235
        %v5271 = vrcp.pop %v5237
        %v5272 = vrcp.pop %v5239
        %v5273 = vrcp.pop %v5241
        %v5274 = vrcp.pop %v5243
        %v5275 = vrcp.pop %v5245
        %v5276 = vrcp.pop %v5247
        %v5277 = vrcp.pop %v5249
        %v5278 = vrcp.pop %v5251
        %v5279 = vrcp.pop %v5253
        %v5280 = vrcp.pop %v5255
        %v5281 = vrcp.pop %v5257
        %v5282 = vrcp.pop %v5259
        %v5283 = vrcp.pop %v5261
        %v5284 = vrcp.pop %v5263
        %v5285 = vrcp.pop %v5265
        %v5286 = vrcp.pop %v5267
        %v5287 = vmul.f32 %v5193, %v5268
        %v5288 = vmul.f32 %v5195, %v5269
        %v5289 = vmul.f32 %v5197, %v5270
        %v5290 = vmul.f32 %v5199, %v5271
        %v5291 = vmul.f32 %v5201, %v5272
        %v5292 = vmul.f32 %v5203, %v5273
        %v5293 = vmul.f32 %v5205, %v5274
        %v5294 = vmul.f32 %v5207, %v5275
        %v5295 = vmul.f32 %v5209, %v5276
        %v5296 = vmul.f32 %v5211, %v5277
        %v5297 = vmul.f32 %v5213, %v5278
        %v5298 = vmul.f32 %v5215, %v5279
        %v5299 = vmul.f32 %v5217, %v5280
        %v5300 = vmul.f32 %v5219, %v5281
        %v5301 = vmul.f32 %v5221, %v5282
        %v5302 = vmul.f32 %v5223, %v5283
        %v5303 = vmul.f32 %v5225, %v5284
        %v5304 = vmul.f32 %v5227, %v5285
        %v5305 = vmul.f32 %v5229, %v5286
        %5306 = vst [vmem:[%s546] sm:$0xff] %v5287
        %5307 = vst [vmem:[%s546 + $0x8] sm:$0xff] %v5288
        %5308 = vst [vmem:[%s546 + $0x10] sm:$0xff] %v5289
        %5309 = vst [vmem:[%s546 + $0x18] sm:$0xff] %v5290
        %5310 = vst [vmem:[%s546 + $0x20] sm:$0xff] %v5291
        %5311 = vst [vmem:[%s546 + $0x28] sm:$0xff] %v5292
        %5312 = vst [vmem:[%s546 + $0x30] sm:$0xff] %v5293
        %5313 = vst [vmem:[%s546 + $0x38] sm:$0xff] %v5294
        %5314 = vst [vmem:[%s546 + $0x40] sm:$0xff] %v5295
        %5315 = vst [vmem:[%s546 + $0x48] sm:$0xff] %v5296
        %5316 = vst [vmem:[%s546 + $0x50] sm:$0xff] %v5297
        %5317 = vst [vmem:[%s546 + $0x58] sm:$0xff] %v5298
        %5318 = vst [vmem:[%s546 + $0x60] sm:$0xff] %v5299
        %5319 = vst [vmem:[%s546 + $0x68] sm:$0xff] %v5300
        %5320 = vst [vmem:[%s546 + $0x70] sm:$0xff] %v5301
        %5321 = vst [vmem:[%s546 + $0x78] sm:$0xff] %v5302
        %5322 = vst [vmem:[%s546 + $0x80] sm:$0xff] %v5303
        %5323 = vst [vmem:[%s546 + $0x88] sm:$0xff] %v5304
        %5324 = vst [vmem:[%s546 + $0x90] sm:$0xff] %v5305
        %5325 = vst [vmem:[%s553] sm:$0xff] %v2677
        %5326 = vst [vmem:[%s553 + $0x8] sm:$0xff] %v2679
        %5327 = vst [vmem:[%s553 + $0x10] sm:$0xff] %v2681
        %5328 = vst [vmem:[%s553 + $0x18] sm:$0xff] %v2683
        %5329 = vst [vmem:[%s553 + $0x20] sm:$0xff] %v2687
        %5330 = vst [vmem:[%s553 + $0x28] sm:$0xff] %v2689
        %5331 = vst [vmem:[%s553 + $0x30] sm:$0xff] %v2691
        %5332 = vst [vmem:[%s553 + $0x38] sm:$0xff] %v2693
        %5333 = vst [vmem:[%s553 + $0x40] sm:$0xff] %v2697
        %5334 = vst [vmem:[%s553 + $0x48] sm:$0xff] %v2699
        %5335 = vst [vmem:[%s553 + $0x50] sm:$0xff] %v2701
        %5336 = vst [vmem:[%s553 + $0x58] sm:$0xff] %v2703
        %5337 = vst [vmem:[%s553 + $0x60] sm:$0xff] %v2707
        %5338 = vst [vmem:[%s553 + $0x68] sm:$0xff] %v2709
        %5339 = vst [vmem:[%s553 + $0x70] sm:$0xff] %v2711
        %5340 = vst [vmem:[%s553 + $0x78] sm:$0xff] %v2713
        %5341 = vst [vmem:[%s553 + $0x80] sm:$0xff] %v2717
        %5342 = vst [vmem:[%s553 + $0x88] sm:$0xff] %v2719
        %5343 = vst [vmem:[%s553 + $0x90] sm:$0xff] %v2721
        %5344 = vst [vmem:[%s553 + $0x98] sm:$0xff] %v2723
        %5345 = vst [vmem:[%s553 + $0xa0] sm:$0xff] %v2727
        %5346 = vst [vmem:[%s553 + $0xa8] sm:$0xff] %v2729
        %5347 = vst [vmem:[%s553 + $0xb0] sm:$0xff] %v2731
        %5348 = vst [vmem:[%s553 + $0xb8] sm:$0xff] %v2733
        %5349 = vst [vmem:[%s553 + $0xc0] sm:$0xff] %v2737
        %5350 = vst [vmem:[%s553 + $0xc8] sm:$0xff] %v2739
        %5351 = vst [vmem:[%s553 + $0xd0] sm:$0xff] %v2741
        %5352 = vst [vmem:[%s553 + $0xd8] sm:$0xff] %v2743
        %5353 = vst [vmem:[%s553 + $0xe0] sm:$0xff] %v2747
        %5354 = vst [vmem:[%s553 + $0xe8] sm:$0xff] %v2749
        %5355 = vst [vmem:[%s553 + $0xf0] sm:$0xff] %v2751
        %5356 = vst [vmem:[%s553 + $0xf8] sm:$0xff] %v2753
        %5357 = vst [vmem:[%s553 + $0x100] sm:$0xff] %v2757
        %5358 = vst [vmem:[%s553 + $0x108] sm:$0xff] %v2759
        %5359 = vst [vmem:[%s553 + $0x110] sm:$0xff] %v2761
        %5360 = vst [vmem:[%s553 + $0x118] sm:$0xff] %v2763
        %5361 = vst [vmem:[%s553 + $0x120] sm:$0xff] %v2767
        %5362 = vst [vmem:[%s553 + $0x128] sm:$0xff] %v2769
        %5363 = vst [vmem:[%s560] sm:$0xff] %v3070
        %5364 = vst [vmem:[%s560 + $0x8] sm:$0xff] %v3072
        %5365 = vst [vmem:[%s560 + $0x10] sm:$0xff] %v3074
        %5366 = vst [vmem:[%s560 + $0x18] sm:$0xff] %v3076
        %5367 = vst [vmem:[%s560 + $0x20] sm:$0xff] %v3080
        %5368 = vst [vmem:[%s560 + $0x28] sm:$0xff] %v3082
        %5369 = vst [vmem:[%s560 + $0x30] sm:$0xff] %v3084
        %5370 = vst [vmem:[%s560 + $0x38] sm:$0xff] %v3086
        %5371 = vst [vmem:[%s560 + $0x40] sm:$0xff] %v3090
        %5372 = vst [vmem:[%s560 + $0x48] sm:$0xff] %v3092
        %5373 = vst [vmem:[%s560 + $0x50] sm:$0xff] %v3094
        %5374 = vst [vmem:[%s560 + $0x58] sm:$0xff] %v3096
        %5375 = vst [vmem:[%s560 + $0x60] sm:$0xff] %v3100
        %5376 = vst [vmem:[%s560 + $0x68] sm:$0xff] %v3102
        %5377 = vst [vmem:[%s560 + $0x70] sm:$0xff] %v3104
        %5378 = vst [vmem:[%s560 + $0x78] sm:$0xff] %v3106
        %5379 = vst [vmem:[%s560 + $0x80] sm:$0xff] %v3110
        %5380 = vst [vmem:[%s560 + $0x88] sm:$0xff] %v3112
        %5381 = vst [vmem:[%s560 + $0x90] sm:$0xff] %v3114
        %5382 = vst [vmem:[%s560 + $0x98] sm:$0xff] %v3116
        %5383 = vst [vmem:[%s560 + $0xa0] sm:$0xff] %v3120
        %5384 = vst [vmem:[%s560 + $0xa8] sm:$0xff] %v3122
        %5385 = vst [vmem:[%s560 + $0xb0] sm:$0xff] %v3124
        %5386 = vst [vmem:[%s560 + $0xb8] sm:$0xff] %v3126
        %5387 = vst [vmem:[%s560 + $0xc0] sm:$0xff] %v3130
        %5388 = vst [vmem:[%s560 + $0xc8] sm:$0xff] %v3132
        %5389 = vst [vmem:[%s560 + $0xd0] sm:$0xff] %v3134
        %5390 = vst [vmem:[%s560 + $0xd8] sm:$0xff] %v3136
        %5391 = vst [vmem:[%s560 + $0xe0] sm:$0xff] %v3140
        %5392 = vst [vmem:[%s560 + $0xe8] sm:$0xff] %v3142
        %5393 = vst [vmem:[%s560 + $0xf0] sm:$0xff] %v3144
        %5394 = vst [vmem:[%s560 + $0xf8] sm:$0xff] %v3146
        %5395 = vst [vmem:[%s560 + $0x100] sm:$0xff] %v3150
        %5396 = vst [vmem:[%s560 + $0x108] sm:$0xff] %v3152
        %5397 = vst [vmem:[%s560 + $0x110] sm:$0xff] %v3154
        %5398 = vst [vmem:[%s560 + $0x118] sm:$0xff] %v3156
        %5399 = vst [vmem:[%s560 + $0x120] sm:$0xff] %v3160
        %5400 = vst [vmem:[%s560 + $0x128] sm:$0xff] %v3162
        %s5401 = sand.u32 %s266, 1
        %s5402 = scalar_lea.sflag [#allocation4], %s5401
        %s5403 = sand.u32 %s266, 1
        %s5404 = smul.addr %s5403, 152
        %s5405 = scalar_lea.vmem [#allocation14], %s5404
        %s5406 = sand.u32 %s38, 1
        %s5407 = scalar_lea.sflag [#allocation16], %s5406
        %s5408 = sand.u32 %s292, 1
        %s5409 = smul.addr %s5408, 304
        %s5410 = scalar_lea.vmem [#allocation15], %s5409
        %s5411 = sand.u32 %s38, 1
        %s5412 = scalar_lea.sflag [#allocation16], %s5411
        %s5413 = sand.u32 %s318, 1
        %s5414 = smul.addr %s5413, 304
        %s5415 = scalar_lea.vmem [#allocation17], %s5414
        // Predicated region
        $region89: #{tpu_custom_call.1} parent=59 // pred_check
          %p5416 = pneg %p276
        $region90: #{tpu_custom_call.1} parent=59 // pred_check_branch
          %5418 = sbr.rel (%p5416) target = $region92
        $region91: #{tpu_custom_call.1} parent=59 // pred_region
          %s5419 = smul.u32 19, %s38
          %s5421 = ssub.s32 2432, 2432
          %5422 = vsyncadd %s5402, %s5421
          %s5423 = smul.addr %s5419, 128
          %s5424 = scalar_lea.hbm %s10, %s5423
          %s5425 = sshll.u32 %s5405, 4
          %s5426 = int_to_ptr.vmem [resolvable:$true] %s5425
          %5431 = dma.vmem_to_hbm [thread:$0]  %s5426, 2432, %s5424, %s5402, 128, 128, 8
        $region92: #{tpu_custom_call.1} parent=59 // pred_fallthru
          _
        // Predicated region
        $region93: #{tpu_custom_call.1} parent=59 // pred_check
          %p5432 = pneg %p302
        $region94: #{tpu_custom_call.1} parent=59 // pred_check_branch
          %5434 = sbr.rel (%p5432) target = $region96
        $region95: #{tpu_custom_call.1} parent=59 // pred_region
          %s5435 = smul.u32 19, %s38
          %s5437 = ssub.s32 4864, 4864
          %5438 = vsyncadd %s5407, %s5437
          %s5439 = smul.addr %s5435, 2
          %s5440 = smul.addr %s5439, 128
          %s5441 = scalar_lea.hbm %s11, %s5440
          %s5442 = sshll.u32 %s5410, 4
          %s5443 = int_to_ptr.vmem [resolvable:$true] %s5442
          %5448 = dma.vmem_to_hbm [thread:$0]  %s5443, 4864, %s5441, %s5407, 256, 256, 16
        $region96: #{tpu_custom_call.1} parent=59 // pred_fallthru
          _
        // Predicated region
        $region97: #{tpu_custom_call.1} parent=59 // pred_check
          %p5449 = pneg %p328
        $region98: #{tpu_custom_call.1} parent=59 // pred_check_branch
          %5451 = sbr.rel (%p5449) target = $region100
        $region99: #{tpu_custom_call.1} parent=59 // pred_region
          %s5452 = smul.u32 19, %s38
          %s5454 = ssub.s32 4864, 4864
          %5455 = vsyncadd %s5412, %s5454
          %s5456 = smul.addr %s5452, 2
          %s5457 = smul.addr %s5456, 128
          %s5458 = scalar_lea.hbm %s12, %s5457
          %s5459 = sshll.u32 %s5415, 4
          %s5460 = int_to_ptr.vmem [resolvable:$true] %s5459
          %5465 = dma.vmem_to_hbm [thread:$0]  %s5460, 4864, %s5458, %s5412, 256, 256, 16
        $region100: #{tpu_custom_call.1} parent=59 // pred_fallthru
          _
      $region60: #{tpu_custom_call.1} parent=5 // pred_fallthru
        _
      %p5466 = scmp.le.s32.totalorder 2, %s33
      // Predicated region
      $region101: #{tpu_custom_call.1} parent=5 // pred_check
        %p5467 = pneg %p5466
      $region102: #{tpu_custom_call.1} parent=5 // pred_check_branch
        %5469 = sbr.rel (%p5467) target = $region104
      $region103: #{tpu_custom_call.1} parent=5 // pred_region
        %s5470 = ssub.s32 %s33, 2
        // Predicated region
        $region105: #{tpu_custom_call.1} parent=103 // pred_check
          %p5471 = pneg %p282
        $region106: #{tpu_custom_call.1} parent=103 // pred_check_branch
          %5473 = sbr.rel (%p5471) target = $region108
        $region107: #{tpu_custom_call.1} parent=103 // pred_region
          %s5474 = sand.u32 %s267, 1
          %s5475 = scalar_lea.sflag [#allocation4], %s5474
          %s5476 = sand.u32 %s267, 1
          %s5477 = smul.addr %s5476, 152
          %s5478 = scalar_lea.vmem [#allocation14], %s5477
          %5479 = dma.done %s5475, 2432
        $region108: #{tpu_custom_call.1} parent=103 // pred_fallthru
          _
        // Predicated region
        $region109: #{tpu_custom_call.1} parent=103 // pred_check
          %p5480 = pneg %p308
        $region110: #{tpu_custom_call.1} parent=103 // pred_check_branch
          %5482 = sbr.rel (%p5480) target = $region112
        $region111: #{tpu_custom_call.1} parent=103 // pred_region
          %s5483 = sand.u32 %s39, 1
          %s5484 = scalar_lea.sflag [#allocation16], %s5483
          %s5485 = sand.u32 %s293, 1
          %s5486 = smul.addr %s5485, 304
          %s5487 = scalar_lea.vmem [#allocation15], %s5486
          %5488 = dma.done %s5484, 4864
        $region112: #{tpu_custom_call.1} parent=103 // pred_fallthru
          _
        // Predicated region
        $region113: #{tpu_custom_call.1} parent=103 // pred_check
          %p5489 = pneg %p334
        $region114: #{tpu_custom_call.1} parent=103 // pred_check_branch
          %5491 = sbr.rel (%p5489) target = $region116
        $region115: #{tpu_custom_call.1} parent=103 // pred_region
          %s5492 = sand.u32 %s39, 1
          %s5493 = scalar_lea.sflag [#allocation16], %s5492
          %s5494 = sand.u32 %s319, 1
          %s5495 = smul.addr %s5494, 304
          %s5496 = scalar_lea.vmem [#allocation17], %s5495
          %5497 = dma.done %s5493, 4864
        $region116: #{tpu_custom_call.1} parent=103 // pred_fallthru
          _
      $region104: #{tpu_custom_call.1} parent=5 // pred_fallthru
        _
    $region6: #{tpu_custom_call.1} parent=1 // loop_footer
      %s37 = sadd.s32 1, %s33
    $region7: #{tpu_custom_call.1} parent=1 // loop_footer_branch
      %32 = sbr.rel target = $region3
    $region8: #{tpu_custom_call.1} parent=1 // loop_exit
      _
    %5498 = vsyncpa [#allocation3], 1
    %s5499 = scalar_lea.sflag [#allocation3], 1
    %5500 = vsyncpa %s5499, 1
    %5501 = vsyncpa [#allocation6], 1
    %s5502 = scalar_lea.sflag [#allocation6], 1
    %5503 = vsyncpa %s5502, 1
    %5504 = vsyncpa [#allocation9], 1
    %5505 = vsyncpa [#allocation12], 1
    %5506 = vsyncpa [#allocation4], 1
    %s5507 = scalar_lea.sflag [#allocation4], 1
    %5508 = vsyncpa %s5507, 1
    %5509 = vsyncpa [#allocation16], 1
    %s5510 = scalar_lea.sflag [#allocation16], 1
    %5511 = vsyncpa %s5510, 1

</llo_original>
